<compile_context>
chip_gen: v7x
topology: tpu7x:2x2x1
jax: 0.10.0
libtpu: 0.0.40
codegen_flags: <defaults>
</compile_context>

<pallas_src>
import jax
import jax.numpy as jnp
from jax.experimental import pallas as pl
from jax.experimental.pallas import tpu as pltpu

# ---- model hyper-parameters (small, consistent with the module) ----
B = 2            # batch
S = 8            # sequence length
D = 32           # embedding dim d
D_FC = 64        # d_fc
N_HEADS = 2      # n_heads
N_LAYERS = 2     # n_layers
VOCAB = 16       # input_types
POS_BUF = 16     # posenc_buffer_size
MASK_ITEM = 0    # mask_item[0] (padding idx)
D_K = D // N_HEADS
LN_EPS = 1e-5
NEG_INF = -1e9


def _ln2d(x, g, b):
    """LayerNorm over the last axis; x: (N, D), g/b: (1, D)."""
    mu = jnp.mean(x, axis=-1, keepdims=True)
    xc = x - mu
    var = jnp.mean(xc * xc, axis=-1, keepdims=True)
    return xc * jax.lax.rsqrt(var + LN_EPS) * g + b


# ------------------------- fused Pallas kernel -------------------------

def duo4srec_fused_kernel(x_ref, bias_ref,
                          wqkv_ref, wo_ref,
                          ln1g_ref, ln1b_ref,
                          w1_ref, w2_ref,
                          ln2g_ref, ln2b_ref,
                          embT_ref, out_ref):
    """Fused forward: N_LAYERS PostLN encoder layers + last-token predictor.

    x_ref    : (B*S, D)                  embedded+scaled+positional input
    bias_ref : (B, S, S)                 additive attention bias (0 / -1e9)
    wqkv_ref : (N_LAYERS*3*N_HEADS, D, D_K)   per-head Q,K,V projections
    wo_ref   : (N_LAYERS*N_HEADS, D_K, D)     per-head output projections
    w1/w2    : (N_LAYERS, D, D_FC) / (N_LAYERS, D_FC, D)
    ln*      : (N_LAYERS, 1, D)
    embT_ref : (D, VOCAB)                pre-transposed embedding matrix
    out_ref  : (B, VOCAB)
    """
    x = x_ref[...]            # (B*S, D) f32
    bias = bias_ref[...]      # (B, S, S)
    scale = 1.0 / (D_K ** 0.5)

    for l in range(N_LAYERS):                       # static unroll
        # ---------------- multi-head self-attention ----------------
        attn = jnp.zeros((B * S, D), jnp.float32)
        for h in range(N_HEADS):                    # static unroll; no lane slicing
            wq = wqkv_ref[(l * 3 + 0) * N_HEADS + h]    # (D, D_K)
            wk = wqkv_ref[(l * 3 + 1) * N_HEADS + h]
            wv = wqkv_ref[(l * 3 + 2) * N_HEADS + h]
            qh = jnp.dot(x, wq, preferred_element_type=jnp.float32).reshape(B, S, D_K)
            kh = jnp.dot(x, wk, preferred_element_type=jnp.float32).reshape(B, S, D_K)
            vh = jnp.dot(x, wv, preferred_element_type=jnp.float32).reshape(B, S, D_K)

            s = jnp.einsum('bqk,bpk->bqp', qh, kh,
                           preferred_element_type=jnp.float32) * scale + bias
            s = s - jnp.max(s, axis=-1, keepdims=True)
            p = jnp.exp(s)
            p = p * pl.reciprocal(jnp.sum(p, axis=-1, keepdims=True), approx=True)

            ctx = jnp.einsum('bqp,bpk->bqk', p, vh,
                             preferred_element_type=jnp.float32).reshape(B * S, D_K)
            # fold this head's context through its slice of Wo; sum over heads
            attn = attn + jnp.dot(ctx, wo_ref[l * N_HEADS + h],
                                  preferred_element_type=jnp.float32)

        x = _ln2d(attn + x, ln1g_ref[l], ln1b_ref[l])

        # ---------------- position-wise FFN (ReLU) ----------------
        hfc = jnp.maximum(jnp.dot(x, w1_ref[l], preferred_element_type=jnp.float32), 0.0)
        ffn = jnp.dot(hfc, w2_ref[l], preferred_element_type=jnp.float32)
        x = _ln2d(ffn + x, ln2g_ref[l], ln2b_ref[l])

    # -------- last-token representation + predictor --------
    hu = x.reshape(B, S, D)[:, S - 1, :]            # (B, D)
    out_ref[...] = jnp.dot(hu, embT_ref[...], preferred_element_type=jnp.float32)


# ------------------------- wrapper -------------------------

def _full_spec(shp):
    return pl.BlockSpec(shp, lambda: (0,) * len(shp))


def duo4srec_forward(su, params):
    """su: (B, S) int32 token ids -> R: (B, VOCAB) scores."""
    emb, pos = params["emb"], params["pos"]
    # Embedding lookup + scale + learnable positional encoding (JAX glue: gather).
    h = jnp.take(emb, su, axis=0) * (D ** 0.5) + pos[:S][None, :, :]   # (B, S, D)
    # embed_dropout(p=0.1) is identity at inference time.
    # Attention mask: pad mask on keys OR causal subsequence mask (True = masked),
    # shared across layers and heads -> built once, passed once.
    pad = jnp.broadcast_to((su == MASK_ITEM)[:, None, :], (B, S, S))
    causal = jnp.triu(jnp.ones((S, S), jnp.bool_), k=1)[None]
    bias = jnp.where(jnp.logical_or(pad, causal), NEG_INF, 0.0).astype(jnp.float32)

    x2 = h.reshape(B * S, D).astype(jnp.float32)
    embT = emb.T                                     # one-time (D, VOCAB) transpose

    return pl.pallas_call(
        duo4srec_fused_kernel,
        out_shape=jax.ShapeDtypeStruct((B, VOCAB), jnp.float32),
        in_specs=[
            _full_spec((B * S, D)),                          # x
            _full_spec((B, S, S)),                           # attention bias
            _full_spec((N_LAYERS * 3 * N_HEADS, D, D_K)),    # stacked per-head Wq/Wk/Wv
            _full_spec((N_LAYERS * N_HEADS, D_K, D)),        # stacked per-head Wo
            _full_spec((N_LAYERS, 1, D)),                    # LN1 gamma
            _full_spec((N_LAYERS, 1, D)),                    # LN1 beta
            _full_spec((N_LAYERS, D, D_FC)),                 # FFN W1
            _full_spec((N_LAYERS, D_FC, D)),                 # FFN W2
            _full_spec((N_LAYERS, 1, D)),                    # LN2 gamma
            _full_spec((N_LAYERS, 1, D)),                    # LN2 beta
            _full_spec((D, VOCAB)),                          # emb^T for predictor
        ],
        out_specs=_full_spec((B, VOCAB)),
    )(x2, bias, params["wqkv"], params["wo"],
      params["ln1_g"], params["ln1_b"], params["w1"], params["w2"],
      params["ln2_g"], params["ln2_b"], embT)


def init_params(key):
    ks = jax.random.split(key, 2 + N_LAYERS)
    # Embedding: normal(0, 1/d), padding row zeroed (padding_idx = MASK_ITEM).
    emb = jax.random.normal(ks[0], (VOCAB, D), jnp.float32) / D
    emb = emb.at[MASK_ITEM].set(0.0)
    pos = jax.random.normal(ks[1], (POS_BUF, D), jnp.float32) * 0.02

    wqkv_list, wo_list = [], []
    w1s, w2s, ln1g, ln1b, ln2g, ln2b = [], [], [], [], [], []
    for l in range(N_LAYERS):
        kk = jax.random.split(ks[2 + l], 6)
        wq = jax.random.normal(kk[0], (D, D), jnp.float32) * 0.05
        wk = jax.random.normal(kk[1], (D, D), jnp.float32) * 0.05
        wv = jax.random.normal(kk[2], (D, D), jnp.float32) * 0.05
        wo = jax.random.normal(kk[3], (D, D), jnp.float32) * 0.05
        # per-head storage: index = (l*3 + {0:q,1:k,2:v}) * N_HEADS + h
        for w in (wq, wk, wv):
            for h in range(N_HEADS):
                wqkv_list.append(w[:, h * D_K:(h + 1) * D_K])       # (D, D_K)
        for h in range(N_HEADS):
            wo_list.append(wo[h * D_K:(h + 1) * D_K, :])            # (D_K, D)
        w1s.append(jax.random.normal(kk[4], (D, D_FC), jnp.float32) * 0.05)
        w2s.append(jax.random.normal(kk[5], (D_FC, D), jnp.float32) * 0.05)
        ln1g.append(jnp.ones((1, D), jnp.float32))
        ln1b.append(jnp.zeros((1, D), jnp.float32))
        ln2g.append(jnp.ones((1, D), jnp.float32))
        ln2b.append(jnp.zeros((1, D), jnp.float32))

    return dict(
        emb=emb, pos=pos,
        wqkv=jnp.stack(wqkv_list),          # (N_LAYERS*3*N_HEADS, D, D_K)
        wo=jnp.stack(wo_list),              # (N_LAYERS*N_HEADS, D_K, D)
        w1=jnp.stack(w1s), w2=jnp.stack(w2s),
        ln1_g=jnp.stack(ln1g), ln1_b=jnp.stack(ln1b),
        ln2_g=jnp.stack(ln2g), ln2_b=jnp.stack(ln2b),
    )


if __name__ == "__main__":
    key = jax.random.PRNGKey(0)
    k_par, k_in = jax.random.split(key)
    params = init_params(k_par)
    # token ids in [0, VOCAB); 0 is the padding / mask item
    su = jax.random.randint(k_in, (B, S), 0, VOCAB, dtype=jnp.int32)

    R = jax.jit(duo4srec_forward)(su, params)
    R = jax.block_until_ready(R)
    assert R.shape == (B, VOCAB) and R.dtype == jnp.float32
    assert bool(jnp.all(jnp.isfinite(R)))
    print("KERNEL_OK")
</pallas_src>

<mosaic_0001>
module attributes {stable_mosaic.version = 11 : i64} {
  func.func @duo4srec_fused_kernel(%arg0: memref<16x32xf32, #tpu.memory_space<vmem>>, %arg1: memref<2x8x8xf32, #tpu.memory_space<vmem>>, %arg2: memref<12x32x16xf32, #tpu.memory_space<vmem>>, %arg3: memref<4x16x32xf32, #tpu.memory_space<vmem>>, %arg4: memref<2x1x32xf32, #tpu.memory_space<vmem>>, %arg5: memref<2x1x32xf32, #tpu.memory_space<vmem>>, %arg6: memref<2x32x64xf32, #tpu.memory_space<vmem>>, %arg7: memref<2x64x32xf32, #tpu.memory_space<vmem>>, %arg8: memref<2x1x32xf32, #tpu.memory_space<vmem>>, %arg9: memref<2x1x32xf32, #tpu.memory_space<vmem>>, %arg10: memref<32x16xf32, #tpu.memory_space<vmem>>, %arg11: memref<2x16xf32, #tpu.memory_space<vmem>>) attributes {dimension_semantics = [], scalar_prefetch = 0 : i64, scratch_operands = 0 : i64, tpu.core_type = #tpu.core_type<tc>} {
    %c0 = arith.constant 0 : index
    %c0_0 = arith.constant 0 : index
    %0 = vector.load %arg0[%c0, %c0_0] : memref<16x32xf32, #tpu.memory_space<vmem>>, vector<16x32xf32>
    %c0_1 = arith.constant 0 : index
    %c0_2 = arith.constant 0 : index
    %c0_3 = arith.constant 0 : index
    %1 = vector.load %arg1[%c0_1, %c0_2, %c0_3] : memref<2x8x8xf32, #tpu.memory_space<vmem>>, vector<2x8x8xf32>
    %cst = arith.constant 0.000000e+00 : f32
    %2 = vector.broadcast %cst : f32 to vector<16x32xf32>
    %c0_4 = arith.constant 0 : index
    %c0_5 = arith.constant 0 : index
    %c0_6 = arith.constant 0 : index
    %3 = vector.load %arg2[%c0_4, %c0_5, %c0_6] : memref<12x32x16xf32, #tpu.memory_space<vmem>>, vector<1x32x16xf32>
    %4 = vector.shape_cast %3 : vector<1x32x16xf32> to vector<32x16xf32>
    %c2 = arith.constant 2 : index
    %c0_7 = arith.constant 0 : index
    %c0_8 = arith.constant 0 : index
    %5 = vector.load %arg2[%c2, %c0_7, %c0_8] : memref<12x32x16xf32, #tpu.memory_space<vmem>>, vector<1x32x16xf32>
    %6 = vector.shape_cast %5 : vector<1x32x16xf32> to vector<32x16xf32>
    %c4 = arith.constant 4 : index
    %c0_9 = arith.constant 0 : index
    %c0_10 = arith.constant 0 : index
    %7 = vector.load %arg2[%c4, %c0_9, %c0_10] : memref<12x32x16xf32, #tpu.memory_space<vmem>>, vector<1x32x16xf32>
    %8 = vector.shape_cast %7 : vector<1x32x16xf32> to vector<32x16xf32>
    %cst_11 = arith.constant dense<0.000000e+00> : vector<16x16xf32>
    %9 = tpu.matmul %0, %4, %cst_11 {dimension_numbers = #tpu.dot_dimension_numbers<[1], [0], [0], [1], [0, 0, 1, 1], [], []>} : vector<16x32xf32>, vector<32x16xf32>, vector<16x16xf32> -> vector<16x16xf32>
    %10 = vector.shape_cast %9 : vector<16x16xf32> to vector<2x8x16xf32>
    %cst_12 = arith.constant dense<0.000000e+00> : vector<16x16xf32>
    %11 = tpu.matmul %0, %6, %cst_12 {dimension_numbers = #tpu.dot_dimension_numbers<[1], [0], [0], [1], [0, 0, 1, 1], [], []>} : vector<16x32xf32>, vector<32x16xf32>, vector<16x16xf32> -> vector<16x16xf32>
    %12 = vector.shape_cast %11 : vector<16x16xf32> to vector<2x8x16xf32>
    %cst_13 = arith.constant dense<0.000000e+00> : vector<16x16xf32>
    %13 = tpu.matmul %0, %8, %cst_13 {dimension_numbers = #tpu.dot_dimension_numbers<[1], [0], [0], [1], [0, 0, 1, 1], [], []>} : vector<16x32xf32>, vector<32x16xf32>, vector<16x16xf32> -> vector<16x16xf32>
    %14 = vector.shape_cast %13 : vector<16x16xf32> to vector<2x8x16xf32>
    "tpu.trace_start"() <{level = 10 : i32, message = "bqk,bpk->bqp"}> : () -> ()
    %cst_14 = arith.constant dense<0.000000e+00> : vector<2x8x8xf32>
    %15 = tpu.matmul %10, %12, %cst_14 {dimension_numbers = #tpu.dot_dimension_numbers<[2], [2], [1], [1], [0, 0, 0, 1, 1, 1], [0], [0]>} : vector<2x8x16xf32>, vector<2x8x16xf32>, vector<2x8x8xf32> -> vector<2x8x8xf32>
    "tpu.trace_stop"() : () -> ()
    %cst_15 = arith.constant 2.500000e-01 : f32
    %16 = vector.broadcast %cst_15 : f32 to vector<2x8x8xf32>
    %17 = arith.mulf %15, %16 : vector<2x8x8xf32>
    %18 = arith.addf %17, %1 : vector<2x8x8xf32>
    %cst_16 = arith.constant dense<0xFF800000> : vector<2x8xf32>
    %19 = vector.multi_reduction <maximumf>, %18, %cst_16 [2] : vector<2x8x8xf32> to vector<2x8xf32>
    %20 = vector.shape_cast %19 : vector<2x8xf32> to vector<2x8x1xf32>
    %21 = vector.broadcast %20 : vector<2x8x1xf32> to vector<2x8x8xf32>
    %22 = arith.subf %18, %21 : vector<2x8x8xf32>
    %23 = math.exp %22 : vector<2x8x8xf32>
    %cst_17 = arith.constant dense<0.000000e+00> : vector<2x8xf32>
    %24 = vector.multi_reduction <add>, %23, %cst_17 [2] : vector<2x8x8xf32> to vector<2x8xf32>
    %25 = vector.shape_cast %24 : vector<2x8xf32> to vector<2x8x1xf32>
    %26 = tpu.reciprocal %25 {approx = true} : vector<2x8x1xf32> -> vector<2x8x1xf32>
    %27 = vector.broadcast %26 : vector<2x8x1xf32> to vector<2x8x8xf32>
    %28 = arith.mulf %23, %27 : vector<2x8x8xf32>
    "tpu.trace_start"() <{level = 10 : i32, message = "bqp,bpk->bqk"}> : () -> ()
    %cst_18 = arith.constant dense<0.000000e+00> : vector<2x8x16xf32>
    %29 = tpu.matmul %28, %14, %cst_18 {dimension_numbers = #tpu.dot_dimension_numbers<[2], [1], [1], [2], [0, 0, 0, 1, 1, 2], [0], [0]>} : vector<2x8x8xf32>, vector<2x8x16xf32>, vector<2x8x16xf32> -> vector<2x8x16xf32>
    "tpu.trace_stop"() : () -> ()
    %30 = vector.shape_cast %29 : vector<2x8x16xf32> to vector<16x16xf32>
    %c0_19 = arith.constant 0 : index
    %c0_20 = arith.constant 0 : index
    %c0_21 = arith.constant 0 : index
    %31 = vector.load %arg3[%c0_19, %c0_20, %c0_21] : memref<4x16x32xf32, #tpu.memory_space<vmem>>, vector<1x16x32xf32>
    %32 = vector.shape_cast %31 : vector<1x16x32xf32> to vector<16x32xf32>
    %cst_22 = arith.constant dense<0.000000e+00> : vector<16x32xf32>
    %33 = tpu.matmul %30, %32, %cst_22 {dimension_numbers = #tpu.dot_dimension_numbers<[1], [0], [0], [1], [0, 0, 1, 1], [], []>} : vector<16x16xf32>, vector<16x32xf32>, vector<16x32xf32> -> vector<16x32xf32>
    %34 = arith.addf %2, %33 : vector<16x32xf32>
    %c1 = arith.constant 1 : index
    %c0_23 = arith.constant 0 : index
    %c0_24 = arith.constant 0 : index
    %35 = vector.load %arg2[%c1, %c0_23, %c0_24] : memref<12x32x16xf32, #tpu.memory_space<vmem>>, vector<1x32x16xf32>
    %36 = vector.shape_cast %35 : vector<1x32x16xf32> to vector<32x16xf32>
    %c3 = arith.constant 3 : index
    %c0_25 = arith.constant 0 : index
    %c0_26 = arith.constant 0 : index
    %37 = vector.load %arg2[%c3, %c0_25, %c0_26] : memref<12x32x16xf32, #tpu.memory_space<vmem>>, vector<1x32x16xf32>
    %38 = vector.shape_cast %37 : vector<1x32x16xf32> to vector<32x16xf32>
    %c5 = arith.constant 5 : index
    %c0_27 = arith.constant 0 : index
    %c0_28 = arith.constant 0 : index
    %39 = vector.load %arg2[%c5, %c0_27, %c0_28] : memref<12x32x16xf32, #tpu.memory_space<vmem>>, vector<1x32x16xf32>
    %40 = vector.shape_cast %39 : vector<1x32x16xf32> to vector<32x16xf32>
    %cst_29 = arith.constant dense<0.000000e+00> : vector<16x16xf32>
    %41 = tpu.matmul %0, %36, %cst_29 {dimension_numbers = #tpu.dot_dimension_numbers<[1], [0], [0], [1], [0, 0, 1, 1], [], []>} : vector<16x32xf32>, vector<32x16xf32>, vector<16x16xf32> -> vector<16x16xf32>
    %42 = vector.shape_cast %41 : vector<16x16xf32> to vector<2x8x16xf32>
    %cst_30 = arith.constant dense<0.000000e+00> : vector<16x16xf32>
    %43 = tpu.matmul %0, %38, %cst_30 {dimension_numbers = #tpu.dot_dimension_numbers<[1], [0], [0], [1], [0, 0, 1, 1], [], []>} : vector<16x32xf32>, vector<32x16xf32>, vector<16x16xf32> -> vector<16x16xf32>
    %44 = vector.shape_cast %43 : vector<16x16xf32> to vector<2x8x16xf32>
    %cst_31 = arith.constant dense<0.000000e+00> : vector<16x16xf32>
    %45 = tpu.matmul %0, %40, %cst_31 {dimension_numbers = #tpu.dot_dimension_numbers<[1], [0], [0], [1], [0, 0, 1, 1], [], []>} : vector<16x32xf32>, vector<32x16xf32>, vector<16x16xf32> -> vector<16x16xf32>
    %46 = vector.shape_cast %45 : vector<16x16xf32> to vector<2x8x16xf32>
    "tpu.trace_start"() <{level = 10 : i32, message = "bqk,bpk->bqp"}> : () -> ()
    %cst_32 = arith.constant dense<0.000000e+00> : vector<2x8x8xf32>
    %47 = tpu.matmul %42, %44, %cst_32 {dimension_numbers = #tpu.dot_dimension_numbers<[2], [2], [1], [1], [0, 0, 0, 1, 1, 1], [0], [0]>} : vector<2x8x16xf32>, vector<2x8x16xf32>, vector<2x8x8xf32> -> vector<2x8x8xf32>
    "tpu.trace_stop"() : () -> ()
    %cst_33 = arith.constant 2.500000e-01 : f32
    %48 = vector.broadcast %cst_33 : f32 to vector<2x8x8xf32>
    %49 = arith.mulf %47, %48 : vector<2x8x8xf32>
    %50 = arith.addf %49, %1 : vector<2x8x8xf32>
    %cst_34 = arith.constant dense<0xFF800000> : vector<2x8xf32>
    %51 = vector.multi_reduction <maximumf>, %50, %cst_34 [2] : vector<2x8x8xf32> to vector<2x8xf32>
    %52 = vector.shape_cast %51 : vector<2x8xf32> to vector<2x8x1xf32>
    %53 = vector.broadcast %52 : vector<2x8x1xf32> to vector<2x8x8xf32>
    %54 = arith.subf %50, %53 : vector<2x8x8xf32>
    %55 = math.exp %54 : vector<2x8x8xf32>
    %cst_35 = arith.constant dense<0.000000e+00> : vector<2x8xf32>
    %56 = vector.multi_reduction <add>, %55, %cst_35 [2] : vector<2x8x8xf32> to vector<2x8xf32>
    %57 = vector.shape_cast %56 : vector<2x8xf32> to vector<2x8x1xf32>
    %58 = tpu.reciprocal %57 {approx = true} : vector<2x8x1xf32> -> vector<2x8x1xf32>
    %59 = vector.broadcast %58 : vector<2x8x1xf32> to vector<2x8x8xf32>
    %60 = arith.mulf %55, %59 : vector<2x8x8xf32>
    "tpu.trace_start"() <{level = 10 : i32, message = "bqp,bpk->bqk"}> : () -> ()
    %cst_36 = arith.constant dense<0.000000e+00> : vector<2x8x16xf32>
    %61 = tpu.matmul %60, %46, %cst_36 {dimension_numbers = #tpu.dot_dimension_numbers<[2], [1], [1], [2], [0, 0, 0, 1, 1, 2], [0], [0]>} : vector<2x8x8xf32>, vector<2x8x16xf32>, vector<2x8x16xf32> -> vector<2x8x16xf32>
    "tpu.trace_stop"() : () -> ()
    %62 = vector.shape_cast %61 : vector<2x8x16xf32> to vector<16x16xf32>
    %c1_37 = arith.constant 1 : index
    %c0_38 = arith.constant 0 : index
    %c0_39 = arith.constant 0 : index
    %63 = vector.load %arg3[%c1_37, %c0_38, %c0_39] : memref<4x16x32xf32, #tpu.memory_space<vmem>>, vector<1x16x32xf32>
    %64 = vector.shape_cast %63 : vector<1x16x32xf32> to vector<16x32xf32>
    %cst_40 = arith.constant dense<0.000000e+00> : vector<16x32xf32>
    %65 = tpu.matmul %62, %64, %cst_40 {dimension_numbers = #tpu.dot_dimension_numbers<[1], [0], [0], [1], [0, 0, 1, 1], [], []>} : vector<16x16xf32>, vector<16x32xf32>, vector<16x32xf32> -> vector<16x32xf32>
    %66 = arith.addf %34, %65 : vector<16x32xf32>
    %67 = arith.addf %66, %0 : vector<16x32xf32>
    %c0_41 = arith.constant 0 : index
    %c0_42 = arith.constant 0 : index
    %c0_43 = arith.constant 0 : index
    %68 = vector.load %arg4[%c0_41, %c0_42, %c0_43] : memref<2x1x32xf32, #tpu.memory_space<vmem>>, vector<1x1x32xf32>
    %69 = vector.shape_cast %68 : vector<1x1x32xf32> to vector<1x32xf32>
    %c0_44 = arith.constant 0 : index
    %c0_45 = arith.constant 0 : index
    %c0_46 = arith.constant 0 : index
    %70 = vector.load %arg5[%c0_44, %c0_45, %c0_46] : memref<2x1x32xf32, #tpu.memory_space<vmem>>, vector<1x1x32xf32>
    %71 = vector.shape_cast %70 : vector<1x1x32xf32> to vector<1x32xf32>
    %cst_47 = arith.constant dense<0.000000e+00> : vector<16xf32>
    %72 = vector.multi_reduction <add>, %67, %cst_47 [1] : vector<16x32xf32> to vector<16xf32>
    %73 = vector.shape_cast %72 : vector<16xf32> to vector<16x1xf32>
    %cst_48 = arith.constant 3.200000e+01 : f32
    %74 = vector.broadcast %cst_48 : f32 to vector<16x1xf32>
    %75 = arith.divf %73, %74 : vector<16x1xf32>
    %76 = vector.broadcast %75 : vector<16x1xf32> to vector<16x32xf32>
    %77 = arith.subf %67, %76 : vector<16x32xf32>
    %78 = arith.mulf %77, %77 : vector<16x32xf32>
    %cst_49 = arith.constant dense<0.000000e+00> : vector<16xf32>
    %79 = vector.multi_reduction <add>, %78, %cst_49 [1] : vector<16x32xf32> to vector<16xf32>
    %80 = vector.shape_cast %79 : vector<16xf32> to vector<16x1xf32>
    %cst_50 = arith.constant 3.200000e+01 : f32
    %81 = vector.broadcast %cst_50 : f32 to vector<16x1xf32>
    %82 = arith.divf %80, %81 : vector<16x1xf32>
    %cst_51 = arith.constant 9.99999974E-6 : f32
    %83 = vector.broadcast %cst_51 : f32 to vector<16x1xf32>
    %84 = arith.addf %82, %83 : vector<16x1xf32>
    %85 = math.rsqrt %84 : vector<16x1xf32>
    %86 = vector.broadcast %85 : vector<16x1xf32> to vector<16x32xf32>
    %87 = arith.mulf %77, %86 : vector<16x32xf32>
    %88 = vector.broadcast %69 : vector<1x32xf32> to vector<16x32xf32>
    %89 = arith.mulf %87, %88 : vector<16x32xf32>
    %90 = vector.broadcast %71 : vector<1x32xf32> to vector<16x32xf32>
    %91 = arith.addf %89, %90 : vector<16x32xf32>
    %c0_52 = arith.constant 0 : index
    %c0_53 = arith.constant 0 : index
    %c0_54 = arith.constant 0 : index
    %92 = vector.load %arg6[%c0_52, %c0_53, %c0_54] : memref<2x32x64xf32, #tpu.memory_space<vmem>>, vector<1x32x64xf32>
    %93 = vector.shape_cast %92 : vector<1x32x64xf32> to vector<32x64xf32>
    %cst_55 = arith.constant dense<0.000000e+00> : vector<16x64xf32>
    %94 = tpu.matmul %91, %93, %cst_55 {dimension_numbers = #tpu.dot_dimension_numbers<[1], [0], [0], [1], [0, 0, 1, 1], [], []>} : vector<16x32xf32>, vector<32x64xf32>, vector<16x64xf32> -> vector<16x64xf32>
    %cst_56 = arith.constant 0.000000e+00 : f32
    %95 = vector.broadcast %cst_56 : f32 to vector<16x64xf32>
    %96 = arith.maximumf %94, %95 : vector<16x64xf32>
    %c0_57 = arith.constant 0 : index
    %c0_58 = arith.constant 0 : index
    %c0_59 = arith.constant 0 : index
    %97 = vector.load %arg7[%c0_57, %c0_58, %c0_59] : memref<2x64x32xf32, #tpu.memory_space<vmem>>, vector<1x64x32xf32>
    %98 = vector.shape_cast %97 : vector<1x64x32xf32> to vector<64x32xf32>
    %cst_60 = arith.constant dense<0.000000e+00> : vector<16x32xf32>
    %99 = tpu.matmul %96, %98, %cst_60 {dimension_numbers = #tpu.dot_dimension_numbers<[1], [0], [0], [1], [0, 0, 1, 1], [], []>} : vector<16x64xf32>, vector<64x32xf32>, vector<16x32xf32> -> vector<16x32xf32>
    %100 = arith.addf %99, %91 : vector<16x32xf32>
    %c0_61 = arith.constant 0 : index
    %c0_62 = arith.constant 0 : index
    %c0_63 = arith.constant 0 : index
    %101 = vector.load %arg8[%c0_61, %c0_62, %c0_63] : memref<2x1x32xf32, #tpu.memory_space<vmem>>, vector<1x1x32xf32>
    %102 = vector.shape_cast %101 : vector<1x1x32xf32> to vector<1x32xf32>
    %c0_64 = arith.constant 0 : index
    %c0_65 = arith.constant 0 : index
    %c0_66 = arith.constant 0 : index
    %103 = vector.load %arg9[%c0_64, %c0_65, %c0_66] : memref<2x1x32xf32, #tpu.memory_space<vmem>>, vector<1x1x32xf32>
    %104 = vector.shape_cast %103 : vector<1x1x32xf32> to vector<1x32xf32>
    %cst_67 = arith.constant dense<0.000000e+00> : vector<16xf32>
    %105 = vector.multi_reduction <add>, %100, %cst_67 [1] : vector<16x32xf32> to vector<16xf32>
    %106 = vector.shape_cast %105 : vector<16xf32> to vector<16x1xf32>
    %cst_68 = arith.constant 3.200000e+01 : f32
    %107 = vector.broadcast %cst_68 : f32 to vector<16x1xf32>
    %108 = arith.divf %106, %107 : vector<16x1xf32>
    %109 = vector.broadcast %108 : vector<16x1xf32> to vector<16x32xf32>
    %110 = arith.subf %100, %109 : vector<16x32xf32>
    %111 = arith.mulf %110, %110 : vector<16x32xf32>
    %cst_69 = arith.constant dense<0.000000e+00> : vector<16xf32>
    %112 = vector.multi_reduction <add>, %111, %cst_69 [1] : vector<16x32xf32> to vector<16xf32>
    %113 = vector.shape_cast %112 : vector<16xf32> to vector<16x1xf32>
    %cst_70 = arith.constant 3.200000e+01 : f32
    %114 = vector.broadcast %cst_70 : f32 to vector<16x1xf32>
    %115 = arith.divf %113, %114 : vector<16x1xf32>
    %cst_71 = arith.constant 9.99999974E-6 : f32
    %116 = vector.broadcast %cst_71 : f32 to vector<16x1xf32>
    %117 = arith.addf %115, %116 : vector<16x1xf32>
    %118 = math.rsqrt %117 : vector<16x1xf32>
    %119 = vector.broadcast %118 : vector<16x1xf32> to vector<16x32xf32>
    %120 = arith.mulf %110, %119 : vector<16x32xf32>
    %121 = vector.broadcast %102 : vector<1x32xf32> to vector<16x32xf32>
    %122 = arith.mulf %120, %121 : vector<16x32xf32>
    %123 = vector.broadcast %104 : vector<1x32xf32> to vector<16x32xf32>
    %124 = arith.addf %122, %123 : vector<16x32xf32>
    %cst_72 = arith.constant 0.000000e+00 : f32
    %125 = vector.broadcast %cst_72 : f32 to vector<16x32xf32>
    %c6 = arith.constant 6 : index
    %c0_73 = arith.constant 0 : index
    %c0_74 = arith.constant 0 : index
    %126 = vector.load %arg2[%c6, %c0_73, %c0_74] : memref<12x32x16xf32, #tpu.memory_space<vmem>>, vector<1x32x16xf32>
    %127 = vector.shape_cast %126 : vector<1x32x16xf32> to vector<32x16xf32>
    %c8 = arith.constant 8 : index
    %c0_75 = arith.constant 0 : index
    %c0_76 = arith.constant 0 : index
    %128 = vector.load %arg2[%c8, %c0_75, %c0_76] : memref<12x32x16xf32, #tpu.memory_space<vmem>>, vector<1x32x16xf32>
    %129 = vector.shape_cast %128 : vector<1x32x16xf32> to vector<32x16xf32>
    %c10 = arith.constant 10 : index
    %c0_77 = arith.constant 0 : index
    %c0_78 = arith.constant 0 : index
    %130 = vector.load %arg2[%c10, %c0_77, %c0_78] : memref<12x32x16xf32, #tpu.memory_space<vmem>>, vector<1x32x16xf32>
    %131 = vector.shape_cast %130 : vector<1x32x16xf32> to vector<32x16xf32>
    %cst_79 = arith.constant dense<0.000000e+00> : vector<16x16xf32>
    %132 = tpu.matmul %124, %127, %cst_79 {dimension_numbers = #tpu.dot_dimension_numbers<[1], [0], [0], [1], [0, 0, 1, 1], [], []>} : vector<16x32xf32>, vector<32x16xf32>, vector<16x16xf32> -> vector<16x16xf32>
    %133 = vector.shape_cast %132 : vector<16x16xf32> to vector<2x8x16xf32>
    %cst_80 = arith.constant dense<0.000000e+00> : vector<16x16xf32>
    %134 = tpu.matmul %124, %129, %cst_80 {dimension_numbers = #tpu.dot_dimension_numbers<[1], [0], [0], [1], [0, 0, 1, 1], [], []>} : vector<16x32xf32>, vector<32x16xf32>, vector<16x16xf32> -> vector<16x16xf32>
    %135 = vector.shape_cast %134 : vector<16x16xf32> to vector<2x8x16xf32>
    %cst_81 = arith.constant dense<0.000000e+00> : vector<16x16xf32>
    %136 = tpu.matmul %124, %131, %cst_81 {dimension_numbers = #tpu.dot_dimension_numbers<[1], [0], [0], [1], [0, 0, 1, 1], [], []>} : vector<16x32xf32>, vector<32x16xf32>, vector<16x16xf32> -> vector<16x16xf32>
    %137 = vector.shape_cast %136 : vector<16x16xf32> to vector<2x8x16xf32>
    "tpu.trace_start"() <{level = 10 : i32, message = "bqk,bpk->bqp"}> : () -> ()
    %cst_82 = arith.constant dense<0.000000e+00> : vector<2x8x8xf32>
    %138 = tpu.matmul %133, %135, %cst_82 {dimension_numbers = #tpu.dot_dimension_numbers<[2], [2], [1], [1], [0, 0, 0, 1, 1, 1], [0], [0]>} : vector<2x8x16xf32>, vector<2x8x16xf32>, vector<2x8x8xf32> -> vector<2x8x8xf32>
    "tpu.trace_stop"() : () -> ()
    %cst_83 = arith.constant 2.500000e-01 : f32
    %139 = vector.broadcast %cst_83 : f32 to vector<2x8x8xf32>
    %140 = arith.mulf %138, %139 : vector<2x8x8xf32>
    %141 = arith.addf %140, %1 : vector<2x8x8xf32>
    %cst_84 = arith.constant dense<0xFF800000> : vector<2x8xf32>
    %142 = vector.multi_reduction <maximumf>, %141, %cst_84 [2] : vector<2x8x8xf32> to vector<2x8xf32>
    %143 = vector.shape_cast %142 : vector<2x8xf32> to vector<2x8x1xf32>
    %144 = vector.broadcast %143 : vector<2x8x1xf32> to vector<2x8x8xf32>
    %145 = arith.subf %141, %144 : vector<2x8x8xf32>
    %146 = math.exp %145 : vector<2x8x8xf32>
    %cst_85 = arith.constant dense<0.000000e+00> : vector<2x8xf32>
    %147 = vector.multi_reduction <add>, %146, %cst_85 [2] : vector<2x8x8xf32> to vector<2x8xf32>
    %148 = vector.shape_cast %147 : vector<2x8xf32> to vector<2x8x1xf32>
    %149 = tpu.reciprocal %148 {approx = true} : vector<2x8x1xf32> -> vector<2x8x1xf32>
    %150 = vector.broadcast %149 : vector<2x8x1xf32> to vector<2x8x8xf32>
    %151 = arith.mulf %146, %150 : vector<2x8x8xf32>
    "tpu.trace_start"() <{level = 10 : i32, message = "bqp,bpk->bqk"}> : () -> ()
    %cst_86 = arith.constant dense<0.000000e+00> : vector<2x8x16xf32>
    %152 = tpu.matmul %151, %137, %cst_86 {dimension_numbers = #tpu.dot_dimension_numbers<[2], [1], [1], [2], [0, 0, 0, 1, 1, 2], [0], [0]>} : vector<2x8x8xf32>, vector<2x8x16xf32>, vector<2x8x16xf32> -> vector<2x8x16xf32>
    "tpu.trace_stop"() : () -> ()
    %153 = vector.shape_cast %152 : vector<2x8x16xf32> to vector<16x16xf32>
    %c2_87 = arith.constant 2 : index
    %c0_88 = arith.constant 0 : index
    %c0_89 = arith.constant 0 : index
    %154 = vector.load %arg3[%c2_87, %c0_88, %c0_89] : memref<4x16x32xf32, #tpu.memory_space<vmem>>, vector<1x16x32xf32>
    %155 = vector.shape_cast %154 : vector<1x16x32xf32> to vector<16x32xf32>
    %cst_90 = arith.constant dense<0.000000e+00> : vector<16x32xf32>
    %156 = tpu.matmul %153, %155, %cst_90 {dimension_numbers = #tpu.dot_dimension_numbers<[1], [0], [0], [1], [0, 0, 1, 1], [], []>} : vector<16x16xf32>, vector<16x32xf32>, vector<16x32xf32> -> vector<16x32xf32>
    %157 = arith.addf %125, %156 : vector<16x32xf32>
    %c7 = arith.constant 7 : index
    %c0_91 = arith.constant 0 : index
    %c0_92 = arith.constant 0 : index
    %158 = vector.load %arg2[%c7, %c0_91, %c0_92] : memref<12x32x16xf32, #tpu.memory_space<vmem>>, vector<1x32x16xf32>
    %159 = vector.shape_cast %158 : vector<1x32x16xf32> to vector<32x16xf32>
    %c9 = arith.constant 9 : index
    %c0_93 = arith.constant 0 : index
    %c0_94 = arith.constant 0 : index
    %160 = vector.load %arg2[%c9, %c0_93, %c0_94] : memref<12x32x16xf32, #tpu.memory_space<vmem>>, vector<1x32x16xf32>
    %161 = vector.shape_cast %160 : vector<1x32x16xf32> to vector<32x16xf32>
    %c11 = arith.constant 11 : index
    %c0_95 = arith.constant 0 : index
    %c0_96 = arith.constant 0 : index
    %162 = vector.load %arg2[%c11, %c0_95, %c0_96] : memref<12x32x16xf32, #tpu.memory_space<vmem>>, vector<1x32x16xf32>
    %163 = vector.shape_cast %162 : vector<1x32x16xf32> to vector<32x16xf32>
    %cst_97 = arith.constant dense<0.000000e+00> : vector<16x16xf32>
    %164 = tpu.matmul %124, %159, %cst_97 {dimension_numbers = #tpu.dot_dimension_numbers<[1], [0], [0], [1], [0, 0, 1, 1], [], []>} : vector<16x32xf32>, vector<32x16xf32>, vector<16x16xf32> -> vector<16x16xf32>
    %165 = vector.shape_cast %164 : vector<16x16xf32> to vector<2x8x16xf32>
    %cst_98 = arith.constant dense<0.000000e+00> : vector<16x16xf32>
    %166 = tpu.matmul %124, %161, %cst_98 {dimension_numbers = #tpu.dot_dimension_numbers<[1], [0], [0], [1], [0, 0, 1, 1], [], []>} : vector<16x32xf32>, vector<32x16xf32>, vector<16x16xf32> -> vector<16x16xf32>
    %167 = vector.shape_cast %166 : vector<16x16xf32> to vector<2x8x16xf32>
    %cst_99 = arith.constant dense<0.000000e+00> : vector<16x16xf32>
    %168 = tpu.matmul %124, %163, %cst_99 {dimension_numbers = #tpu.dot_dimension_numbers<[1], [0], [0], [1], [0, 0, 1, 1], [], []>} : vector<16x32xf32>, vector<32x16xf32>, vector<16x16xf32> -> vector<16x16xf32>
    %169 = vector.shape_cast %168 : vector<16x16xf32> to vector<2x8x16xf32>
    "tpu.trace_start"() <{level = 10 : i32, message = "bqk,bpk->bqp"}> : () -> ()
    %cst_100 = arith.constant dense<0.000000e+00> : vector<2x8x8xf32>
    %170 = tpu.matmul %165, %167, %cst_100 {dimension_numbers = #tpu.dot_dimension_numbers<[2], [2], [1], [1], [0, 0, 0, 1, 1, 1], [0], [0]>} : vector<2x8x16xf32>, vector<2x8x16xf32>, vector<2x8x8xf32> -> vector<2x8x8xf32>
    "tpu.trace_stop"() : () -> ()
    %cst_101 = arith.constant 2.500000e-01 : f32
    %171 = vector.broadcast %cst_101 : f32 to vector<2x8x8xf32>
    %172 = arith.mulf %170, %171 : vector<2x8x8xf32>
    %173 = arith.addf %172, %1 : vector<2x8x8xf32>
    %cst_102 = arith.constant dense<0xFF800000> : vector<2x8xf32>
    %174 = vector.multi_reduction <maximumf>, %173, %cst_102 [2] : vector<2x8x8xf32> to vector<2x8xf32>
    %175 = vector.shape_cast %174 : vector<2x8xf32> to vector<2x8x1xf32>
    %176 = vector.broadcast %175 : vector<2x8x1xf32> to vector<2x8x8xf32>
    %177 = arith.subf %173, %176 : vector<2x8x8xf32>
    %178 = math.exp %177 : vector<2x8x8xf32>
    %cst_103 = arith.constant dense<0.000000e+00> : vector<2x8xf32>
    %179 = vector.multi_reduction <add>, %178, %cst_103 [2] : vector<2x8x8xf32> to vector<2x8xf32>
    %180 = vector.shape_cast %179 : vector<2x8xf32> to vector<2x8x1xf32>
    %181 = tpu.reciprocal %180 {approx = true} : vector<2x8x1xf32> -> vector<2x8x1xf32>
    %182 = vector.broadcast %181 : vector<2x8x1xf32> to vector<2x8x8xf32>
    %183 = arith.mulf %178, %182 : vector<2x8x8xf32>
    "tpu.trace_start"() <{level = 10 : i32, message = "bqp,bpk->bqk"}> : () -> ()
    %cst_104 = arith.constant dense<0.000000e+00> : vector<2x8x16xf32>
    %184 = tpu.matmul %183, %169, %cst_104 {dimension_numbers = #tpu.dot_dimension_numbers<[2], [1], [1], [2], [0, 0, 0, 1, 1, 2], [0], [0]>} : vector<2x8x8xf32>, vector<2x8x16xf32>, vector<2x8x16xf32> -> vector<2x8x16xf32>
    "tpu.trace_stop"() : () -> ()
    %185 = vector.shape_cast %184 : vector<2x8x16xf32> to vector<16x16xf32>
    %c3_105 = arith.constant 3 : index
    %c0_106 = arith.constant 0 : index
    %c0_107 = arith.constant 0 : index
    %186 = vector.load %arg3[%c3_105, %c0_106, %c0_107] : memref<4x16x32xf32, #tpu.memory_space<vmem>>, vector<1x16x32xf32>
    %187 = vector.shape_cast %186 : vector<1x16x32xf32> to vector<16x32xf32>
    %cst_108 = arith.constant dense<0.000000e+00> : vector<16x32xf32>
    %188 = tpu.matmul %185, %187, %cst_108 {dimension_numbers = #tpu.dot_dimension_numbers<[1], [0], [0], [1], [0, 0, 1, 1], [], []>} : vector<16x16xf32>, vector<16x32xf32>, vector<16x32xf32> -> vector<16x32xf32>
    %189 = arith.addf %157, %188 : vector<16x32xf32>
    %190 = arith.addf %189, %124 : vector<16x32xf32>
    %c1_109 = arith.constant 1 : index
    %c0_110 = arith.constant 0 : index
    %c0_111 = arith.constant 0 : index
    %191 = vector.load %arg4[%c1_109, %c0_110, %c0_111] : memref<2x1x32xf32, #tpu.memory_space<vmem>>, vector<1x1x32xf32>
    %192 = vector.shape_cast %191 : vector<1x1x32xf32> to vector<1x32xf32>
    %c1_112 = arith.constant 1 : index
    %c0_113 = arith.constant 0 : index
    %c0_114 = arith.constant 0 : index
    %193 = vector.load %arg5[%c1_112, %c0_113, %c0_114] : memref<2x1x32xf32, #tpu.memory_space<vmem>>, vector<1x1x32xf32>
    %194 = vector.shape_cast %193 : vector<1x1x32xf32> to vector<1x32xf32>
    %cst_115 = arith.constant dense<0.000000e+00> : vector<16xf32>
    %195 = vector.multi_reduction <add>, %190, %cst_115 [1] : vector<16x32xf32> to vector<16xf32>
    %196 = vector.shape_cast %195 : vector<16xf32> to vector<16x1xf32>
    %cst_116 = arith.constant 3.200000e+01 : f32
    %197 = vector.broadcast %cst_116 : f32 to vector<16x1xf32>
    %198 = arith.divf %196, %197 : vector<16x1xf32>
    %199 = vector.broadcast %198 : vector<16x1xf32> to vector<16x32xf32>
    %200 = arith.subf %190, %199 : vector<16x32xf32>
    %201 = arith.mulf %200, %200 : vector<16x32xf32>
    %cst_117 = arith.constant dense<0.000000e+00> : vector<16xf32>
    %202 = vector.multi_reduction <add>, %201, %cst_117 [1] : vector<16x32xf32> to vector<16xf32>
    %203 = vector.shape_cast %202 : vector<16xf32> to vector<16x1xf32>
    %cst_118 = arith.constant 3.200000e+01 : f32
    %204 = vector.broadcast %cst_118 : f32 to vector<16x1xf32>
    %205 = arith.divf %203, %204 : vector<16x1xf32>
    %cst_119 = arith.constant 9.99999974E-6 : f32
    %206 = vector.broadcast %cst_119 : f32 to vector<16x1xf32>
    %207 = arith.addf %205, %206 : vector<16x1xf32>
    %208 = math.rsqrt %207 : vector<16x1xf32>
    %209 = vector.broadcast %208 : vector<16x1xf32> to vector<16x32xf32>
    %210 = arith.mulf %200, %209 : vector<16x32xf32>
    %211 = vector.broadcast %192 : vector<1x32xf32> to vector<16x32xf32>
    %212 = arith.mulf %210, %211 : vector<16x32xf32>
    %213 = vector.broadcast %194 : vector<1x32xf32> to vector<16x32xf32>
    %214 = arith.addf %212, %213 : vector<16x32xf32>
    %c1_120 = arith.constant 1 : index
    %c0_121 = arith.constant 0 : index
    %c0_122 = arith.constant 0 : index
    %215 = vector.load %arg6[%c1_120, %c0_121, %c0_122] : memref<2x32x64xf32, #tpu.memory_space<vmem>>, vector<1x32x64xf32>
    %216 = vector.shape_cast %215 : vector<1x32x64xf32> to vector<32x64xf32>
    %cst_123 = arith.constant dense<0.000000e+00> : vector<16x64xf32>
    %217 = tpu.matmul %214, %216, %cst_123 {dimension_numbers = #tpu.dot_dimension_numbers<[1], [0], [0], [1], [0, 0, 1, 1], [], []>} : vector<16x32xf32>, vector<32x64xf32>, vector<16x64xf32> -> vector<16x64xf32>
    %cst_124 = arith.constant 0.000000e+00 : f32
    %218 = vector.broadcast %cst_124 : f32 to vector<16x64xf32>
    %219 = arith.maximumf %217, %218 : vector<16x64xf32>
    %c1_125 = arith.constant 1 : index
    %c0_126 = arith.constant 0 : index
    %c0_127 = arith.constant 0 : index
    %220 = vector.load %arg7[%c1_125, %c0_126, %c0_127] : memref<2x64x32xf32, #tpu.memory_space<vmem>>, vector<1x64x32xf32>
    %221 = vector.shape_cast %220 : vector<1x64x32xf32> to vector<64x32xf32>
    %cst_128 = arith.constant dense<0.000000e+00> : vector<16x32xf32>
    %222 = tpu.matmul %219, %221, %cst_128 {dimension_numbers = #tpu.dot_dimension_numbers<[1], [0], [0], [1], [0, 0, 1, 1], [], []>} : vector<16x64xf32>, vector<64x32xf32>, vector<16x32xf32> -> vector<16x32xf32>
    %223 = arith.addf %222, %214 : vector<16x32xf32>
    %c1_129 = arith.constant 1 : index
    %c0_130 = arith.constant 0 : index
    %c0_131 = arith.constant 0 : index
    %224 = vector.load %arg8[%c1_129, %c0_130, %c0_131] : memref<2x1x32xf32, #tpu.memory_space<vmem>>, vector<1x1x32xf32>
    %225 = vector.shape_cast %224 : vector<1x1x32xf32> to vector<1x32xf32>
    %c1_132 = arith.constant 1 : index
    %c0_133 = arith.constant 0 : index
    %c0_134 = arith.constant 0 : index
    %226 = vector.load %arg9[%c1_132, %c0_133, %c0_134] : memref<2x1x32xf32, #tpu.memory_space<vmem>>, vector<1x1x32xf32>
    %227 = vector.shape_cast %226 : vector<1x1x32xf32> to vector<1x32xf32>
    %cst_135 = arith.constant dense<0.000000e+00> : vector<16xf32>
    %228 = vector.multi_reduction <add>, %223, %cst_135 [1] : vector<16x32xf32> to vector<16xf32>
    %229 = vector.shape_cast %228 : vector<16xf32> to vector<16x1xf32>
    %cst_136 = arith.constant 3.200000e+01 : f32
    %230 = vector.broadcast %cst_136 : f32 to vector<16x1xf32>
    %231 = arith.divf %229, %230 : vector<16x1xf32>
    %232 = vector.broadcast %231 : vector<16x1xf32> to vector<16x32xf32>
    %233 = arith.subf %223, %232 : vector<16x32xf32>
    %234 = arith.mulf %233, %233 : vector<16x32xf32>
    %cst_137 = arith.constant dense<0.000000e+00> : vector<16xf32>
    %235 = vector.multi_reduction <add>, %234, %cst_137 [1] : vector<16x32xf32> to vector<16xf32>
    %236 = vector.shape_cast %235 : vector<16xf32> to vector<16x1xf32>
    %cst_138 = arith.constant 3.200000e+01 : f32
    %237 = vector.broadcast %cst_138 : f32 to vector<16x1xf32>
    %238 = arith.divf %236, %237 : vector<16x1xf32>
    %cst_139 = arith.constant 9.99999974E-6 : f32
    %239 = vector.broadcast %cst_139 : f32 to vector<16x1xf32>
    %240 = arith.addf %238, %239 : vector<16x1xf32>
    %241 = math.rsqrt %240 : vector<16x1xf32>
    %242 = vector.broadcast %241 : vector<16x1xf32> to vector<16x32xf32>
    %243 = arith.mulf %233, %242 : vector<16x32xf32>
    %244 = vector.broadcast %225 : vector<1x32xf32> to vector<16x32xf32>
    %245 = arith.mulf %243, %244 : vector<16x32xf32>
    %246 = vector.broadcast %227 : vector<1x32xf32> to vector<16x32xf32>
    %247 = arith.addf %245, %246 : vector<16x32xf32>
    %248 = vector.shape_cast %247 : vector<16x32xf32> to vector<2x8x32xf32>
    %249 = vector.extract_strided_slice %248 {offsets = [0, 7, 0], sizes = [2, 1, 32], strides = [1, 1, 1]} : vector<2x8x32xf32> to vector<2x1x32xf32>
    %250 = vector.shape_cast %249 : vector<2x1x32xf32> to vector<2x32xf32>
    %c0_140 = arith.constant 0 : index
    %c0_141 = arith.constant 0 : index
    %251 = vector.load %arg10[%c0_140, %c0_141] : memref<32x16xf32, #tpu.memory_space<vmem>>, vector<32x16xf32>
    %cst_142 = arith.constant dense<0.000000e+00> : vector<2x16xf32>
    %252 = tpu.matmul %250, %251, %cst_142 {dimension_numbers = #tpu.dot_dimension_numbers<[1], [0], [0], [1], [0, 0, 1, 1], [], []>} : vector<2x32xf32>, vector<32x16xf32>, vector<2x16xf32> -> vector<2x16xf32>
    %c0_143 = arith.constant 0 : index
    %c0_144 = arith.constant 0 : index
    %253 = vector.load %arg11[%c0_143, %c0_144] : memref<2x16xf32, #tpu.memory_space<vmem>>, vector<2x16xf32>
    tpu.vector_store %arg11[%c0_143, %c0_144], %252 {strides = array<i32>} : memref<2x16xf32, #tpu.memory_space<vmem>>, vector<2x16xf32>,
    return
  }
}

</mosaic_0001>

<llo_original>
// kernel: duo4srec_forward.1
$region0: #{duo4srec_forward.1}
  #allocation0 [shape = 'u32[]', space=smem, size = 0x4, offset = 0x4, fixed_abs, tag = 'smem constant byte address 0x4 - core index']
  #allocation1 [shape = 'u32[144,128]{1,0:T(1,128)}', space=vmem, size = 0x12000, scoped, tag = 'internal scratch']
  %s0 = inlined_call_operand.vmem [shape: f32[16,32], index: 0, kind: input, shape index: {}]
  %s1 = inlined_call_operand.vmem [shape: f32[2,8,8], index: 1, kind: input, shape index: {}]
  %s2 = inlined_call_operand.vmem [shape: f32[12,32,16], index: 2, kind: input, shape index: {}]
  %s3 = inlined_call_operand.vmem [shape: f32[4,16,32], index: 3, kind: input, shape index: {}]
  %s4 = inlined_call_operand.vmem [shape: f32[2,1,32], index: 4, kind: input, shape index: {}]
  %s5 = inlined_call_operand.vmem [shape: f32[2,1,32], index: 5, kind: input, shape index: {}]
  %s6 = inlined_call_operand.vmem [shape: f32[2,32,64], index: 6, kind: input, shape index: {}]
  %s7 = inlined_call_operand.vmem [shape: f32[2,64,32], index: 7, kind: input, shape index: {}]
  %s8 = inlined_call_operand.vmem [shape: f32[2,1,32], index: 8, kind: input, shape index: {}]
  %s9 = inlined_call_operand.vmem [shape: f32[2,1,32], index: 9, kind: input, shape index: {}]
  %s10 = inlined_call_operand.vmem [shape: f32[32,16], index: 10, kind: input, shape index: {}]
  %s11 = inlined_call_operand.hbm [shape: f32[2,16], index: 11, kind: output, shape index: {}]
  %s12 = sld [smem:[#allocation0]]
  $region54: #{duo4srec_forward.1} parent=0
    _
  %s14 = ssub.s32 1, %s12
  %s15 = scalar_select 0, %s14, %s12
  $region1: #{duo4srec_forward.1} parent=0
    #allocation2 [shape = 'u8[1024]{0}', space=vmem, size = 0x400, scoped, tag = 'output window, operand 0, single buffered']
    #allocation3 [shape = 's32[1]{0}', space=sflag, size = 0x4, scoped, tag = 'scoped memory for duo4srec_forward.1']
    %16 = vsyncpa [#allocation3], 0
    // Predicated region
    $region2: #{duo4srec_forward.1} parent=1 // pred_check
      _
    $region3: #{duo4srec_forward.1} parent=1 // pred_check_branch
      %18 = sbr.rel (0) target = $region5
    $region4: #{duo4srec_forward.1} parent=1 // pred_region
      _
    $region5: #{duo4srec_forward.1} parent=1 // pred_fallthru
      _
    // Predicated region
    $region6: #{duo4srec_forward.1} parent=1 // pred_check
      _
    $region7: #{duo4srec_forward.1} parent=1 // pred_check_branch
      %20 = sbr.rel (0) target = $region9
    $region8: #{duo4srec_forward.1} parent=1 // pred_region
      _
    $region9: #{duo4srec_forward.1} parent=1 // pred_fallthru
      _
    // Predicated region
    $region10: #{duo4srec_forward.1} parent=1 // pred_check
      _
    $region11: #{duo4srec_forward.1} parent=1 // pred_check_branch
      %22 = sbr.rel (0) target = $region13
    $region12: #{duo4srec_forward.1} parent=1 // pred_region
      _
    $region13: #{duo4srec_forward.1} parent=1 // pred_fallthru
      _
    // Predicated region
    $region14: #{duo4srec_forward.1} parent=1 // pred_check
      _
    $region15: #{duo4srec_forward.1} parent=1 // pred_check_branch
      %24 = sbr.rel (0) target = $region17
    $region16: #{duo4srec_forward.1} parent=1 // pred_region
      _
    $region17: #{duo4srec_forward.1} parent=1 // pred_fallthru
      _
    // Predicated region
    $region18: #{duo4srec_forward.1} parent=1 // pred_check
      _
    $region19: #{duo4srec_forward.1} parent=1 // pred_check_branch
      %26 = sbr.rel (0) target = $region21
    $region20: #{duo4srec_forward.1} parent=1 // pred_region
      _
    $region21: #{duo4srec_forward.1} parent=1 // pred_fallthru
      _
    // Predicated region
    $region22: #{duo4srec_forward.1} parent=1 // pred_check
      _
    $region23: #{duo4srec_forward.1} parent=1 // pred_check_branch
      %28 = sbr.rel (0) target = $region25
    $region24: #{duo4srec_forward.1} parent=1 // pred_region
      _
    $region25: #{duo4srec_forward.1} parent=1 // pred_fallthru
      _
    // Predicated region
    $region26: #{duo4srec_forward.1} parent=1 // pred_check
      _
    $region27: #{duo4srec_forward.1} parent=1 // pred_check_branch
      %30 = sbr.rel (0) target = $region29
    $region28: #{duo4srec_forward.1} parent=1 // pred_region
      _
    $region29: #{duo4srec_forward.1} parent=1 // pred_fallthru
      _
    // Predicated region
    $region30: #{duo4srec_forward.1} parent=1 // pred_check
      _
    $region31: #{duo4srec_forward.1} parent=1 // pred_check_branch
      %32 = sbr.rel (0) target = $region33
    $region32: #{duo4srec_forward.1} parent=1 // pred_region
      _
    $region33: #{duo4srec_forward.1} parent=1 // pred_fallthru
      _
    // Predicated region
    $region34: #{duo4srec_forward.1} parent=1 // pred_check
      _
    $region35: #{duo4srec_forward.1} parent=1 // pred_check_branch
      %34 = sbr.rel (0) target = $region37
    $region36: #{duo4srec_forward.1} parent=1 // pred_region
      _
    $region37: #{duo4srec_forward.1} parent=1 // pred_fallthru
      _
    // Predicated region
    $region38: #{duo4srec_forward.1} parent=1 // pred_check
      _
    $region39: #{duo4srec_forward.1} parent=1 // pred_check_branch
      %36 = sbr.rel (0) target = $region41
    $region40: #{duo4srec_forward.1} parent=1 // pred_region
      _
    $region41: #{duo4srec_forward.1} parent=1 // pred_fallthru
      _
    // Predicated region
    $region42: #{duo4srec_forward.1} parent=1 // pred_check
      _
    $region43: #{duo4srec_forward.1} parent=1 // pred_check_branch
      %38 = sbr.rel (0) target = $region45
    $region44: #{duo4srec_forward.1} parent=1 // pred_region
      _
    $region45: #{duo4srec_forward.1} parent=1 // pred_fallthru
      _
    %v39 = vld [vmem:[%s0] sm:$0xff]
    %v40 = vld [vmem:[%s0 + $0x8] sm:$0xff]
    %v41 = vld [vmem:[%s1] sm:$0xff]
    %v42 = vld [vmem:[%s1 + $0x8] sm:$0xff]
    %v43 = vld [vmem:[%s2] sm:$0xff]
    %v44 = vld [vmem:[%s2 + $0x8] sm:$0xff]
    %v45 = vld [vmem:[%s2 + $0x10] sm:$0xff]
    %v46 = vld [vmem:[%s2 + $0x18] sm:$0xff]
    %s47 = scalar_lea.vmem %s2, 64
    %v48 = vld [vmem:[%s47] sm:$0xff]
    %v49 = vld [vmem:[%s47 + $0x8] sm:$0xff]
    %v50 = vld [vmem:[%s47 + $0x10] sm:$0xff]
    %v51 = vld [vmem:[%s47 + $0x18] sm:$0xff]
    %s52 = scalar_lea.vmem %s2, 128
    %v53 = vld [vmem:[%s52] sm:$0xff]
    %v54 = vld [vmem:[%s52 + $0x8] sm:$0xff]
    %v55 = vld [vmem:[%s52 + $0x10] sm:$0xff]
    %v56 = vld [vmem:[%s52 + $0x18] sm:$0xff]
    %vm57 = vcmask 261120
    %v59 = vsel %vm57, %v39, 0
    %v62 = vsel %vm57, %v40, 0
    %64 = vmatprep.subr.mxu0 0.0
    %65 = vmatpush1.msra.mxu0 %v43
    %66 = vmatprep.subr.mxu0 0.0
    %67 = vmatpush1.msra.mxu0 %v44
    %68 = vmatprep.subr.mxu0 0.0
    %69 = vmatpush1.msra.mxu0 %v45
    %70 = vmatprep.subr.mxu0 0.0
    %71 = vmatpush1.msra.mxu0 %v46
    %72 = vmatprep.subr.mxu0 0.0
    %73 = vmatpush1.msra.mxu0 0.0
    %74 = vmatprep.subr.mxu0 0.0
    %75 = vmatpush1.msra.mxu0 0.0
    %76 = vmatprep.subr.mxu0 0.0
    %77 = vmatpush1.msra.mxu0 0.0
    %78 = vmatprep.subr.mxu0 0.0
    %79 = vmatpush1.msra.mxu0 0.0
    %80 = vmatprep.subr.mxu0 0.0
    %81 = vmatpush1.msra.mxu0 0.0
    %82 = vmatprep.subr.mxu0 0.0
    %83 = vmatpush1.msra.mxu0 0.0
    %84 = vmatprep.subr.mxu0 0.0
    %85 = vmatpush1.msra.mxu0 0.0
    %86 = vmatprep.subr.mxu0 0.0
    %87 = vmatpush1.msra.mxu0 0.0
    %88 = vmatprep.subr.mxu0 0.0
    %89 = vmatpush1.msra.mxu0 0.0
    %90 = vmatprep.subr.mxu0 0.0
    %91 = vmatpush1.msra.mxu0 0.0
    %92 = vmatprep.subr.mxu0 0.0
    %93 = vmatpush1.msra.mxu0 0.0
    %94 = vmatprep.subr.mxu0 0.0
    %95 = vmatpush1.msra.mxu0 0.0
    %96 = vmatprep.subr.mxu0 0.0
    %97 = vmatpush1.msra.mxu0 0.0
    %98 = vmatprep.subr.mxu0 0.0
    %99 = vmatpush1.msra.mxu0 0.0
    %100 = vmatprep.subr.mxu0 0.0
    %101 = vmatpush1.msra.mxu0 0.0
    %102 = vmatprep.subr.mxu0 0.0
    %103 = vmatpush1.msra.mxu0 0.0
    %104 = vmatprep.subr.mxu0 0.0
    %105 = vmatpush1.msra.mxu0 0.0
    %106 = vmatprep.subr.mxu0 0.0
    %107 = vmatpush1.msra.mxu0 0.0
    %108 = vmatprep.subr.mxu0 0.0
    %109 = vmatpush1.msra.mxu0 0.0
    %110 = vmatprep.subr.mxu0 0.0
    %111 = vmatpush1.msra.mxu0 0.0
    %112 = vmatprep.subr.mxu0 0.0
    %113 = vmatpush1.msra.mxu0 0.0
    %114 = vmatprep.subr.mxu0 0.0
    %115 = vmatpush1.msra.mxu0 0.0
    %116 = vmatprep.subr.mxu0 0.0
    %117 = vmatpush1.msra.mxu0 0.0
    %118 = vmatprep.subr.mxu0 0.0
    %119 = vmatpush1.msra.mxu0 0.0
    %120 = vmatprep.subr.mxu0 0.0
    %121 = vmatpush1.msra.mxu0 0.0
    %122 = vmatprep.subr.mxu0 0.0
    %123 = vmatpush1.msra.mxu0 0.0
    %124 = vmatprep.subr.mxu0 0.0
    %125 = vmatpush1.msra.mxu0 0.0
    %126 = vmatprep.subr.mxu0 0.0
    %127 = vmatpush1.msra.mxu0 0.0
    %128 = vmatprep.mubr.f32.mxu0 0.0
    %129 = vmatmul.mubr.f32.gmra.mrb[0].mxu0 %v59
    %v130 = vpop.f32.mrb[0].mxu0
    %v131 = vadd.f32 0.0, %v130
    %v132 = vpop.f32.mrb[0].mxu0
    %133 = vmatprep.mubr.f32.mxu0 0.0
    %134 = vmatmul.mubr.f32.gmra.mrb[0].mxu0 %v62
    %v135 = vpop.f32.mrb[0].mxu0
    %v136 = vadd.f32 0.0, %v135
    %v137 = vpop.f32.mrb[0].mxu0
    %138 = vdwg.mxu0
    %139 = vmatprep.subr.mxu0 0.0
    %140 = vmatpush1.msra.mxu0 %v48
    %141 = vmatprep.subr.mxu0 0.0
    %142 = vmatpush1.msra.mxu0 %v49
    %143 = vmatprep.subr.mxu0 0.0
    %144 = vmatpush1.msra.mxu0 %v50
    %145 = vmatprep.subr.mxu0 0.0
    %146 = vmatpush1.msra.mxu0 %v51
    %147 = vmatprep.subr.mxu0 0.0
    %148 = vmatpush1.msra.mxu0 0.0
    %149 = vmatprep.subr.mxu0 0.0
    %150 = vmatpush1.msra.mxu0 0.0
    %151 = vmatprep.subr.mxu0 0.0
    %152 = vmatpush1.msra.mxu0 0.0
    %153 = vmatprep.subr.mxu0 0.0
    %154 = vmatpush1.msra.mxu0 0.0
    %155 = vmatprep.subr.mxu0 0.0
    %156 = vmatpush1.msra.mxu0 0.0
    %157 = vmatprep.subr.mxu0 0.0
    %158 = vmatpush1.msra.mxu0 0.0
    %159 = vmatprep.subr.mxu0 0.0
    %160 = vmatpush1.msra.mxu0 0.0
    %161 = vmatprep.subr.mxu0 0.0
    %162 = vmatpush1.msra.mxu0 0.0
    %163 = vmatprep.subr.mxu0 0.0
    %164 = vmatpush1.msra.mxu0 0.0
    %165 = vmatprep.subr.mxu0 0.0
    %166 = vmatpush1.msra.mxu0 0.0
    %167 = vmatprep.subr.mxu0 0.0
    %168 = vmatpush1.msra.mxu0 0.0
    %169 = vmatprep.subr.mxu0 0.0
    %170 = vmatpush1.msra.mxu0 0.0
    %171 = vmatprep.subr.mxu0 0.0
    %172 = vmatpush1.msra.mxu0 0.0
    %173 = vmatprep.subr.mxu0 0.0
    %174 = vmatpush1.msra.mxu0 0.0
    %175 = vmatprep.subr.mxu0 0.0
    %176 = vmatpush1.msra.mxu0 0.0
    %177 = vmatprep.subr.mxu0 0.0
    %178 = vmatpush1.msra.mxu0 0.0
    %179 = vmatprep.subr.mxu0 0.0
    %180 = vmatpush1.msra.mxu0 0.0
    %181 = vmatprep.subr.mxu0 0.0
    %182 = vmatpush1.msra.mxu0 0.0
    %183 = vmatprep.subr.mxu0 0.0
    %184 = vmatpush1.msra.mxu0 0.0
    %185 = vmatprep.subr.mxu0 0.0
    %186 = vmatpush1.msra.mxu0 0.0
    %187 = vmatprep.subr.mxu0 0.0
    %188 = vmatpush1.msra.mxu0 0.0
    %189 = vmatprep.subr.mxu0 0.0
    %190 = vmatpush1.msra.mxu0 0.0
    %191 = vmatprep.subr.mxu0 0.0
    %192 = vmatpush1.msra.mxu0 0.0
    %193 = vmatprep.subr.mxu0 0.0
    %194 = vmatpush1.msra.mxu0 0.0
    %195 = vmatprep.subr.mxu0 0.0
    %196 = vmatpush1.msra.mxu0 0.0
    %197 = vmatprep.subr.mxu0 0.0
    %198 = vmatpush1.msra.mxu0 0.0
    %199 = vmatprep.subr.mxu0 0.0
    %200 = vmatpush1.msra.mxu0 0.0
    %201 = vmatprep.subr.mxu0 0.0
    %202 = vmatpush1.msra.mxu0 0.0
    %203 = vmatprep.mubr.f32.mxu0 0.0
    %204 = vmatmul.mubr.f32.gmra.mrb[0].mxu0 %v59
    %v205 = vpop.f32.mrb[0].mxu0
    %v206 = vadd.f32 0.0, %v205
    %v207 = vpop.f32.mrb[0].mxu0
    %208 = vmatprep.mubr.f32.mxu0 0.0
    %209 = vmatmul.mubr.f32.gmra.mrb[0].mxu0 %v62
    %v210 = vpop.f32.mrb[0].mxu0
    %v211 = vadd.f32 0.0, %v210
    %v212 = vpop.f32.mrb[0].mxu0
    %213 = vdwg.mxu0
    %214 = vmatprep.subr.mxu0 0.0
    %215 = vmatpush1.msra.mxu0 %v53
    %216 = vmatprep.subr.mxu0 0.0
    %217 = vmatpush1.msra.mxu0 %v54
    %218 = vmatprep.subr.mxu0 0.0
    %219 = vmatpush1.msra.mxu0 %v55
    %220 = vmatprep.subr.mxu0 0.0
    %221 = vmatpush1.msra.mxu0 %v56
    %222 = vmatprep.subr.mxu0 0.0
    %223 = vmatpush1.msra.mxu0 0.0
    %224 = vmatprep.subr.mxu0 0.0
    %225 = vmatpush1.msra.mxu0 0.0
    %226 = vmatprep.subr.mxu0 0.0
    %227 = vmatpush1.msra.mxu0 0.0
    %228 = vmatprep.subr.mxu0 0.0
    %229 = vmatpush1.msra.mxu0 0.0
    %230 = vmatprep.subr.mxu0 0.0
    %231 = vmatpush1.msra.mxu0 0.0
    %232 = vmatprep.subr.mxu0 0.0
    %233 = vmatpush1.msra.mxu0 0.0
    %234 = vmatprep.subr.mxu0 0.0
    %235 = vmatpush1.msra.mxu0 0.0
    %236 = vmatprep.subr.mxu0 0.0
    %237 = vmatpush1.msra.mxu0 0.0
    %238 = vmatprep.subr.mxu0 0.0
    %239 = vmatpush1.msra.mxu0 0.0
    %240 = vmatprep.subr.mxu0 0.0
    %241 = vmatpush1.msra.mxu0 0.0
    %242 = vmatprep.subr.mxu0 0.0
    %243 = vmatpush1.msra.mxu0 0.0
    %244 = vmatprep.subr.mxu0 0.0
    %245 = vmatpush1.msra.mxu0 0.0
    %246 = vmatprep.subr.mxu0 0.0
    %247 = vmatpush1.msra.mxu0 0.0
    %248 = vmatprep.subr.mxu0 0.0
    %249 = vmatpush1.msra.mxu0 0.0
    %250 = vmatprep.subr.mxu0 0.0
    %251 = vmatpush1.msra.mxu0 0.0
    %252 = vmatprep.subr.mxu0 0.0
    %253 = vmatpush1.msra.mxu0 0.0
    %254 = vmatprep.subr.mxu0 0.0
    %255 = vmatpush1.msra.mxu0 0.0
    %256 = vmatprep.subr.mxu0 0.0
    %257 = vmatpush1.msra.mxu0 0.0
    %258 = vmatprep.subr.mxu0 0.0
    %259 = vmatpush1.msra.mxu0 0.0
    %260 = vmatprep.subr.mxu0 0.0
    %261 = vmatpush1.msra.mxu0 0.0
    %262 = vmatprep.subr.mxu0 0.0
    %263 = vmatpush1.msra.mxu0 0.0
    %264 = vmatprep.subr.mxu0 0.0
    %265 = vmatpush1.msra.mxu0 0.0
    %266 = vmatprep.subr.mxu0 0.0
    %267 = vmatpush1.msra.mxu0 0.0
    %268 = vmatprep.subr.mxu0 0.0
    %269 = vmatpush1.msra.mxu0 0.0
    %270 = vmatprep.subr.mxu0 0.0
    %271 = vmatpush1.msra.mxu0 0.0
    %272 = vmatprep.subr.mxu0 0.0
    %273 = vmatpush1.msra.mxu0 0.0
    %274 = vmatprep.subr.mxu0 0.0
    %275 = vmatpush1.msra.mxu0 0.0
    %276 = vmatprep.subr.mxu0 0.0
    %277 = vmatpush1.msra.mxu0 0.0
    %278 = vmatprep.mubr.f32.mxu0 0.0
    %279 = vmatmul.mubr.f32.gmra.mrb[0].mxu0 %v59
    %v280 = vpop.f32.mrb[0].mxu0
    %v281 = vadd.f32 0.0, %v280
    %v282 = vpop.f32.mrb[0].mxu0
    %283 = vmatprep.mubr.f32.mxu0 0.0
    %284 = vmatmul.mubr.f32.gmra.mrb[0].mxu0 %v62
    %v285 = vpop.f32.mrb[0].mxu0
    %v286 = vadd.f32 0.0, %v285
    %v287 = vpop.f32.mrb[0].mxu0
    %288 = vdwg.mxu0
    %vm289 = vcmask 130048
    %v291 = vsel %vm289, %v131, 0
    %v294 = vsel %vm289, %v206, 0
    %296 = vmatprep.subr.mxu0 0.0
    %297 = vmatpush1.xpose.msra.mxu0 %v294
    %298 = vmatprep.subr.mxu0 0.0
    %299 = vmatpush1.xpose.msra.mxu0 0.0
    %300 = vmatprep.subr.mxu0 0.0
    %301 = vmatpush1.xpose.msra.mxu0 0.0
    %302 = vmatprep.subr.mxu0 0.0
    %303 = vmatpush1.xpose.msra.mxu0 0.0
    %304 = vmatprep.subr.mxu0 0.0
    %305 = vmatpush1.xpose.msra.mxu0 0.0
    %306 = vmatprep.subr.mxu0 0.0
    %307 = vmatpush1.xpose.msra.mxu0 0.0
    %308 = vmatprep.subr.mxu0 0.0
    %309 = vmatpush1.xpose.msra.mxu0 0.0
    %310 = vmatprep.subr.mxu0 0.0
    %311 = vmatpush1.xpose.msra.mxu0 0.0
    %312 = vmatprep.subr.mxu0 0.0
    %313 = vmatpush1.xpose.msra.mxu0 0.0
    %314 = vmatprep.subr.mxu0 0.0
    %315 = vmatpush1.xpose.msra.mxu0 0.0
    %316 = vmatprep.subr.mxu0 0.0
    %317 = vmatpush1.xpose.msra.mxu0 0.0
    %318 = vmatprep.subr.mxu0 0.0
    %319 = vmatpush1.xpose.msra.mxu0 0.0
    %320 = vmatprep.subr.mxu0 0.0
    %321 = vmatpush1.xpose.msra.mxu0 0.0
    %322 = vmatprep.subr.mxu0 0.0
    %323 = vmatpush1.xpose.msra.mxu0 0.0
    %324 = vmatprep.subr.mxu0 0.0
    %325 = vmatpush1.xpose.msra.mxu0 0.0
    %326 = vmatprep.subr.mxu0 0.0
    %327 = vmatpush1.xpose.msra.mxu0 0.0
    %328 = vmatprep.subr.mxu0 0.0
    %329 = vmatpush1.xpose.msra.mxu0 0.0
    %330 = vmatprep.subr.mxu0 0.0
    %331 = vmatpush1.xpose.msra.mxu0 0.0
    %332 = vmatprep.subr.mxu0 0.0
    %333 = vmatpush1.xpose.msra.mxu0 0.0
    %334 = vmatprep.subr.mxu0 0.0
    %335 = vmatpush1.xpose.msra.mxu0 0.0
    %336 = vmatprep.subr.mxu0 0.0
    %337 = vmatpush1.xpose.msra.mxu0 0.0
    %338 = vmatprep.subr.mxu0 0.0
    %339 = vmatpush1.xpose.msra.mxu0 0.0
    %340 = vmatprep.subr.mxu0 0.0
    %341 = vmatpush1.xpose.msra.mxu0 0.0
    %342 = vmatprep.subr.mxu0 0.0
    %343 = vmatpush1.xpose.msra.mxu0 0.0
    %344 = vmatprep.subr.mxu0 0.0
    %345 = vmatpush1.xpose.msra.mxu0 0.0
    %346 = vmatprep.subr.mxu0 0.0
    %347 = vmatpush1.xpose.msra.mxu0 0.0
    %348 = vmatprep.subr.mxu0 0.0
    %349 = vmatpush1.xpose.msra.mxu0 0.0
    %350 = vmatprep.subr.mxu0 0.0
    %351 = vmatpush1.xpose.msra.mxu0 0.0
    %352 = vmatprep.subr.mxu0 0.0
    %353 = vmatpush1.xpose.msra.mxu0 0.0
    %354 = vmatprep.subr.mxu0 0.0
    %355 = vmatpush1.xpose.msra.mxu0 0.0
    %356 = vmatprep.subr.mxu0 0.0
    %357 = vmatpush1.xpose.msra.mxu0 0.0
    %358 = vmatprep.subr.mxu0 0.0
    %359 = vmatpush1.xpose.msra.mxu0 0.0
    %360 = vmatprep.mubr.f32.mxu0 0.0
    %361 = vmatmul.mubr.f32.gmra.mrb[0].mxu0 %v291
    %v362 = vpop.f32.mrb[0].mxu0
    %v363 = vadd.f32 0.0, %v362
    %v364 = vpop.f32.mrb[0].mxu0
    %365 = vdwg.mxu0
    %v367 = vsel %vm289, %v136, 0
    %v370 = vsel %vm289, %v211, 0
    %372 = vmatprep.subr.mxu0 0.0
    %373 = vmatpush1.xpose.msra.mxu0 %v370
    %374 = vmatprep.subr.mxu0 0.0
    %375 = vmatpush1.xpose.msra.mxu0 0.0
    %376 = vmatprep.subr.mxu0 0.0
    %377 = vmatpush1.xpose.msra.mxu0 0.0
    %378 = vmatprep.subr.mxu0 0.0
    %379 = vmatpush1.xpose.msra.mxu0 0.0
    %380 = vmatprep.subr.mxu0 0.0
    %381 = vmatpush1.xpose.msra.mxu0 0.0
    %382 = vmatprep.subr.mxu0 0.0
    %383 = vmatpush1.xpose.msra.mxu0 0.0
    %384 = vmatprep.subr.mxu0 0.0
    %385 = vmatpush1.xpose.msra.mxu0 0.0
    %386 = vmatprep.subr.mxu0 0.0
    %387 = vmatpush1.xpose.msra.mxu0 0.0
    %388 = vmatprep.subr.mxu0 0.0
    %389 = vmatpush1.xpose.msra.mxu0 0.0
    %390 = vmatprep.subr.mxu0 0.0
    %391 = vmatpush1.xpose.msra.mxu0 0.0
    %392 = vmatprep.subr.mxu0 0.0
    %393 = vmatpush1.xpose.msra.mxu0 0.0
    %394 = vmatprep.subr.mxu0 0.0
    %395 = vmatpush1.xpose.msra.mxu0 0.0
    %396 = vmatprep.subr.mxu0 0.0
    %397 = vmatpush1.xpose.msra.mxu0 0.0
    %398 = vmatprep.subr.mxu0 0.0
    %399 = vmatpush1.xpose.msra.mxu0 0.0
    %400 = vmatprep.subr.mxu0 0.0
    %401 = vmatpush1.xpose.msra.mxu0 0.0
    %402 = vmatprep.subr.mxu0 0.0
    %403 = vmatpush1.xpose.msra.mxu0 0.0
    %404 = vmatprep.subr.mxu0 0.0
    %405 = vmatpush1.xpose.msra.mxu0 0.0
    %406 = vmatprep.subr.mxu0 0.0
    %407 = vmatpush1.xpose.msra.mxu0 0.0
    %408 = vmatprep.subr.mxu0 0.0
    %409 = vmatpush1.xpose.msra.mxu0 0.0
    %410 = vmatprep.subr.mxu0 0.0
    %411 = vmatpush1.xpose.msra.mxu0 0.0
    %412 = vmatprep.subr.mxu0 0.0
    %413 = vmatpush1.xpose.msra.mxu0 0.0
    %414 = vmatprep.subr.mxu0 0.0
    %415 = vmatpush1.xpose.msra.mxu0 0.0
    %416 = vmatprep.subr.mxu0 0.0
    %417 = vmatpush1.xpose.msra.mxu0 0.0
    %418 = vmatprep.subr.mxu0 0.0
    %419 = vmatpush1.xpose.msra.mxu0 0.0
    %420 = vmatprep.subr.mxu0 0.0
    %421 = vmatpush1.xpose.msra.mxu0 0.0
    %422 = vmatprep.subr.mxu0 0.0
    %423 = vmatpush1.xpose.msra.mxu0 0.0
    %424 = vmatprep.subr.mxu0 0.0
    %425 = vmatpush1.xpose.msra.mxu0 0.0
    %426 = vmatprep.subr.mxu0 0.0
    %427 = vmatpush1.xpose.msra.mxu0 0.0
    %428 = vmatprep.subr.mxu0 0.0
    %429 = vmatpush1.xpose.msra.mxu0 0.0
    %430 = vmatprep.subr.mxu0 0.0
    %431 = vmatpush1.xpose.msra.mxu0 0.0
    %432 = vmatprep.subr.mxu0 0.0
    %433 = vmatpush1.xpose.msra.mxu0 0.0
    %434 = vmatprep.subr.mxu0 0.0
    %435 = vmatpush1.xpose.msra.mxu0 0.0
    %436 = vmatprep.mubr.f32.mxu0 0.0
    %437 = vmatmul.mubr.f32.gmra.mrb[0].mxu0 %v367
    %v438 = vpop.f32.mrb[0].mxu0
    %v439 = vadd.f32 0.0, %v438
    %v440 = vpop.f32.mrb[0].mxu0
    %441 = vdwg.mxu0
    %v442 = vmul.f32 %v363, 0.25
    %v443 = vmul.f32 %v439, 0.25
    %v444 = vadd.f32 %v442, %v41
    %v445 = vadd.f32 %v443, %v42
    %vm446 = vcmask 64512
    %v447 = vsel %vm446, %v444, -inf
    %448 = vmax.xlane.f32.xlu0 %v447
    %v449 = vpop.xlane.xlu0 %448
    %v450 = vsel %vm446, %v445, -inf
    %451 = vmax.xlane.f32.xlu0 %v450
    %v452 = vpop.xlane.xlu0 %451
    %v453 = vsub.f32 %v444, %v449
    %v454 = vsub.f32 %v445, %v452
    %v455 = vmul.f32 %v453, 1.442695
    %v456 = vpow.pop %v455
    %v457 = vmul.f32 %v454, 1.442695
    %v458 = vpow.pop %v457
    %v459 = vsel %vm446, %v456, 0.0
    %460 = vadd.xlane.f32.xlu0 %v459
    %v461 = vpop.xlane.xlu0 %460
    %v462 = vsel %vm446, %v458, 0.0
    %463 = vadd.xlane.f32.xlu0 %v462
    %v464 = vpop.xlane.xlu0 %463
    %v465 = vrcp.pop %v461
    %v466 = vrcp.pop %v464
    %v467 = vmul.f32 %v456, %v465
    %v468 = vmul.f32 %v458, %v466
    %v470 = vsel %vm446, %v467, 0
    %472 = vmatprep.subr.mxu0 0.0
    %473 = vmatpush1.msra.mxu0 %v281
    %474 = vmatprep.subr.mxu0 0.0
    %475 = vmatpush1.msra.mxu0 0.0
    %476 = vmatprep.subr.mxu0 0.0
    %477 = vmatpush1.msra.mxu0 0.0
    %478 = vmatprep.subr.mxu0 0.0
    %479 = vmatpush1.msra.mxu0 0.0
    %480 = vmatprep.subr.mxu0 0.0
    %481 = vmatpush1.msra.mxu0 0.0
    %482 = vmatprep.subr.mxu0 0.0
    %483 = vmatpush1.msra.mxu0 0.0
    %484 = vmatprep.subr.mxu0 0.0
    %485 = vmatpush1.msra.mxu0 0.0
    %486 = vmatprep.subr.mxu0 0.0
    %487 = vmatpush1.msra.mxu0 0.0
    %488 = vmatprep.subr.mxu0 0.0
    %489 = vmatpush1.msra.mxu0 0.0
    %490 = vmatprep.subr.mxu0 0.0
    %491 = vmatpush1.msra.mxu0 0.0
    %492 = vmatprep.subr.mxu0 0.0
    %493 = vmatpush1.msra.mxu0 0.0
    %494 = vmatprep.subr.mxu0 0.0
    %495 = vmatpush1.msra.mxu0 0.0
    %496 = vmatprep.subr.mxu0 0.0
    %497 = vmatpush1.msra.mxu0 0.0
    %498 = vmatprep.subr.mxu0 0.0
    %499 = vmatpush1.msra.mxu0 0.0
    %500 = vmatprep.subr.mxu0 0.0
    %501 = vmatpush1.msra.mxu0 0.0
    %502 = vmatprep.subr.mxu0 0.0
    %503 = vmatpush1.msra.mxu0 0.0
    %504 = vmatprep.subr.mxu0 0.0
    %505 = vmatpush1.msra.mxu0 0.0
    %506 = vmatprep.subr.mxu0 0.0
    %507 = vmatpush1.msra.mxu0 0.0
    %508 = vmatprep.subr.mxu0 0.0
    %509 = vmatpush1.msra.mxu0 0.0
    %510 = vmatprep.subr.mxu0 0.0
    %511 = vmatpush1.msra.mxu0 0.0
    %512 = vmatprep.subr.mxu0 0.0
    %513 = vmatpush1.msra.mxu0 0.0
    %514 = vmatprep.subr.mxu0 0.0
    %515 = vmatpush1.msra.mxu0 0.0
    %516 = vmatprep.subr.mxu0 0.0
    %517 = vmatpush1.msra.mxu0 0.0
    %518 = vmatprep.subr.mxu0 0.0
    %519 = vmatpush1.msra.mxu0 0.0
    %520 = vmatprep.subr.mxu0 0.0
    %521 = vmatpush1.msra.mxu0 0.0
    %522 = vmatprep.subr.mxu0 0.0
    %523 = vmatpush1.msra.mxu0 0.0
    %524 = vmatprep.subr.mxu0 0.0
    %525 = vmatpush1.msra.mxu0 0.0
    %526 = vmatprep.subr.mxu0 0.0
    %527 = vmatpush1.msra.mxu0 0.0
    %528 = vmatprep.subr.mxu0 0.0
    %529 = vmatpush1.msra.mxu0 0.0
    %530 = vmatprep.subr.mxu0 0.0
    %531 = vmatpush1.msra.mxu0 0.0
    %532 = vmatprep.subr.mxu0 0.0
    %533 = vmatpush1.msra.mxu0 0.0
    %534 = vmatprep.subr.mxu0 0.0
    %535 = vmatpush1.msra.mxu0 0.0
    %536 = vmatprep.mubr.f32.mxu0 0.0
    %537 = vmatmul.mubr.f32.gmra.mrb[0].mxu0 %v470
    %v538 = vpop.f32.mrb[0].mxu0
    %v539 = vadd.f32 0.0, %v538
    %v540 = vpop.f32.mrb[0].mxu0
    %541 = vdwg.mxu0
    %v543 = vsel %vm446, %v468, 0
    %545 = vmatprep.subr.mxu0 0.0
    %546 = vmatpush1.msra.mxu0 %v286
    %547 = vmatprep.subr.mxu0 0.0
    %548 = vmatpush1.msra.mxu0 0.0
    %549 = vmatprep.subr.mxu0 0.0
    %550 = vmatpush1.msra.mxu0 0.0
    %551 = vmatprep.subr.mxu0 0.0
    %552 = vmatpush1.msra.mxu0 0.0
    %553 = vmatprep.subr.mxu0 0.0
    %554 = vmatpush1.msra.mxu0 0.0
    %555 = vmatprep.subr.mxu0 0.0
    %556 = vmatpush1.msra.mxu0 0.0
    %557 = vmatprep.subr.mxu0 0.0
    %558 = vmatpush1.msra.mxu0 0.0
    %559 = vmatprep.subr.mxu0 0.0
    %560 = vmatpush1.msra.mxu0 0.0
    %561 = vmatprep.subr.mxu0 0.0
    %562 = vmatpush1.msra.mxu0 0.0
    %563 = vmatprep.subr.mxu0 0.0
    %564 = vmatpush1.msra.mxu0 0.0
    %565 = vmatprep.subr.mxu0 0.0
    %566 = vmatpush1.msra.mxu0 0.0
    %567 = vmatprep.subr.mxu0 0.0
    %568 = vmatpush1.msra.mxu0 0.0
    %569 = vmatprep.subr.mxu0 0.0
    %570 = vmatpush1.msra.mxu0 0.0
    %571 = vmatprep.subr.mxu0 0.0
    %572 = vmatpush1.msra.mxu0 0.0
    %573 = vmatprep.subr.mxu0 0.0
    %574 = vmatpush1.msra.mxu0 0.0
    %575 = vmatprep.subr.mxu0 0.0
    %576 = vmatpush1.msra.mxu0 0.0
    %577 = vmatprep.subr.mxu0 0.0
    %578 = vmatpush1.msra.mxu0 0.0
    %579 = vmatprep.subr.mxu0 0.0
    %580 = vmatpush1.msra.mxu0 0.0
    %581 = vmatprep.subr.mxu0 0.0
    %582 = vmatpush1.msra.mxu0 0.0
    %583 = vmatprep.subr.mxu0 0.0
    %584 = vmatpush1.msra.mxu0 0.0
    %585 = vmatprep.subr.mxu0 0.0
    %586 = vmatpush1.msra.mxu0 0.0
    %587 = vmatprep.subr.mxu0 0.0
    %588 = vmatpush1.msra.mxu0 0.0
    %589 = vmatprep.subr.mxu0 0.0
    %590 = vmatpush1.msra.mxu0 0.0
    %591 = vmatprep.subr.mxu0 0.0
    %592 = vmatpush1.msra.mxu0 0.0
    %593 = vmatprep.subr.mxu0 0.0
    %594 = vmatpush1.msra.mxu0 0.0
    %595 = vmatprep.subr.mxu0 0.0
    %596 = vmatpush1.msra.mxu0 0.0
    %597 = vmatprep.subr.mxu0 0.0
    %598 = vmatpush1.msra.mxu0 0.0
    %599 = vmatprep.subr.mxu0 0.0
    %600 = vmatpush1.msra.mxu0 0.0
    %601 = vmatprep.subr.mxu0 0.0
    %602 = vmatpush1.msra.mxu0 0.0
    %603 = vmatprep.subr.mxu0 0.0
    %604 = vmatpush1.msra.mxu0 0.0
    %605 = vmatprep.subr.mxu0 0.0
    %606 = vmatpush1.msra.mxu0 0.0
    %607 = vmatprep.subr.mxu0 0.0
    %608 = vmatpush1.msra.mxu0 0.0
    %609 = vmatprep.mubr.f32.mxu0 0.0
    %610 = vmatmul.mubr.f32.gmra.mrb[0].mxu0 %v543
    %v611 = vpop.f32.mrb[0].mxu0
    %v612 = vadd.f32 0.0, %v611
    %v613 = vpop.f32.mrb[0].mxu0
    %614 = vdwg.mxu0
    %v615 = vld [vmem:[%s3] sm:$0xff]
    %v616 = vld [vmem:[%s3 + $0x8] sm:$0xff]
    %s617 = scalar_lea.vmem %s2, 32
    %v618 = vld [vmem:[%s617] sm:$0xff]
    %v619 = vld [vmem:[%s617 + $0x8] sm:$0xff]
    %v620 = vld [vmem:[%s617 + $0x10] sm:$0xff]
    %v621 = vld [vmem:[%s617 + $0x18] sm:$0xff]
    %s622 = scalar_lea.vmem %s2, 96
    %v623 = vld [vmem:[%s622] sm:$0xff]
    %v624 = vld [vmem:[%s622 + $0x8] sm:$0xff]
    %v625 = vld [vmem:[%s622 + $0x10] sm:$0xff]
    %v626 = vld [vmem:[%s622 + $0x18] sm:$0xff]
    %s627 = scalar_lea.vmem %s2, 160
    %v628 = vld [vmem:[%s627] sm:$0xff]
    %v629 = vld [vmem:[%s627 + $0x8] sm:$0xff]
    %v630 = vld [vmem:[%s627 + $0x10] sm:$0xff]
    %v631 = vld [vmem:[%s627 + $0x18] sm:$0xff]
    %632 = vmatprep.subr.mxu0 0.0
    %633 = vmatpush1.msra.mxu0 %v618
    %634 = vmatprep.subr.mxu0 0.0
    %635 = vmatpush1.msra.mxu0 %v619
    %636 = vmatprep.subr.mxu0 0.0
    %637 = vmatpush1.msra.mxu0 %v620
    %638 = vmatprep.subr.mxu0 0.0
    %639 = vmatpush1.msra.mxu0 %v621
    %640 = vmatprep.subr.mxu0 0.0
    %641 = vmatpush1.msra.mxu0 0.0
    %642 = vmatprep.subr.mxu0 0.0
    %643 = vmatpush1.msra.mxu0 0.0
    %644 = vmatprep.subr.mxu0 0.0
    %645 = vmatpush1.msra.mxu0 0.0
    %646 = vmatprep.subr.mxu0 0.0
    %647 = vmatpush1.msra.mxu0 0.0
    %648 = vmatprep.subr.mxu0 0.0
    %649 = vmatpush1.msra.mxu0 0.0
    %650 = vmatprep.subr.mxu0 0.0
    %651 = vmatpush1.msra.mxu0 0.0
    %652 = vmatprep.subr.mxu0 0.0
    %653 = vmatpush1.msra.mxu0 0.0
    %654 = vmatprep.subr.mxu0 0.0
    %655 = vmatpush1.msra.mxu0 0.0
    %656 = vmatprep.subr.mxu0 0.0
    %657 = vmatpush1.msra.mxu0 0.0
    %658 = vmatprep.subr.mxu0 0.0
    %659 = vmatpush1.msra.mxu0 0.0
    %660 = vmatprep.subr.mxu0 0.0
    %661 = vmatpush1.msra.mxu0 0.0
    %662 = vmatprep.subr.mxu0 0.0
    %663 = vmatpush1.msra.mxu0 0.0
    %664 = vmatprep.subr.mxu0 0.0
    %665 = vmatpush1.msra.mxu0 0.0
    %666 = vmatprep.subr.mxu0 0.0
    %667 = vmatpush1.msra.mxu0 0.0
    %668 = vmatprep.subr.mxu0 0.0
    %669 = vmatpush1.msra.mxu0 0.0
    %670 = vmatprep.subr.mxu0 0.0
    %671 = vmatpush1.msra.mxu0 0.0
    %672 = vmatprep.subr.mxu0 0.0
    %673 = vmatpush1.msra.mxu0 0.0
    %674 = vmatprep.subr.mxu0 0.0
    %675 = vmatpush1.msra.mxu0 0.0
    %676 = vmatprep.subr.mxu0 0.0
    %677 = vmatpush1.msra.mxu0 0.0
    %678 = vmatprep.subr.mxu0 0.0
    %679 = vmatpush1.msra.mxu0 0.0
    %680 = vmatprep.subr.mxu0 0.0
    %681 = vmatpush1.msra.mxu0 0.0
    %682 = vmatprep.subr.mxu0 0.0
    %683 = vmatpush1.msra.mxu0 0.0
    %684 = vmatprep.subr.mxu0 0.0
    %685 = vmatpush1.msra.mxu0 0.0
    %686 = vmatprep.subr.mxu0 0.0
    %687 = vmatpush1.msra.mxu0 0.0
    %688 = vmatprep.subr.mxu0 0.0
    %689 = vmatpush1.msra.mxu0 0.0
    %690 = vmatprep.subr.mxu0 0.0
    %691 = vmatpush1.msra.mxu0 0.0
    %692 = vmatprep.subr.mxu0 0.0
    %693 = vmatpush1.msra.mxu0 0.0
    %694 = vmatprep.subr.mxu0 0.0
    %695 = vmatpush1.msra.mxu0 0.0
    %696 = vmatprep.mubr.f32.mxu0 0.0
    %697 = vmatmul.mubr.f32.gmra.mrb[0].mxu0 %v59
    %v698 = vpop.f32.mrb[0].mxu0
    %v699 = vadd.f32 0.0, %v698
    %v700 = vpop.f32.mrb[0].mxu0
    %701 = vmatprep.mubr.f32.mxu0 0.0
    %702 = vmatmul.mubr.f32.gmra.mrb[0].mxu0 %v62
    %v703 = vpop.f32.mrb[0].mxu0
    %v704 = vadd.f32 0.0, %v703
    %v705 = vpop.f32.mrb[0].mxu0
    %706 = vdwg.mxu0
    %707 = vmatprep.subr.mxu0 0.0
    %708 = vmatpush1.msra.mxu0 %v623
    %709 = vmatprep.subr.mxu0 0.0
    %710 = vmatpush1.msra.mxu0 %v624
    %711 = vmatprep.subr.mxu0 0.0
    %712 = vmatpush1.msra.mxu0 %v625
    %713 = vmatprep.subr.mxu0 0.0
    %714 = vmatpush1.msra.mxu0 %v626
    %715 = vmatprep.subr.mxu0 0.0
    %716 = vmatpush1.msra.mxu0 0.0
    %717 = vmatprep.subr.mxu0 0.0
    %718 = vmatpush1.msra.mxu0 0.0
    %719 = vmatprep.subr.mxu0 0.0
    %720 = vmatpush1.msra.mxu0 0.0
    %721 = vmatprep.subr.mxu0 0.0
    %722 = vmatpush1.msra.mxu0 0.0
    %723 = vmatprep.subr.mxu0 0.0
    %724 = vmatpush1.msra.mxu0 0.0
    %725 = vmatprep.subr.mxu0 0.0
    %726 = vmatpush1.msra.mxu0 0.0
    %727 = vmatprep.subr.mxu0 0.0
    %728 = vmatpush1.msra.mxu0 0.0
    %729 = vmatprep.subr.mxu0 0.0
    %730 = vmatpush1.msra.mxu0 0.0
    %731 = vmatprep.subr.mxu0 0.0
    %732 = vmatpush1.msra.mxu0 0.0
    %733 = vmatprep.subr.mxu0 0.0
    %734 = vmatpush1.msra.mxu0 0.0
    %735 = vmatprep.subr.mxu0 0.0
    %736 = vmatpush1.msra.mxu0 0.0
    %737 = vmatprep.subr.mxu0 0.0
    %738 = vmatpush1.msra.mxu0 0.0
    %739 = vmatprep.subr.mxu0 0.0
    %740 = vmatpush1.msra.mxu0 0.0
    %741 = vmatprep.subr.mxu0 0.0
    %742 = vmatpush1.msra.mxu0 0.0
    %743 = vmatprep.subr.mxu0 0.0
    %744 = vmatpush1.msra.mxu0 0.0
    %745 = vmatprep.subr.mxu0 0.0
    %746 = vmatpush1.msra.mxu0 0.0
    %747 = vmatprep.subr.mxu0 0.0
    %748 = vmatpush1.msra.mxu0 0.0
    %749 = vmatprep.subr.mxu0 0.0
    %750 = vmatpush1.msra.mxu0 0.0
    %751 = vmatprep.subr.mxu0 0.0
    %752 = vmatpush1.msra.mxu0 0.0
    %753 = vmatprep.subr.mxu0 0.0
    %754 = vmatpush1.msra.mxu0 0.0
    %755 = vmatprep.subr.mxu0 0.0
    %756 = vmatpush1.msra.mxu0 0.0
    %757 = vmatprep.subr.mxu0 0.0
    %758 = vmatpush1.msra.mxu0 0.0
    %759 = vmatprep.subr.mxu0 0.0
    %760 = vmatpush1.msra.mxu0 0.0
    %761 = vmatprep.subr.mxu0 0.0
    %762 = vmatpush1.msra.mxu0 0.0
    %763 = vmatprep.subr.mxu0 0.0
    %764 = vmatpush1.msra.mxu0 0.0
    %765 = vmatprep.subr.mxu0 0.0
    %766 = vmatpush1.msra.mxu0 0.0
    %767 = vmatprep.subr.mxu0 0.0
    %768 = vmatpush1.msra.mxu0 0.0
    %769 = vmatprep.subr.mxu0 0.0
    %770 = vmatpush1.msra.mxu0 0.0
    %771 = vmatprep.mubr.f32.mxu0 0.0
    %772 = vmatmul.mubr.f32.gmra.mrb[0].mxu0 %v59
    %v773 = vpop.f32.mrb[0].mxu0
    %v774 = vadd.f32 0.0, %v773
    %v775 = vpop.f32.mrb[0].mxu0
    %776 = vmatprep.mubr.f32.mxu0 0.0
    %777 = vmatmul.mubr.f32.gmra.mrb[0].mxu0 %v62
    %v778 = vpop.f32.mrb[0].mxu0
    %v779 = vadd.f32 0.0, %v778
    %v780 = vpop.f32.mrb[0].mxu0
    %781 = vdwg.mxu0
    %782 = vmatprep.subr.mxu0 0.0
    %783 = vmatpush1.msra.mxu0 %v628
    %784 = vmatprep.subr.mxu0 0.0
    %785 = vmatpush1.msra.mxu0 %v629
    %786 = vmatprep.subr.mxu0 0.0
    %787 = vmatpush1.msra.mxu0 %v630
    %788 = vmatprep.subr.mxu0 0.0
    %789 = vmatpush1.msra.mxu0 %v631
    %790 = vmatprep.subr.mxu0 0.0
    %791 = vmatpush1.msra.mxu0 0.0
    %792 = vmatprep.subr.mxu0 0.0
    %793 = vmatpush1.msra.mxu0 0.0
    %794 = vmatprep.subr.mxu0 0.0
    %795 = vmatpush1.msra.mxu0 0.0
    %796 = vmatprep.subr.mxu0 0.0
    %797 = vmatpush1.msra.mxu0 0.0
    %798 = vmatprep.subr.mxu0 0.0
    %799 = vmatpush1.msra.mxu0 0.0
    %800 = vmatprep.subr.mxu0 0.0
    %801 = vmatpush1.msra.mxu0 0.0
    %802 = vmatprep.subr.mxu0 0.0
    %803 = vmatpush1.msra.mxu0 0.0
    %804 = vmatprep.subr.mxu0 0.0
    %805 = vmatpush1.msra.mxu0 0.0
    %806 = vmatprep.subr.mxu0 0.0
    %807 = vmatpush1.msra.mxu0 0.0
    %808 = vmatprep.subr.mxu0 0.0
    %809 = vmatpush1.msra.mxu0 0.0
    %810 = vmatprep.subr.mxu0 0.0
    %811 = vmatpush1.msra.mxu0 0.0
    %812 = vmatprep.subr.mxu0 0.0
    %813 = vmatpush1.msra.mxu0 0.0
    %814 = vmatprep.subr.mxu0 0.0
    %815 = vmatpush1.msra.mxu0 0.0
    %816 = vmatprep.subr.mxu0 0.0
    %817 = vmatpush1.msra.mxu0 0.0
    %818 = vmatprep.subr.mxu0 0.0
    %819 = vmatpush1.msra.mxu0 0.0
    %820 = vmatprep.subr.mxu0 0.0
    %821 = vmatpush1.msra.mxu0 0.0
    %822 = vmatprep.subr.mxu0 0.0
    %823 = vmatpush1.msra.mxu0 0.0
    %824 = vmatprep.subr.mxu0 0.0
    %825 = vmatpush1.msra.mxu0 0.0
    %826 = vmatprep.subr.mxu0 0.0
    %827 = vmatpush1.msra.mxu0 0.0
    %828 = vmatprep.subr.mxu0 0.0
    %829 = vmatpush1.msra.mxu0 0.0
    %830 = vmatprep.subr.mxu0 0.0
    %831 = vmatpush1.msra.mxu0 0.0
    %832 = vmatprep.subr.mxu0 0.0
    %833 = vmatpush1.msra.mxu0 0.0
    %834 = vmatprep.subr.mxu0 0.0
    %835 = vmatpush1.msra.mxu0 0.0
    %836 = vmatprep.subr.mxu0 0.0
    %837 = vmatpush1.msra.mxu0 0.0
    %838 = vmatprep.subr.mxu0 0.0
    %839 = vmatpush1.msra.mxu0 0.0
    %840 = vmatprep.subr.mxu0 0.0
    %841 = vmatpush1.msra.mxu0 0.0
    %842 = vmatprep.subr.mxu0 0.0
    %843 = vmatpush1.msra.mxu0 0.0
    %844 = vmatprep.subr.mxu0 0.0
    %845 = vmatpush1.msra.mxu0 0.0
    %846 = vmatprep.mubr.f32.mxu0 0.0
    %847 = vmatmul.mubr.f32.gmra.mrb[0].mxu0 %v59
    %v848 = vpop.f32.mrb[0].mxu0
    %v849 = vadd.f32 0.0, %v848
    %v850 = vpop.f32.mrb[0].mxu0
    %851 = vmatprep.mubr.f32.mxu0 0.0
    %852 = vmatmul.mubr.f32.gmra.mrb[0].mxu0 %v62
    %v853 = vpop.f32.mrb[0].mxu0
    %v854 = vadd.f32 0.0, %v853
    %v855 = vpop.f32.mrb[0].mxu0
    %856 = vdwg.mxu0
    %v858 = vsel %vm289, %v699, 0
    %v861 = vsel %vm289, %v774, 0
    %863 = vmatprep.subr.mxu0 0.0
    %864 = vmatpush1.xpose.msra.mxu0 %v861
    %865 = vmatprep.subr.mxu0 0.0
    %866 = vmatpush1.xpose.msra.mxu0 0.0
    %867 = vmatprep.subr.mxu0 0.0
    %868 = vmatpush1.xpose.msra.mxu0 0.0
    %869 = vmatprep.subr.mxu0 0.0
    %870 = vmatpush1.xpose.msra.mxu0 0.0
    %871 = vmatprep.subr.mxu0 0.0
    %872 = vmatpush1.xpose.msra.mxu0 0.0
    %873 = vmatprep.subr.mxu0 0.0
    %874 = vmatpush1.xpose.msra.mxu0 0.0
    %875 = vmatprep.subr.mxu0 0.0
    %876 = vmatpush1.xpose.msra.mxu0 0.0
    %877 = vmatprep.subr.mxu0 0.0
    %878 = vmatpush1.xpose.msra.mxu0 0.0
    %879 = vmatprep.subr.mxu0 0.0
    %880 = vmatpush1.xpose.msra.mxu0 0.0
    %881 = vmatprep.subr.mxu0 0.0
    %882 = vmatpush1.xpose.msra.mxu0 0.0
    %883 = vmatprep.subr.mxu0 0.0
    %884 = vmatpush1.xpose.msra.mxu0 0.0
    %885 = vmatprep.subr.mxu0 0.0
    %886 = vmatpush1.xpose.msra.mxu0 0.0
    %887 = vmatprep.subr.mxu0 0.0
    %888 = vmatpush1.xpose.msra.mxu0 0.0
    %889 = vmatprep.subr.mxu0 0.0
    %890 = vmatpush1.xpose.msra.mxu0 0.0
    %891 = vmatprep.subr.mxu0 0.0
    %892 = vmatpush1.xpose.msra.mxu0 0.0
    %893 = vmatprep.subr.mxu0 0.0
    %894 = vmatpush1.xpose.msra.mxu0 0.0
    %895 = vmatprep.subr.mxu0 0.0
    %896 = vmatpush1.xpose.msra.mxu0 0.0
    %897 = vmatprep.subr.mxu0 0.0
    %898 = vmatpush1.xpose.msra.mxu0 0.0
    %899 = vmatprep.subr.mxu0 0.0
    %900 = vmatpush1.xpose.msra.mxu0 0.0
    %901 = vmatprep.subr.mxu0 0.0
    %902 = vmatpush1.xpose.msra.mxu0 0.0
    %903 = vmatprep.subr.mxu0 0.0
    %904 = vmatpush1.xpose.msra.mxu0 0.0
    %905 = vmatprep.subr.mxu0 0.0
    %906 = vmatpush1.xpose.msra.mxu0 0.0
    %907 = vmatprep.subr.mxu0 0.0
    %908 = vmatpush1.xpose.msra.mxu0 0.0
    %909 = vmatprep.subr.mxu0 0.0
    %910 = vmatpush1.xpose.msra.mxu0 0.0
    %911 = vmatprep.subr.mxu0 0.0
    %912 = vmatpush1.xpose.msra.mxu0 0.0
    %913 = vmatprep.subr.mxu0 0.0
    %914 = vmatpush1.xpose.msra.mxu0 0.0
    %915 = vmatprep.subr.mxu0 0.0
    %916 = vmatpush1.xpose.msra.mxu0 0.0
    %917 = vmatprep.subr.mxu0 0.0
    %918 = vmatpush1.xpose.msra.mxu0 0.0
    %919 = vmatprep.subr.mxu0 0.0
    %920 = vmatpush1.xpose.msra.mxu0 0.0
    %921 = vmatprep.subr.mxu0 0.0
    %922 = vmatpush1.xpose.msra.mxu0 0.0
    %923 = vmatprep.subr.mxu0 0.0
    %924 = vmatpush1.xpose.msra.mxu0 0.0
    %925 = vmatprep.subr.mxu0 0.0
    %926 = vmatpush1.xpose.msra.mxu0 0.0
    %927 = vmatprep.mubr.f32.mxu0 0.0
    %928 = vmatmul.mubr.f32.gmra.mrb[0].mxu0 %v858
    %v929 = vpop.f32.mrb[0].mxu0
    %v930 = vadd.f32 0.0, %v929
    %v931 = vpop.f32.mrb[0].mxu0
    %932 = vdwg.mxu0
    %v934 = vsel %vm289, %v704, 0
    %v937 = vsel %vm289, %v779, 0
    %939 = vmatprep.subr.mxu0 0.0
    %940 = vmatpush1.xpose.msra.mxu0 %v937
    %941 = vmatprep.subr.mxu0 0.0
    %942 = vmatpush1.xpose.msra.mxu0 0.0
    %943 = vmatprep.subr.mxu0 0.0
    %944 = vmatpush1.xpose.msra.mxu0 0.0
    %945 = vmatprep.subr.mxu0 0.0
    %946 = vmatpush1.xpose.msra.mxu0 0.0
    %947 = vmatprep.subr.mxu0 0.0
    %948 = vmatpush1.xpose.msra.mxu0 0.0
    %949 = vmatprep.subr.mxu0 0.0
    %950 = vmatpush1.xpose.msra.mxu0 0.0
    %951 = vmatprep.subr.mxu0 0.0
    %952 = vmatpush1.xpose.msra.mxu0 0.0
    %953 = vmatprep.subr.mxu0 0.0
    %954 = vmatpush1.xpose.msra.mxu0 0.0
    %955 = vmatprep.subr.mxu0 0.0
    %956 = vmatpush1.xpose.msra.mxu0 0.0
    %957 = vmatprep.subr.mxu0 0.0
    %958 = vmatpush1.xpose.msra.mxu0 0.0
    %959 = vmatprep.subr.mxu0 0.0
    %960 = vmatpush1.xpose.msra.mxu0 0.0
    %961 = vmatprep.subr.mxu0 0.0
    %962 = vmatpush1.xpose.msra.mxu0 0.0
    %963 = vmatprep.subr.mxu0 0.0
    %964 = vmatpush1.xpose.msra.mxu0 0.0
    %965 = vmatprep.subr.mxu0 0.0
    %966 = vmatpush1.xpose.msra.mxu0 0.0
    %967 = vmatprep.subr.mxu0 0.0
    %968 = vmatpush1.xpose.msra.mxu0 0.0
    %969 = vmatprep.subr.mxu0 0.0
    %970 = vmatpush1.xpose.msra.mxu0 0.0
    %971 = vmatprep.subr.mxu0 0.0
    %972 = vmatpush1.xpose.msra.mxu0 0.0
    %973 = vmatprep.subr.mxu0 0.0
    %974 = vmatpush1.xpose.msra.mxu0 0.0
    %975 = vmatprep.subr.mxu0 0.0
    %976 = vmatpush1.xpose.msra.mxu0 0.0
    %977 = vmatprep.subr.mxu0 0.0
    %978 = vmatpush1.xpose.msra.mxu0 0.0
    %979 = vmatprep.subr.mxu0 0.0
    %980 = vmatpush1.xpose.msra.mxu0 0.0
    %981 = vmatprep.subr.mxu0 0.0
    %982 = vmatpush1.xpose.msra.mxu0 0.0
    %983 = vmatprep.subr.mxu0 0.0
    %984 = vmatpush1.xpose.msra.mxu0 0.0
    %985 = vmatprep.subr.mxu0 0.0
    %986 = vmatpush1.xpose.msra.mxu0 0.0
    %987 = vmatprep.subr.mxu0 0.0
    %988 = vmatpush1.xpose.msra.mxu0 0.0
    %989 = vmatprep.subr.mxu0 0.0
    %990 = vmatpush1.xpose.msra.mxu0 0.0
    %991 = vmatprep.subr.mxu0 0.0
    %992 = vmatpush1.xpose.msra.mxu0 0.0
    %993 = vmatprep.subr.mxu0 0.0
    %994 = vmatpush1.xpose.msra.mxu0 0.0
    %995 = vmatprep.subr.mxu0 0.0
    %996 = vmatpush1.xpose.msra.mxu0 0.0
    %997 = vmatprep.subr.mxu0 0.0
    %998 = vmatpush1.xpose.msra.mxu0 0.0
    %999 = vmatprep.subr.mxu0 0.0
    %1000 = vmatpush1.xpose.msra.mxu0 0.0
    %1001 = vmatprep.subr.mxu0 0.0
    %1002 = vmatpush1.xpose.msra.mxu0 0.0
    %1003 = vmatprep.mubr.f32.mxu0 0.0
    %1004 = vmatmul.mubr.f32.gmra.mrb[0].mxu0 %v934
    %v1005 = vpop.f32.mrb[0].mxu0
    %v1006 = vadd.f32 0.0, %v1005
    %v1007 = vpop.f32.mrb[0].mxu0
    %1008 = vdwg.mxu0
    %v1009 = vmul.f32 %v930, 0.25
    %v1010 = vmul.f32 %v1006, 0.25
    %v1011 = vadd.f32 %v1009, %v41
    %v1012 = vadd.f32 %v1010, %v42
    %v1013 = vsel %vm446, %v1011, -inf
    %1014 = vmax.xlane.f32.xlu0 %v1013
    %v1015 = vpop.xlane.xlu0 %1014
    %v1016 = vsel %vm446, %v1012, -inf
    %1017 = vmax.xlane.f32.xlu0 %v1016
    %v1018 = vpop.xlane.xlu0 %1017
    %v1019 = vsub.f32 %v1011, %v1015
    %v1020 = vsub.f32 %v1012, %v1018
    %v1021 = vmul.f32 %v1019, 1.442695
    %v1022 = vpow.pop %v1021
    %v1023 = vmul.f32 %v1020, 1.442695
    %v1024 = vpow.pop %v1023
    %v1025 = vsel %vm446, %v1022, 0.0
    %1026 = vadd.xlane.f32.xlu0 %v1025
    %v1027 = vpop.xlane.xlu0 %1026
    %v1028 = vsel %vm446, %v1024, 0.0
    %1029 = vadd.xlane.f32.xlu0 %v1028
    %v1030 = vpop.xlane.xlu0 %1029
    %v1031 = vrcp.pop %v1027
    %v1032 = vrcp.pop %v1030
    %v1033 = vmul.f32 %v1022, %v1031
    %v1034 = vmul.f32 %v1024, %v1032
    %v1036 = vsel %vm446, %v1033, 0
    %1038 = vmatprep.subr.mxu0 0.0
    %1039 = vmatpush1.msra.mxu0 %v849
    %1040 = vmatprep.subr.mxu0 0.0
    %1041 = vmatpush1.msra.mxu0 0.0
    %1042 = vmatprep.subr.mxu0 0.0
    %1043 = vmatpush1.msra.mxu0 0.0
    %1044 = vmatprep.subr.mxu0 0.0
    %1045 = vmatpush1.msra.mxu0 0.0
    %1046 = vmatprep.subr.mxu0 0.0
    %1047 = vmatpush1.msra.mxu0 0.0
    %1048 = vmatprep.subr.mxu0 0.0
    %1049 = vmatpush1.msra.mxu0 0.0
    %1050 = vmatprep.subr.mxu0 0.0
    %1051 = vmatpush1.msra.mxu0 0.0
    %1052 = vmatprep.subr.mxu0 0.0
    %1053 = vmatpush1.msra.mxu0 0.0
    %1054 = vmatprep.subr.mxu0 0.0
    %1055 = vmatpush1.msra.mxu0 0.0
    %1056 = vmatprep.subr.mxu0 0.0
    %1057 = vmatpush1.msra.mxu0 0.0
    %1058 = vmatprep.subr.mxu0 0.0
    %1059 = vmatpush1.msra.mxu0 0.0
    %1060 = vmatprep.subr.mxu0 0.0
    %1061 = vmatpush1.msra.mxu0 0.0
    %1062 = vmatprep.subr.mxu0 0.0
    %1063 = vmatpush1.msra.mxu0 0.0
    %1064 = vmatprep.subr.mxu0 0.0
    %1065 = vmatpush1.msra.mxu0 0.0
    %1066 = vmatprep.subr.mxu0 0.0
    %1067 = vmatpush1.msra.mxu0 0.0
    %1068 = vmatprep.subr.mxu0 0.0
    %1069 = vmatpush1.msra.mxu0 0.0
    %1070 = vmatprep.subr.mxu0 0.0
    %1071 = vmatpush1.msra.mxu0 0.0
    %1072 = vmatprep.subr.mxu0 0.0
    %1073 = vmatpush1.msra.mxu0 0.0
    %1074 = vmatprep.subr.mxu0 0.0
    %1075 = vmatpush1.msra.mxu0 0.0
    %1076 = vmatprep.subr.mxu0 0.0
    %1077 = vmatpush1.msra.mxu0 0.0
    %1078 = vmatprep.subr.mxu0 0.0
    %1079 = vmatpush1.msra.mxu0 0.0
    %1080 = vmatprep.subr.mxu0 0.0
    %1081 = vmatpush1.msra.mxu0 0.0
    %1082 = vmatprep.subr.mxu0 0.0
    %1083 = vmatpush1.msra.mxu0 0.0
    %1084 = vmatprep.subr.mxu0 0.0
    %1085 = vmatpush1.msra.mxu0 0.0
    %1086 = vmatprep.subr.mxu0 0.0
    %1087 = vmatpush1.msra.mxu0 0.0
    %1088 = vmatprep.subr.mxu0 0.0
    %1089 = vmatpush1.msra.mxu0 0.0
    %1090 = vmatprep.subr.mxu0 0.0
    %1091 = vmatpush1.msra.mxu0 0.0
    %1092 = vmatprep.subr.mxu0 0.0
    %1093 = vmatpush1.msra.mxu0 0.0
    %1094 = vmatprep.subr.mxu0 0.0
    %1095 = vmatpush1.msra.mxu0 0.0
    %1096 = vmatprep.subr.mxu0 0.0
    %1097 = vmatpush1.msra.mxu0 0.0
    %1098 = vmatprep.subr.mxu0 0.0
    %1099 = vmatpush1.msra.mxu0 0.0
    %1100 = vmatprep.subr.mxu0 0.0
    %1101 = vmatpush1.msra.mxu0 0.0
    %1102 = vmatprep.mubr.f32.mxu0 0.0
    %1103 = vmatmul.mubr.f32.gmra.mrb[0].mxu0 %v1036
    %v1104 = vpop.f32.mrb[0].mxu0
    %v1105 = vadd.f32 0.0, %v1104
    %v1106 = vpop.f32.mrb[0].mxu0
    %1107 = vdwg.mxu0
    %v1109 = vsel %vm446, %v1034, 0
    %1111 = vmatprep.subr.mxu0 0.0
    %1112 = vmatpush1.msra.mxu0 %v854
    %1113 = vmatprep.subr.mxu0 0.0
    %1114 = vmatpush1.msra.mxu0 0.0
    %1115 = vmatprep.subr.mxu0 0.0
    %1116 = vmatpush1.msra.mxu0 0.0
    %1117 = vmatprep.subr.mxu0 0.0
    %1118 = vmatpush1.msra.mxu0 0.0
    %1119 = vmatprep.subr.mxu0 0.0
    %1120 = vmatpush1.msra.mxu0 0.0
    %1121 = vmatprep.subr.mxu0 0.0
    %1122 = vmatpush1.msra.mxu0 0.0
    %1123 = vmatprep.subr.mxu0 0.0
    %1124 = vmatpush1.msra.mxu0 0.0
    %1125 = vmatprep.subr.mxu0 0.0
    %1126 = vmatpush1.msra.mxu0 0.0
    %1127 = vmatprep.subr.mxu0 0.0
    %1128 = vmatpush1.msra.mxu0 0.0
    %1129 = vmatprep.subr.mxu0 0.0
    %1130 = vmatpush1.msra.mxu0 0.0
    %1131 = vmatprep.subr.mxu0 0.0
    %1132 = vmatpush1.msra.mxu0 0.0
    %1133 = vmatprep.subr.mxu0 0.0
    %1134 = vmatpush1.msra.mxu0 0.0
    %1135 = vmatprep.subr.mxu0 0.0
    %1136 = vmatpush1.msra.mxu0 0.0
    %1137 = vmatprep.subr.mxu0 0.0
    %1138 = vmatpush1.msra.mxu0 0.0
    %1139 = vmatprep.subr.mxu0 0.0
    %1140 = vmatpush1.msra.mxu0 0.0
    %1141 = vmatprep.subr.mxu0 0.0
    %1142 = vmatpush1.msra.mxu0 0.0
    %1143 = vmatprep.subr.mxu0 0.0
    %1144 = vmatpush1.msra.mxu0 0.0
    %1145 = vmatprep.subr.mxu0 0.0
    %1146 = vmatpush1.msra.mxu0 0.0
    %1147 = vmatprep.subr.mxu0 0.0
    %1148 = vmatpush1.msra.mxu0 0.0
    %1149 = vmatprep.subr.mxu0 0.0
    %1150 = vmatpush1.msra.mxu0 0.0
    %1151 = vmatprep.subr.mxu0 0.0
    %1152 = vmatpush1.msra.mxu0 0.0
    %1153 = vmatprep.subr.mxu0 0.0
    %1154 = vmatpush1.msra.mxu0 0.0
    %1155 = vmatprep.subr.mxu0 0.0
    %1156 = vmatpush1.msra.mxu0 0.0
    %1157 = vmatprep.subr.mxu0 0.0
    %1158 = vmatpush1.msra.mxu0 0.0
    %1159 = vmatprep.subr.mxu0 0.0
    %1160 = vmatpush1.msra.mxu0 0.0
    %1161 = vmatprep.subr.mxu0 0.0
    %1162 = vmatpush1.msra.mxu0 0.0
    %1163 = vmatprep.subr.mxu0 0.0
    %1164 = vmatpush1.msra.mxu0 0.0
    %1165 = vmatprep.subr.mxu0 0.0
    %1166 = vmatpush1.msra.mxu0 0.0
    %1167 = vmatprep.subr.mxu0 0.0
    %1168 = vmatpush1.msra.mxu0 0.0
    %1169 = vmatprep.subr.mxu0 0.0
    %1170 = vmatpush1.msra.mxu0 0.0
    %1171 = vmatprep.subr.mxu0 0.0
    %1172 = vmatpush1.msra.mxu0 0.0
    %1173 = vmatprep.subr.mxu0 0.0
    %1174 = vmatpush1.msra.mxu0 0.0
    %1175 = vmatprep.mubr.f32.mxu0 0.0
    %1176 = vmatmul.mubr.f32.gmra.mrb[0].mxu0 %v1109
    %v1177 = vpop.f32.mrb[0].mxu0
    %v1178 = vadd.f32 0.0, %v1177
    %v1179 = vpop.f32.mrb[0].mxu0
    %1180 = vdwg.mxu0
    %s1181 = scalar_lea.vmem %s3, 16
    %v1182 = vld [vmem:[%s1181] sm:$0xff]
    %v1183 = vld [vmem:[%s1181 + $0x8] sm:$0xff]
    %v1185 = vsel %vm289, %v1105, 0
    %v1188 = vsel %vm289, %v1178, 0
    %1190 = vmatprep.subr.mxu0 0.0
    %1191 = vmatpush1.msra.mxu0 %v1182
    %1192 = vmatprep.subr.mxu0 0.0
    %1193 = vmatpush1.msra.mxu0 %v1183
    %1194 = vmatprep.subr.mxu0 0.0
    %1195 = vmatpush1.msra.mxu0 0.0
    %1196 = vmatprep.subr.mxu0 0.0
    %1197 = vmatpush1.msra.mxu0 0.0
    %1198 = vmatprep.subr.mxu0 0.0
    %1199 = vmatpush1.msra.mxu0 0.0
    %1200 = vmatprep.subr.mxu0 0.0
    %1201 = vmatpush1.msra.mxu0 0.0
    %1202 = vmatprep.subr.mxu0 0.0
    %1203 = vmatpush1.msra.mxu0 0.0
    %1204 = vmatprep.subr.mxu0 0.0
    %1205 = vmatpush1.msra.mxu0 0.0
    %1206 = vmatprep.subr.mxu0 0.0
    %1207 = vmatpush1.msra.mxu0 0.0
    %1208 = vmatprep.subr.mxu0 0.0
    %1209 = vmatpush1.msra.mxu0 0.0
    %1210 = vmatprep.subr.mxu0 0.0
    %1211 = vmatpush1.msra.mxu0 0.0
    %1212 = vmatprep.subr.mxu0 0.0
    %1213 = vmatpush1.msra.mxu0 0.0
    %1214 = vmatprep.subr.mxu0 0.0
    %1215 = vmatpush1.msra.mxu0 0.0
    %1216 = vmatprep.subr.mxu0 0.0
    %1217 = vmatpush1.msra.mxu0 0.0
    %1218 = vmatprep.subr.mxu0 0.0
    %1219 = vmatpush1.msra.mxu0 0.0
    %1220 = vmatprep.subr.mxu0 0.0
    %1221 = vmatpush1.msra.mxu0 0.0
    %1222 = vmatprep.subr.mxu0 0.0
    %1223 = vmatpush1.msra.mxu0 0.0
    %1224 = vmatprep.subr.mxu0 0.0
    %1225 = vmatpush1.msra.mxu0 0.0
    %1226 = vmatprep.subr.mxu0 0.0
    %1227 = vmatpush1.msra.mxu0 0.0
    %1228 = vmatprep.subr.mxu0 0.0
    %1229 = vmatpush1.msra.mxu0 0.0
    %1230 = vmatprep.subr.mxu0 0.0
    %1231 = vmatpush1.msra.mxu0 0.0
    %1232 = vmatprep.subr.mxu0 0.0
    %1233 = vmatpush1.msra.mxu0 0.0
    %1234 = vmatprep.subr.mxu0 0.0
    %1235 = vmatpush1.msra.mxu0 0.0
    %1236 = vmatprep.subr.mxu0 0.0
    %1237 = vmatpush1.msra.mxu0 0.0
    %1238 = vmatprep.subr.mxu0 0.0
    %1239 = vmatpush1.msra.mxu0 0.0
    %1240 = vmatprep.subr.mxu0 0.0
    %1241 = vmatpush1.msra.mxu0 0.0
    %1242 = vmatprep.subr.mxu0 0.0
    %1243 = vmatpush1.msra.mxu0 0.0
    %1244 = vmatprep.subr.mxu0 0.0
    %1245 = vmatpush1.msra.mxu0 0.0
    %1246 = vmatprep.subr.mxu0 0.0
    %1247 = vmatpush1.msra.mxu0 0.0
    %1248 = vmatprep.subr.mxu0 0.0
    %1249 = vmatpush1.msra.mxu0 0.0
    %1250 = vmatprep.subr.mxu0 0.0
    %1251 = vmatpush1.msra.mxu0 0.0
    %1252 = vmatprep.subr.mxu0 0.0
    %1253 = vmatpush1.msra.mxu0 0.0
    %1254 = vmatprep.mubr.f32.mxu0 0.0
    %1255 = vmatmul.mubr.f32.gmra.mrb[0].mxu0 %v1185
    %v1256 = vpop.f32.mrb[0].mxu0
    %v1257 = vadd.f32 0.0, %v1256
    %v1258 = vpop.f32.mrb[0].mxu0
    %1259 = vmatprep.mubr.f32.mxu0 0.0
    %1260 = vmatmul.mubr.f32.gmra.mrb[0].mxu0 %v1188
    %v1261 = vpop.f32.mrb[0].mxu0
    %v1262 = vadd.f32 0.0, %v1261
    %v1263 = vpop.f32.mrb[0].mxu0
    %1264 = vdwg.mxu0
    %v1266 = vsel %vm289, %v539, 0
    %v1269 = vsel %vm289, %v612, 0
    %1271 = vmatprep.subr.mxu0 0.0
    %1272 = vmatpush1.msra.mxu0 %v615
    %1273 = vmatprep.subr.mxu0 0.0
    %1274 = vmatpush1.msra.mxu0 %v616
    %1275 = vmatprep.subr.mxu0 0.0
    %1276 = vmatpush1.msra.mxu0 0.0
    %1277 = vmatprep.subr.mxu0 0.0
    %1278 = vmatpush1.msra.mxu0 0.0
    %1279 = vmatprep.subr.mxu0 0.0
    %1280 = vmatpush1.msra.mxu0 0.0
    %1281 = vmatprep.subr.mxu0 0.0
    %1282 = vmatpush1.msra.mxu0 0.0
    %1283 = vmatprep.subr.mxu0 0.0
    %1284 = vmatpush1.msra.mxu0 0.0
    %1285 = vmatprep.subr.mxu0 0.0
    %1286 = vmatpush1.msra.mxu0 0.0
    %1287 = vmatprep.subr.mxu0 0.0
    %1288 = vmatpush1.msra.mxu0 0.0
    %1289 = vmatprep.subr.mxu0 0.0
    %1290 = vmatpush1.msra.mxu0 0.0
    %1291 = vmatprep.subr.mxu0 0.0
    %1292 = vmatpush1.msra.mxu0 0.0
    %1293 = vmatprep.subr.mxu0 0.0
    %1294 = vmatpush1.msra.mxu0 0.0
    %1295 = vmatprep.subr.mxu0 0.0
    %1296 = vmatpush1.msra.mxu0 0.0
    %1297 = vmatprep.subr.mxu0 0.0
    %1298 = vmatpush1.msra.mxu0 0.0
    %1299 = vmatprep.subr.mxu0 0.0
    %1300 = vmatpush1.msra.mxu0 0.0
    %1301 = vmatprep.subr.mxu0 0.0
    %1302 = vmatpush1.msra.mxu0 0.0
    %1303 = vmatprep.subr.mxu0 0.0
    %1304 = vmatpush1.msra.mxu0 0.0
    %1305 = vmatprep.subr.mxu0 0.0
    %1306 = vmatpush1.msra.mxu0 0.0
    %1307 = vmatprep.subr.mxu0 0.0
    %1308 = vmatpush1.msra.mxu0 0.0
    %1309 = vmatprep.subr.mxu0 0.0
    %1310 = vmatpush1.msra.mxu0 0.0
    %1311 = vmatprep.subr.mxu0 0.0
    %1312 = vmatpush1.msra.mxu0 0.0
    %1313 = vmatprep.subr.mxu0 0.0
    %1314 = vmatpush1.msra.mxu0 0.0
    %1315 = vmatprep.subr.mxu0 0.0
    %1316 = vmatpush1.msra.mxu0 0.0
    %1317 = vmatprep.subr.mxu0 0.0
    %1318 = vmatpush1.msra.mxu0 0.0
    %1319 = vmatprep.subr.mxu0 0.0
    %1320 = vmatpush1.msra.mxu0 0.0
    %1321 = vmatprep.subr.mxu0 0.0
    %1322 = vmatpush1.msra.mxu0 0.0
    %1323 = vmatprep.subr.mxu0 0.0
    %1324 = vmatpush1.msra.mxu0 0.0
    %1325 = vmatprep.subr.mxu0 0.0
    %1326 = vmatpush1.msra.mxu0 0.0
    %1327 = vmatprep.subr.mxu0 0.0
    %1328 = vmatpush1.msra.mxu0 0.0
    %1329 = vmatprep.subr.mxu0 0.0
    %1330 = vmatpush1.msra.mxu0 0.0
    %1331 = vmatprep.subr.mxu0 0.0
    %1332 = vmatpush1.msra.mxu0 0.0
    %1333 = vmatprep.subr.mxu0 0.0
    %1334 = vmatpush1.msra.mxu0 0.0
    %1335 = vmatprep.mubr.f32.mxu0 0.0
    %1336 = vmatmul.mubr.f32.gmra.mrb[0].mxu0 %v1266
    %v1337 = vpop.f32.mrb[0].mxu0
    %v1338 = vadd.f32 %v1257, %v1337
    %v1339 = vpop.f32.mrb[0].mxu0
    %1340 = vmatprep.mubr.f32.mxu0 0.0
    %1341 = vmatmul.mubr.f32.gmra.mrb[0].mxu0 %v1269
    %v1342 = vpop.f32.mrb[0].mxu0
    %v1343 = vadd.f32 %v1262, %v1342
    %v1344 = vpop.f32.mrb[0].mxu0
    %1345 = vdwg.mxu0
    %v1346 = vadd.f32 %v1338, %v39
    %v1347 = vadd.f32 %v1343, %v40
    %v1348 = vld [vmem:[%s4] sm:$0x1]
    %v1349 = vld [vmem:[%s5] sm:$0x1]
    %v1350 = vsel %vm57, %v1346, 0.0
    %1351 = vadd.xlane.f32.xlu0 %v1350
    %v1352 = vpop.xlane.xlu0 %1351
    %v1353 = vsel %vm57, %v1347, 0.0
    %1354 = vadd.xlane.f32.xlu0 %v1353
    %v1355 = vpop.xlane.xlu0 %1354
    %v1356 = vrcp.pop 32.0
    %v1357 = vmul.f32 %v1352, %v1356
    %v1358 = vmul.f32 %v1355, %v1356
    %v1359 = vsub.f32 %v1346, %v1357
    %v1360 = vsub.f32 %v1347, %v1358
    %v1361 = vmul.f32 %v1359, %v1359
    %v1362 = vmul.f32 %v1360, %v1360
    %v1363 = vsel %vm57, %v1361, 0.0
    %1364 = vadd.xlane.f32.xlu0 %v1363
    %v1365 = vpop.xlane.xlu0 %1364
    %v1366 = vsel %vm57, %v1362, 0.0
    %1367 = vadd.xlane.f32.xlu0 %v1366
    %v1368 = vpop.xlane.xlu0 %1367
    %v1369 = vmul.f32 %v1365, %v1356
    %v1370 = vmul.f32 %v1368, %v1356
    %v1371 = vadd.f32 %v1369, 1e-05
    %v1372 = vadd.f32 %v1370, 1e-05
    %v1373 = vrsqrt.pop %v1371
    %v1374 = vrsqrt.pop %v1372
    %v1375 = vmul.f32 %v1359, %v1373
    %v1376 = vmul.f32 %v1360, %v1374
    %v1378 = vlaneseq
    %v1379 = vshrl.u32 %v1378, 7
    %v1380 = vsub.s32 0, %v1379
    %v1381 = vrot.slane %v1348, %v1380
    %v1383 = vmul.f32 %v1375, %v1381
    %v1384 = vmul.f32 %v1376, %v1381
    %v1386 = vlaneseq
    %v1387 = vshrl.u32 %v1386, 7
    %v1388 = vsub.s32 0, %v1387
    %v1389 = vrot.slane %v1349, %v1388
    %v1391 = vadd.f32 %v1383, %v1389
    %v1392 = vadd.f32 %v1384, %v1389
    %v1393 = vld [vmem:[%s6] sm:$0xff]
    %v1394 = vld [vmem:[%s6 + $0x8] sm:$0xff]
    %v1395 = vld [vmem:[%s6 + $0x10] sm:$0xff]
    %v1396 = vld [vmem:[%s6 + $0x18] sm:$0xff]
    %v1398 = vsel %vm57, %v1391, 0
    %v1401 = vsel %vm57, %v1392, 0
    %1403 = vmatprep.subr.mxu0 0.0
    %1404 = vmatpush1.msra.mxu0 %v1393
    %1405 = vmatprep.subr.mxu0 0.0
    %1406 = vmatpush1.msra.mxu0 %v1394
    %1407 = vmatprep.subr.mxu0 0.0
    %1408 = vmatpush1.msra.mxu0 %v1395
    %1409 = vmatprep.subr.mxu0 0.0
    %1410 = vmatpush1.msra.mxu0 %v1396
    %1411 = vmatprep.subr.mxu0 0.0
    %1412 = vmatpush1.msra.mxu0 0.0
    %1413 = vmatprep.subr.mxu0 0.0
    %1414 = vmatpush1.msra.mxu0 0.0
    %1415 = vmatprep.subr.mxu0 0.0
    %1416 = vmatpush1.msra.mxu0 0.0
    %1417 = vmatprep.subr.mxu0 0.0
    %1418 = vmatpush1.msra.mxu0 0.0
    %1419 = vmatprep.subr.mxu0 0.0
    %1420 = vmatpush1.msra.mxu0 0.0
    %1421 = vmatprep.subr.mxu0 0.0
    %1422 = vmatpush1.msra.mxu0 0.0
    %1423 = vmatprep.subr.mxu0 0.0
    %1424 = vmatpush1.msra.mxu0 0.0
    %1425 = vmatprep.subr.mxu0 0.0
    %1426 = vmatpush1.msra.mxu0 0.0
    %1427 = vmatprep.subr.mxu0 0.0
    %1428 = vmatpush1.msra.mxu0 0.0
    %1429 = vmatprep.subr.mxu0 0.0
    %1430 = vmatpush1.msra.mxu0 0.0
    %1431 = vmatprep.subr.mxu0 0.0
    %1432 = vmatpush1.msra.mxu0 0.0
    %1433 = vmatprep.subr.mxu0 0.0
    %1434 = vmatpush1.msra.mxu0 0.0
    %1435 = vmatprep.subr.mxu0 0.0
    %1436 = vmatpush1.msra.mxu0 0.0
    %1437 = vmatprep.subr.mxu0 0.0
    %1438 = vmatpush1.msra.mxu0 0.0
    %1439 = vmatprep.subr.mxu0 0.0
    %1440 = vmatpush1.msra.mxu0 0.0
    %1441 = vmatprep.subr.mxu0 0.0
    %1442 = vmatpush1.msra.mxu0 0.0
    %1443 = vmatprep.subr.mxu0 0.0
    %1444 = vmatpush1.msra.mxu0 0.0
    %1445 = vmatprep.subr.mxu0 0.0
    %1446 = vmatpush1.msra.mxu0 0.0
    %1447 = vmatprep.subr.mxu0 0.0
    %1448 = vmatpush1.msra.mxu0 0.0
    %1449 = vmatprep.subr.mxu0 0.0
    %1450 = vmatpush1.msra.mxu0 0.0
    %1451 = vmatprep.subr.mxu0 0.0
    %1452 = vmatpush1.msra.mxu0 0.0
    %1453 = vmatprep.subr.mxu0 0.0
    %1454 = vmatpush1.msra.mxu0 0.0
    %1455 = vmatprep.subr.mxu0 0.0
    %1456 = vmatpush1.msra.mxu0 0.0
    %1457 = vmatprep.subr.mxu0 0.0
    %1458 = vmatpush1.msra.mxu0 0.0
    %1459 = vmatprep.subr.mxu0 0.0
    %1460 = vmatpush1.msra.mxu0 0.0
    %1461 = vmatprep.subr.mxu0 0.0
    %1462 = vmatpush1.msra.mxu0 0.0
    %1463 = vmatprep.subr.mxu0 0.0
    %1464 = vmatpush1.msra.mxu0 0.0
    %1465 = vmatprep.subr.mxu0 0.0
    %1466 = vmatpush1.msra.mxu0 0.0
    %1467 = vmatprep.mubr.f32.mxu0 0.0
    %1468 = vmatmul.mubr.f32.gmra.mrb[0].mxu0 %v1398
    %v1469 = vpop.f32.mrb[0].mxu0
    %v1470 = vadd.f32 0.0, %v1469
    %v1471 = vpop.f32.mrb[0].mxu0
    %1472 = vmatprep.mubr.f32.mxu0 0.0
    %1473 = vmatmul.mubr.f32.gmra.mrb[0].mxu0 %v1401
    %v1474 = vpop.f32.mrb[0].mxu0
    %v1475 = vadd.f32 0.0, %v1474
    %v1476 = vpop.f32.mrb[0].mxu0
    %1477 = vdwg.mxu0
    %v1478 = vmax.f32 %v1470, 0.0
    %v1479 = vmax.f32 %v1475, 0.0
    %v1480 = vld [vmem:[%s7] sm:$0xff]
    %v1481 = vld [vmem:[%s7 + $0x8] sm:$0xff]
    %v1482 = vld [vmem:[%s7 + $0x10] sm:$0xff]
    %v1483 = vld [vmem:[%s7 + $0x18] sm:$0xff]
    %v1484 = vld [vmem:[%s7 + $0x20] sm:$0xff]
    %v1485 = vld [vmem:[%s7 + $0x28] sm:$0xff]
    %v1486 = vld [vmem:[%s7 + $0x30] sm:$0xff]
    %v1487 = vld [vmem:[%s7 + $0x38] sm:$0xff]
    %vm1488 = vcmask 523264
    %v1490 = vsel %vm1488, %v1478, 0
    %v1493 = vsel %vm1488, %v1479, 0
    %1495 = vmatprep.subr.mxu0 0.0
    %1496 = vmatpush1.msra.mxu0 %v1480
    %1497 = vmatprep.subr.mxu0 0.0
    %1498 = vmatpush1.msra.mxu0 %v1481
    %1499 = vmatprep.subr.mxu0 0.0
    %1500 = vmatpush1.msra.mxu0 %v1482
    %1501 = vmatprep.subr.mxu0 0.0
    %1502 = vmatpush1.msra.mxu0 %v1483
    %1503 = vmatprep.subr.mxu0 0.0
    %1504 = vmatpush1.msra.mxu0 %v1484
    %1505 = vmatprep.subr.mxu0 0.0
    %1506 = vmatpush1.msra.mxu0 %v1485
    %1507 = vmatprep.subr.mxu0 0.0
    %1508 = vmatpush1.msra.mxu0 %v1486
    %1509 = vmatprep.subr.mxu0 0.0
    %1510 = vmatpush1.msra.mxu0 %v1487
    %1511 = vmatprep.subr.mxu0 0.0
    %1512 = vmatpush1.msra.mxu0 0.0
    %1513 = vmatprep.subr.mxu0 0.0
    %1514 = vmatpush1.msra.mxu0 0.0
    %1515 = vmatprep.subr.mxu0 0.0
    %1516 = vmatpush1.msra.mxu0 0.0
    %1517 = vmatprep.subr.mxu0 0.0
    %1518 = vmatpush1.msra.mxu0 0.0
    %1519 = vmatprep.subr.mxu0 0.0
    %1520 = vmatpush1.msra.mxu0 0.0
    %1521 = vmatprep.subr.mxu0 0.0
    %1522 = vmatpush1.msra.mxu0 0.0
    %1523 = vmatprep.subr.mxu0 0.0
    %1524 = vmatpush1.msra.mxu0 0.0
    %1525 = vmatprep.subr.mxu0 0.0
    %1526 = vmatpush1.msra.mxu0 0.0
    %1527 = vmatprep.subr.mxu0 0.0
    %1528 = vmatpush1.msra.mxu0 0.0
    %1529 = vmatprep.subr.mxu0 0.0
    %1530 = vmatpush1.msra.mxu0 0.0
    %1531 = vmatprep.subr.mxu0 0.0
    %1532 = vmatpush1.msra.mxu0 0.0
    %1533 = vmatprep.subr.mxu0 0.0
    %1534 = vmatpush1.msra.mxu0 0.0
    %1535 = vmatprep.subr.mxu0 0.0
    %1536 = vmatpush1.msra.mxu0 0.0
    %1537 = vmatprep.subr.mxu0 0.0
    %1538 = vmatpush1.msra.mxu0 0.0
    %1539 = vmatprep.subr.mxu0 0.0
    %1540 = vmatpush1.msra.mxu0 0.0
    %1541 = vmatprep.subr.mxu0 0.0
    %1542 = vmatpush1.msra.mxu0 0.0
    %1543 = vmatprep.subr.mxu0 0.0
    %1544 = vmatpush1.msra.mxu0 0.0
    %1545 = vmatprep.subr.mxu0 0.0
    %1546 = vmatpush1.msra.mxu0 0.0
    %1547 = vmatprep.subr.mxu0 0.0
    %1548 = vmatpush1.msra.mxu0 0.0
    %1549 = vmatprep.subr.mxu0 0.0
    %1550 = vmatpush1.msra.mxu0 0.0
    %1551 = vmatprep.subr.mxu0 0.0
    %1552 = vmatpush1.msra.mxu0 0.0
    %1553 = vmatprep.subr.mxu0 0.0
    %1554 = vmatpush1.msra.mxu0 0.0
    %1555 = vmatprep.subr.mxu0 0.0
    %1556 = vmatpush1.msra.mxu0 0.0
    %1557 = vmatprep.subr.mxu0 0.0
    %1558 = vmatpush1.msra.mxu0 0.0
    %1559 = vmatprep.mubr.f32.mxu0 0.0
    %1560 = vmatmul.mubr.f32.gmra.mrb[0].mxu0 %v1490
    %v1561 = vpop.f32.mrb[0].mxu0
    %v1562 = vadd.f32 %v1391, %v1561
    %v1563 = vpop.f32.mrb[0].mxu0
    %1564 = vmatprep.mubr.f32.mxu0 0.0
    %1565 = vmatmul.mubr.f32.gmra.mrb[0].mxu0 %v1493
    %v1566 = vpop.f32.mrb[0].mxu0
    %v1567 = vadd.f32 %v1392, %v1566
    %v1568 = vpop.f32.mrb[0].mxu0
    %1569 = vdwg.mxu0
    %v1570 = vld [vmem:[%s8] sm:$0x1]
    %v1571 = vld [vmem:[%s9] sm:$0x1]
    %v1572 = vsel %vm57, %v1562, 0.0
    %1573 = vadd.xlane.f32.xlu0 %v1572
    %v1574 = vpop.xlane.xlu0 %1573
    %v1575 = vsel %vm57, %v1567, 0.0
    %1576 = vadd.xlane.f32.xlu0 %v1575
    %v1577 = vpop.xlane.xlu0 %1576
    %v1578 = vmul.f32 %v1574, %v1356
    %v1579 = vmul.f32 %v1577, %v1356
    %v1580 = vsub.f32 %v1562, %v1578
    %v1581 = vsub.f32 %v1567, %v1579
    %v1582 = vmul.f32 %v1580, %v1580
    %v1583 = vmul.f32 %v1581, %v1581
    %v1584 = vsel %vm57, %v1582, 0.0
    %1585 = vadd.xlane.f32.xlu0 %v1584
    %v1586 = vpop.xlane.xlu0 %1585
    %v1587 = vsel %vm57, %v1583, 0.0
    %1588 = vadd.xlane.f32.xlu0 %v1587
    %v1589 = vpop.xlane.xlu0 %1588
    %v1590 = vmul.f32 %v1586, %v1356
    %v1591 = vmul.f32 %v1589, %v1356
    %v1592 = vadd.f32 %v1590, 1e-05
    %v1593 = vadd.f32 %v1591, 1e-05
    %v1594 = vrsqrt.pop %v1592
    %v1595 = vrsqrt.pop %v1593
    %v1596 = vmul.f32 %v1580, %v1594
    %v1597 = vmul.f32 %v1581, %v1595
    %v1599 = vlaneseq
    %v1600 = vshrl.u32 %v1599, 7
    %v1601 = vsub.s32 0, %v1600
    %v1602 = vrot.slane %v1570, %v1601
    %v1604 = vmul.f32 %v1596, %v1602
    %v1605 = vmul.f32 %v1597, %v1602
    %v1607 = vlaneseq
    %v1608 = vshrl.u32 %v1607, 7
    %v1609 = vsub.s32 0, %v1608
    %v1610 = vrot.slane %v1571, %v1609
    %v1612 = vadd.f32 %v1604, %v1610
    %v1613 = vadd.f32 %v1605, %v1610
    %s1614 = scalar_lea.vmem %s2, 192
    %v1615 = vld [vmem:[%s1614] sm:$0xff]
    %v1616 = vld [vmem:[%s1614 + $0x8] sm:$0xff]
    %v1617 = vld [vmem:[%s1614 + $0x10] sm:$0xff]
    %v1618 = vld [vmem:[%s1614 + $0x18] sm:$0xff]
    %s1619 = scalar_lea.vmem %s2, 256
    %v1620 = vld [vmem:[%s1619] sm:$0xff]
    %v1621 = vld [vmem:[%s1619 + $0x8] sm:$0xff]
    %v1622 = vld [vmem:[%s1619 + $0x10] sm:$0xff]
    %v1623 = vld [vmem:[%s1619 + $0x18] sm:$0xff]
    %s1624 = scalar_lea.vmem %s2, 320
    %v1625 = vld [vmem:[%s1624] sm:$0xff]
    %v1626 = vld [vmem:[%s1624 + $0x8] sm:$0xff]
    %v1627 = vld [vmem:[%s1624 + $0x10] sm:$0xff]
    %v1628 = vld [vmem:[%s1624 + $0x18] sm:$0xff]
    %v1630 = vsel %vm57, %v1612, 0
    %v1633 = vsel %vm57, %v1613, 0
    %1635 = vmatprep.subr.mxu0 0.0
    %1636 = vmatpush1.msra.mxu0 %v1615
    %1637 = vmatprep.subr.mxu0 0.0
    %1638 = vmatpush1.msra.mxu0 %v1616
    %1639 = vmatprep.subr.mxu0 0.0
    %1640 = vmatpush1.msra.mxu0 %v1617
    %1641 = vmatprep.subr.mxu0 0.0
    %1642 = vmatpush1.msra.mxu0 %v1618
    %1643 = vmatprep.subr.mxu0 0.0
    %1644 = vmatpush1.msra.mxu0 0.0
    %1645 = vmatprep.subr.mxu0 0.0
    %1646 = vmatpush1.msra.mxu0 0.0
    %1647 = vmatprep.subr.mxu0 0.0
    %1648 = vmatpush1.msra.mxu0 0.0
    %1649 = vmatprep.subr.mxu0 0.0
    %1650 = vmatpush1.msra.mxu0 0.0
    %1651 = vmatprep.subr.mxu0 0.0
    %1652 = vmatpush1.msra.mxu0 0.0
    %1653 = vmatprep.subr.mxu0 0.0
    %1654 = vmatpush1.msra.mxu0 0.0
    %1655 = vmatprep.subr.mxu0 0.0
    %1656 = vmatpush1.msra.mxu0 0.0
    %1657 = vmatprep.subr.mxu0 0.0
    %1658 = vmatpush1.msra.mxu0 0.0
    %1659 = vmatprep.subr.mxu0 0.0
    %1660 = vmatpush1.msra.mxu0 0.0
    %1661 = vmatprep.subr.mxu0 0.0
    %1662 = vmatpush1.msra.mxu0 0.0
    %1663 = vmatprep.subr.mxu0 0.0
    %1664 = vmatpush1.msra.mxu0 0.0
    %1665 = vmatprep.subr.mxu0 0.0
    %1666 = vmatpush1.msra.mxu0 0.0
    %1667 = vmatprep.subr.mxu0 0.0
    %1668 = vmatpush1.msra.mxu0 0.0
    %1669 = vmatprep.subr.mxu0 0.0
    %1670 = vmatpush1.msra.mxu0 0.0
    %1671 = vmatprep.subr.mxu0 0.0
    %1672 = vmatpush1.msra.mxu0 0.0
    %1673 = vmatprep.subr.mxu0 0.0
    %1674 = vmatpush1.msra.mxu0 0.0
    %1675 = vmatprep.subr.mxu0 0.0
    %1676 = vmatpush1.msra.mxu0 0.0
    %1677 = vmatprep.subr.mxu0 0.0
    %1678 = vmatpush1.msra.mxu0 0.0
    %1679 = vmatprep.subr.mxu0 0.0
    %1680 = vmatpush1.msra.mxu0 0.0
    %1681 = vmatprep.subr.mxu0 0.0
    %1682 = vmatpush1.msra.mxu0 0.0
    %1683 = vmatprep.subr.mxu0 0.0
    %1684 = vmatpush1.msra.mxu0 0.0
    %1685 = vmatprep.subr.mxu0 0.0
    %1686 = vmatpush1.msra.mxu0 0.0
    %1687 = vmatprep.subr.mxu0 0.0
    %1688 = vmatpush1.msra.mxu0 0.0
    %1689 = vmatprep.subr.mxu0 0.0
    %1690 = vmatpush1.msra.mxu0 0.0
    %1691 = vmatprep.subr.mxu0 0.0
    %1692 = vmatpush1.msra.mxu0 0.0
    %1693 = vmatprep.subr.mxu0 0.0
    %1694 = vmatpush1.msra.mxu0 0.0
    %1695 = vmatprep.subr.mxu0 0.0
    %1696 = vmatpush1.msra.mxu0 0.0
    %1697 = vmatprep.subr.mxu0 0.0
    %1698 = vmatpush1.msra.mxu0 0.0
    %1699 = vmatprep.mubr.f32.mxu0 0.0
    %1700 = vmatmul.mubr.f32.gmra.mrb[0].mxu0 %v1630
    %v1701 = vpop.f32.mrb[0].mxu0
    %v1702 = vadd.f32 0.0, %v1701
    %v1703 = vpop.f32.mrb[0].mxu0
    %1704 = vmatprep.mubr.f32.mxu0 0.0
    %1705 = vmatmul.mubr.f32.gmra.mrb[0].mxu0 %v1633
    %v1706 = vpop.f32.mrb[0].mxu0
    %v1707 = vadd.f32 0.0, %v1706
    %v1708 = vpop.f32.mrb[0].mxu0
    %1709 = vdwg.mxu0
    %1710 = vmatprep.subr.mxu0 0.0
    %1711 = vmatpush1.msra.mxu0 %v1620
    %1712 = vmatprep.subr.mxu0 0.0
    %1713 = vmatpush1.msra.mxu0 %v1621
    %1714 = vmatprep.subr.mxu0 0.0
    %1715 = vmatpush1.msra.mxu0 %v1622
    %1716 = vmatprep.subr.mxu0 0.0
    %1717 = vmatpush1.msra.mxu0 %v1623
    %1718 = vmatprep.subr.mxu0 0.0
    %1719 = vmatpush1.msra.mxu0 0.0
    %1720 = vmatprep.subr.mxu0 0.0
    %1721 = vmatpush1.msra.mxu0 0.0
    %1722 = vmatprep.subr.mxu0 0.0
    %1723 = vmatpush1.msra.mxu0 0.0
    %1724 = vmatprep.subr.mxu0 0.0
    %1725 = vmatpush1.msra.mxu0 0.0
    %1726 = vmatprep.subr.mxu0 0.0
    %1727 = vmatpush1.msra.mxu0 0.0
    %1728 = vmatprep.subr.mxu0 0.0
    %1729 = vmatpush1.msra.mxu0 0.0
    %1730 = vmatprep.subr.mxu0 0.0
    %1731 = vmatpush1.msra.mxu0 0.0
    %1732 = vmatprep.subr.mxu0 0.0
    %1733 = vmatpush1.msra.mxu0 0.0
    %1734 = vmatprep.subr.mxu0 0.0
    %1735 = vmatpush1.msra.mxu0 0.0
    %1736 = vmatprep.subr.mxu0 0.0
    %1737 = vmatpush1.msra.mxu0 0.0
    %1738 = vmatprep.subr.mxu0 0.0
    %1739 = vmatpush1.msra.mxu0 0.0
    %1740 = vmatprep.subr.mxu0 0.0
    %1741 = vmatpush1.msra.mxu0 0.0
    %1742 = vmatprep.subr.mxu0 0.0
    %1743 = vmatpush1.msra.mxu0 0.0
    %1744 = vmatprep.subr.mxu0 0.0
    %1745 = vmatpush1.msra.mxu0 0.0
    %1746 = vmatprep.subr.mxu0 0.0
    %1747 = vmatpush1.msra.mxu0 0.0
    %1748 = vmatprep.subr.mxu0 0.0
    %1749 = vmatpush1.msra.mxu0 0.0
    %1750 = vmatprep.subr.mxu0 0.0
    %1751 = vmatpush1.msra.mxu0 0.0
    %1752 = vmatprep.subr.mxu0 0.0
    %1753 = vmatpush1.msra.mxu0 0.0
    %1754 = vmatprep.subr.mxu0 0.0
    %1755 = vmatpush1.msra.mxu0 0.0
    %1756 = vmatprep.subr.mxu0 0.0
    %1757 = vmatpush1.msra.mxu0 0.0
    %1758 = vmatprep.subr.mxu0 0.0
    %1759 = vmatpush1.msra.mxu0 0.0
    %1760 = vmatprep.subr.mxu0 0.0
    %1761 = vmatpush1.msra.mxu0 0.0
    %1762 = vmatprep.subr.mxu0 0.0
    %1763 = vmatpush1.msra.mxu0 0.0
    %1764 = vmatprep.subr.mxu0 0.0
    %1765 = vmatpush1.msra.mxu0 0.0
    %1766 = vmatprep.subr.mxu0 0.0
    %1767 = vmatpush1.msra.mxu0 0.0
    %1768 = vmatprep.subr.mxu0 0.0
    %1769 = vmatpush1.msra.mxu0 0.0
    %1770 = vmatprep.subr.mxu0 0.0
    %1771 = vmatpush1.msra.mxu0 0.0
    %1772 = vmatprep.subr.mxu0 0.0
    %1773 = vmatpush1.msra.mxu0 0.0
    %1774 = vmatprep.mubr.f32.mxu0 0.0
    %1775 = vmatmul.mubr.f32.gmra.mrb[0].mxu0 %v1630
    %v1776 = vpop.f32.mrb[0].mxu0
    %v1777 = vadd.f32 0.0, %v1776
    %v1778 = vpop.f32.mrb[0].mxu0
    %1779 = vmatprep.mubr.f32.mxu0 0.0
    %1780 = vmatmul.mubr.f32.gmra.mrb[0].mxu0 %v1633
    %v1781 = vpop.f32.mrb[0].mxu0
    %v1782 = vadd.f32 0.0, %v1781
    %v1783 = vpop.f32.mrb[0].mxu0
    %1784 = vdwg.mxu0
    %1785 = vmatprep.subr.mxu0 0.0
    %1786 = vmatpush1.msra.mxu0 %v1625
    %1787 = vmatprep.subr.mxu0 0.0
    %1788 = vmatpush1.msra.mxu0 %v1626
    %1789 = vmatprep.subr.mxu0 0.0
    %1790 = vmatpush1.msra.mxu0 %v1627
    %1791 = vmatprep.subr.mxu0 0.0
    %1792 = vmatpush1.msra.mxu0 %v1628
    %1793 = vmatprep.subr.mxu0 0.0
    %1794 = vmatpush1.msra.mxu0 0.0
    %1795 = vmatprep.subr.mxu0 0.0
    %1796 = vmatpush1.msra.mxu0 0.0
    %1797 = vmatprep.subr.mxu0 0.0
    %1798 = vmatpush1.msra.mxu0 0.0
    %1799 = vmatprep.subr.mxu0 0.0
    %1800 = vmatpush1.msra.mxu0 0.0
    %1801 = vmatprep.subr.mxu0 0.0
    %1802 = vmatpush1.msra.mxu0 0.0
    %1803 = vmatprep.subr.mxu0 0.0
    %1804 = vmatpush1.msra.mxu0 0.0
    %1805 = vmatprep.subr.mxu0 0.0
    %1806 = vmatpush1.msra.mxu0 0.0
    %1807 = vmatprep.subr.mxu0 0.0
    %1808 = vmatpush1.msra.mxu0 0.0
    %1809 = vmatprep.subr.mxu0 0.0
    %1810 = vmatpush1.msra.mxu0 0.0
    %1811 = vmatprep.subr.mxu0 0.0
    %1812 = vmatpush1.msra.mxu0 0.0
    %1813 = vmatprep.subr.mxu0 0.0
    %1814 = vmatpush1.msra.mxu0 0.0
    %1815 = vmatprep.subr.mxu0 0.0
    %1816 = vmatpush1.msra.mxu0 0.0
    %1817 = vmatprep.subr.mxu0 0.0
    %1818 = vmatpush1.msra.mxu0 0.0
    %1819 = vmatprep.subr.mxu0 0.0
    %1820 = vmatpush1.msra.mxu0 0.0
    %1821 = vmatprep.subr.mxu0 0.0
    %1822 = vmatpush1.msra.mxu0 0.0
    %1823 = vmatprep.subr.mxu0 0.0
    %1824 = vmatpush1.msra.mxu0 0.0
    %1825 = vmatprep.subr.mxu0 0.0
    %1826 = vmatpush1.msra.mxu0 0.0
    %1827 = vmatprep.subr.mxu0 0.0
    %1828 = vmatpush1.msra.mxu0 0.0
    %1829 = vmatprep.subr.mxu0 0.0
    %1830 = vmatpush1.msra.mxu0 0.0
    %1831 = vmatprep.subr.mxu0 0.0
    %1832 = vmatpush1.msra.mxu0 0.0
    %1833 = vmatprep.subr.mxu0 0.0
    %1834 = vmatpush1.msra.mxu0 0.0
    %1835 = vmatprep.subr.mxu0 0.0
    %1836 = vmatpush1.msra.mxu0 0.0
    %1837 = vmatprep.subr.mxu0 0.0
    %1838 = vmatpush1.msra.mxu0 0.0
    %1839 = vmatprep.subr.mxu0 0.0
    %1840 = vmatpush1.msra.mxu0 0.0
    %1841 = vmatprep.subr.mxu0 0.0
    %1842 = vmatpush1.msra.mxu0 0.0
    %1843 = vmatprep.subr.mxu0 0.0
    %1844 = vmatpush1.msra.mxu0 0.0
    %1845 = vmatprep.subr.mxu0 0.0
    %1846 = vmatpush1.msra.mxu0 0.0
    %1847 = vmatprep.subr.mxu0 0.0
    %1848 = vmatpush1.msra.mxu0 0.0
    %1849 = vmatprep.mubr.f32.mxu0 0.0
    %1850 = vmatmul.mubr.f32.gmra.mrb[0].mxu0 %v1630
    %v1851 = vpop.f32.mrb[0].mxu0
    %v1852 = vadd.f32 0.0, %v1851
    %v1853 = vpop.f32.mrb[0].mxu0
    %1854 = vmatprep.mubr.f32.mxu0 0.0
    %1855 = vmatmul.mubr.f32.gmra.mrb[0].mxu0 %v1633
    %v1856 = vpop.f32.mrb[0].mxu0
    %v1857 = vadd.f32 0.0, %v1856
    %v1858 = vpop.f32.mrb[0].mxu0
    %1859 = vdwg.mxu0
    %v1861 = vsel %vm289, %v1702, 0
    %v1864 = vsel %vm289, %v1777, 0
    %1866 = vmatprep.subr.mxu0 0.0
    %1867 = vmatpush1.xpose.msra.mxu0 %v1864
    %1868 = vmatprep.subr.mxu0 0.0
    %1869 = vmatpush1.xpose.msra.mxu0 0.0
    %1870 = vmatprep.subr.mxu0 0.0
    %1871 = vmatpush1.xpose.msra.mxu0 0.0
    %1872 = vmatprep.subr.mxu0 0.0
    %1873 = vmatpush1.xpose.msra.mxu0 0.0
    %1874 = vmatprep.subr.mxu0 0.0
    %1875 = vmatpush1.xpose.msra.mxu0 0.0
    %1876 = vmatprep.subr.mxu0 0.0
    %1877 = vmatpush1.xpose.msra.mxu0 0.0
    %1878 = vmatprep.subr.mxu0 0.0
    %1879 = vmatpush1.xpose.msra.mxu0 0.0
    %1880 = vmatprep.subr.mxu0 0.0
    %1881 = vmatpush1.xpose.msra.mxu0 0.0
    %1882 = vmatprep.subr.mxu0 0.0
    %1883 = vmatpush1.xpose.msra.mxu0 0.0
    %1884 = vmatprep.subr.mxu0 0.0
    %1885 = vmatpush1.xpose.msra.mxu0 0.0
    %1886 = vmatprep.subr.mxu0 0.0
    %1887 = vmatpush1.xpose.msra.mxu0 0.0
    %1888 = vmatprep.subr.mxu0 0.0
    %1889 = vmatpush1.xpose.msra.mxu0 0.0
    %1890 = vmatprep.subr.mxu0 0.0
    %1891 = vmatpush1.xpose.msra.mxu0 0.0
    %1892 = vmatprep.subr.mxu0 0.0
    %1893 = vmatpush1.xpose.msra.mxu0 0.0
    %1894 = vmatprep.subr.mxu0 0.0
    %1895 = vmatpush1.xpose.msra.mxu0 0.0
    %1896 = vmatprep.subr.mxu0 0.0
    %1897 = vmatpush1.xpose.msra.mxu0 0.0
    %1898 = vmatprep.subr.mxu0 0.0
    %1899 = vmatpush1.xpose.msra.mxu0 0.0
    %1900 = vmatprep.subr.mxu0 0.0
    %1901 = vmatpush1.xpose.msra.mxu0 0.0
    %1902 = vmatprep.subr.mxu0 0.0
    %1903 = vmatpush1.xpose.msra.mxu0 0.0
    %1904 = vmatprep.subr.mxu0 0.0
    %1905 = vmatpush1.xpose.msra.mxu0 0.0
    %1906 = vmatprep.subr.mxu0 0.0
    %1907 = vmatpush1.xpose.msra.mxu0 0.0
    %1908 = vmatprep.subr.mxu0 0.0
    %1909 = vmatpush1.xpose.msra.mxu0 0.0
    %1910 = vmatprep.subr.mxu0 0.0
    %1911 = vmatpush1.xpose.msra.mxu0 0.0
    %1912 = vmatprep.subr.mxu0 0.0
    %1913 = vmatpush1.xpose.msra.mxu0 0.0
    %1914 = vmatprep.subr.mxu0 0.0
    %1915 = vmatpush1.xpose.msra.mxu0 0.0
    %1916 = vmatprep.subr.mxu0 0.0
    %1917 = vmatpush1.xpose.msra.mxu0 0.0
    %1918 = vmatprep.subr.mxu0 0.0
    %1919 = vmatpush1.xpose.msra.mxu0 0.0
    %1920 = vmatprep.subr.mxu0 0.0
    %1921 = vmatpush1.xpose.msra.mxu0 0.0
    %1922 = vmatprep.subr.mxu0 0.0
    %1923 = vmatpush1.xpose.msra.mxu0 0.0
    %1924 = vmatprep.subr.mxu0 0.0
    %1925 = vmatpush1.xpose.msra.mxu0 0.0
    %1926 = vmatprep.subr.mxu0 0.0
    %1927 = vmatpush1.xpose.msra.mxu0 0.0
    %1928 = vmatprep.subr.mxu0 0.0
    %1929 = vmatpush1.xpose.msra.mxu0 0.0
    %1930 = vmatprep.mubr.f32.mxu0 0.0
    %1931 = vmatmul.mubr.f32.gmra.mrb[0].mxu0 %v1861
    %v1932 = vpop.f32.mrb[0].mxu0
    %v1933 = vadd.f32 0.0, %v1932
    %v1934 = vpop.f32.mrb[0].mxu0
    %1935 = vdwg.mxu0
    %v1937 = vsel %vm289, %v1707, 0
    %v1940 = vsel %vm289, %v1782, 0
    %1942 = vmatprep.subr.mxu0 0.0
    %1943 = vmatpush1.xpose.msra.mxu0 %v1940
    %1944 = vmatprep.subr.mxu0 0.0
    %1945 = vmatpush1.xpose.msra.mxu0 0.0
    %1946 = vmatprep.subr.mxu0 0.0
    %1947 = vmatpush1.xpose.msra.mxu0 0.0
    %1948 = vmatprep.subr.mxu0 0.0
    %1949 = vmatpush1.xpose.msra.mxu0 0.0
    %1950 = vmatprep.subr.mxu0 0.0
    %1951 = vmatpush1.xpose.msra.mxu0 0.0
    %1952 = vmatprep.subr.mxu0 0.0
    %1953 = vmatpush1.xpose.msra.mxu0 0.0
    %1954 = vmatprep.subr.mxu0 0.0
    %1955 = vmatpush1.xpose.msra.mxu0 0.0
    %1956 = vmatprep.subr.mxu0 0.0
    %1957 = vmatpush1.xpose.msra.mxu0 0.0
    %1958 = vmatprep.subr.mxu0 0.0
    %1959 = vmatpush1.xpose.msra.mxu0 0.0
    %1960 = vmatprep.subr.mxu0 0.0
    %1961 = vmatpush1.xpose.msra.mxu0 0.0
    %1962 = vmatprep.subr.mxu0 0.0
    %1963 = vmatpush1.xpose.msra.mxu0 0.0
    %1964 = vmatprep.subr.mxu0 0.0
    %1965 = vmatpush1.xpose.msra.mxu0 0.0
    %1966 = vmatprep.subr.mxu0 0.0
    %1967 = vmatpush1.xpose.msra.mxu0 0.0
    %1968 = vmatprep.subr.mxu0 0.0
    %1969 = vmatpush1.xpose.msra.mxu0 0.0
    %1970 = vmatprep.subr.mxu0 0.0
    %1971 = vmatpush1.xpose.msra.mxu0 0.0
    %1972 = vmatprep.subr.mxu0 0.0
    %1973 = vmatpush1.xpose.msra.mxu0 0.0
    %1974 = vmatprep.subr.mxu0 0.0
    %1975 = vmatpush1.xpose.msra.mxu0 0.0
    %1976 = vmatprep.subr.mxu0 0.0
    %1977 = vmatpush1.xpose.msra.mxu0 0.0
    %1978 = vmatprep.subr.mxu0 0.0
    %1979 = vmatpush1.xpose.msra.mxu0 0.0
    %1980 = vmatprep.subr.mxu0 0.0
    %1981 = vmatpush1.xpose.msra.mxu0 0.0
    %1982 = vmatprep.subr.mxu0 0.0
    %1983 = vmatpush1.xpose.msra.mxu0 0.0
    %1984 = vmatprep.subr.mxu0 0.0
    %1985 = vmatpush1.xpose.msra.mxu0 0.0
    %1986 = vmatprep.subr.mxu0 0.0
    %1987 = vmatpush1.xpose.msra.mxu0 0.0
    %1988 = vmatprep.subr.mxu0 0.0
    %1989 = vmatpush1.xpose.msra.mxu0 0.0
    %1990 = vmatprep.subr.mxu0 0.0
    %1991 = vmatpush1.xpose.msra.mxu0 0.0
    %1992 = vmatprep.subr.mxu0 0.0
    %1993 = vmatpush1.xpose.msra.mxu0 0.0
    %1994 = vmatprep.subr.mxu0 0.0
    %1995 = vmatpush1.xpose.msra.mxu0 0.0
    %1996 = vmatprep.subr.mxu0 0.0
    %1997 = vmatpush1.xpose.msra.mxu0 0.0
    %1998 = vmatprep.subr.mxu0 0.0
    %1999 = vmatpush1.xpose.msra.mxu0 0.0
    %2000 = vmatprep.subr.mxu0 0.0
    %2001 = vmatpush1.xpose.msra.mxu0 0.0
    %2002 = vmatprep.subr.mxu0 0.0
    %2003 = vmatpush1.xpose.msra.mxu0 0.0
    %2004 = vmatprep.subr.mxu0 0.0
    %2005 = vmatpush1.xpose.msra.mxu0 0.0
    %2006 = vmatprep.mubr.f32.mxu0 0.0
    %2007 = vmatmul.mubr.f32.gmra.mrb[0].mxu0 %v1937
    %v2008 = vpop.f32.mrb[0].mxu0
    %v2009 = vadd.f32 0.0, %v2008
    %v2010 = vpop.f32.mrb[0].mxu0
    %2011 = vdwg.mxu0
    %v2012 = vmul.f32 %v1933, 0.25
    %v2013 = vmul.f32 %v2009, 0.25
    %v2014 = vadd.f32 %v2012, %v41
    %v2015 = vadd.f32 %v2013, %v42
    %v2016 = vsel %vm446, %v2014, -inf
    %2017 = vmax.xlane.f32.xlu0 %v2016
    %v2018 = vpop.xlane.xlu0 %2017
    %v2019 = vsel %vm446, %v2015, -inf
    %2020 = vmax.xlane.f32.xlu0 %v2019
    %v2021 = vpop.xlane.xlu0 %2020
    %v2022 = vsub.f32 %v2014, %v2018
    %v2023 = vsub.f32 %v2015, %v2021
    %v2024 = vmul.f32 %v2022, 1.442695
    %v2025 = vpow.pop %v2024
    %v2026 = vmul.f32 %v2023, 1.442695
    %v2027 = vpow.pop %v2026
    %v2028 = vsel %vm446, %v2025, 0.0
    %2029 = vadd.xlane.f32.xlu0 %v2028
    %v2030 = vpop.xlane.xlu0 %2029
    %v2031 = vsel %vm446, %v2027, 0.0
    %2032 = vadd.xlane.f32.xlu0 %v2031
    %v2033 = vpop.xlane.xlu0 %2032
    %v2034 = vrcp.pop %v2030
    %v2035 = vrcp.pop %v2033
    %v2036 = vmul.f32 %v2025, %v2034
    %v2037 = vmul.f32 %v2027, %v2035
    %v2039 = vsel %vm446, %v2036, 0
    %2041 = vmatprep.subr.mxu0 0.0
    %2042 = vmatpush1.msra.mxu0 %v1852
    %2043 = vmatprep.subr.mxu0 0.0
    %2044 = vmatpush1.msra.mxu0 0.0
    %2045 = vmatprep.subr.mxu0 0.0
    %2046 = vmatpush1.msra.mxu0 0.0
    %2047 = vmatprep.subr.mxu0 0.0
    %2048 = vmatpush1.msra.mxu0 0.0
    %2049 = vmatprep.subr.mxu0 0.0
    %2050 = vmatpush1.msra.mxu0 0.0
    %2051 = vmatprep.subr.mxu0 0.0
    %2052 = vmatpush1.msra.mxu0 0.0
    %2053 = vmatprep.subr.mxu0 0.0
    %2054 = vmatpush1.msra.mxu0 0.0
    %2055 = vmatprep.subr.mxu0 0.0
    %2056 = vmatpush1.msra.mxu0 0.0
    %2057 = vmatprep.subr.mxu0 0.0
    %2058 = vmatpush1.msra.mxu0 0.0
    %2059 = vmatprep.subr.mxu0 0.0
    %2060 = vmatpush1.msra.mxu0 0.0
    %2061 = vmatprep.subr.mxu0 0.0
    %2062 = vmatpush1.msra.mxu0 0.0
    %2063 = vmatprep.subr.mxu0 0.0
    %2064 = vmatpush1.msra.mxu0 0.0
    %2065 = vmatprep.subr.mxu0 0.0
    %2066 = vmatpush1.msra.mxu0 0.0
    %2067 = vmatprep.subr.mxu0 0.0
    %2068 = vmatpush1.msra.mxu0 0.0
    %2069 = vmatprep.subr.mxu0 0.0
    %2070 = vmatpush1.msra.mxu0 0.0
    %2071 = vmatprep.subr.mxu0 0.0
    %2072 = vmatpush1.msra.mxu0 0.0
    %2073 = vmatprep.subr.mxu0 0.0
    %2074 = vmatpush1.msra.mxu0 0.0
    %2075 = vmatprep.subr.mxu0 0.0
    %2076 = vmatpush1.msra.mxu0 0.0
    %2077 = vmatprep.subr.mxu0 0.0
    %2078 = vmatpush1.msra.mxu0 0.0
    %2079 = vmatprep.subr.mxu0 0.0
    %2080 = vmatpush1.msra.mxu0 0.0
    %2081 = vmatprep.subr.mxu0 0.0
    %2082 = vmatpush1.msra.mxu0 0.0
    %2083 = vmatprep.subr.mxu0 0.0
    %2084 = vmatpush1.msra.mxu0 0.0
    %2085 = vmatprep.subr.mxu0 0.0
    %2086 = vmatpush1.msra.mxu0 0.0
    %2087 = vmatprep.subr.mxu0 0.0
    %2088 = vmatpush1.msra.mxu0 0.0
    %2089 = vmatprep.subr.mxu0 0.0
    %2090 = vmatpush1.msra.mxu0 0.0
    %2091 = vmatprep.subr.mxu0 0.0
    %2092 = vmatpush1.msra.mxu0 0.0
    %2093 = vmatprep.subr.mxu0 0.0
    %2094 = vmatpush1.msra.mxu0 0.0
    %2095 = vmatprep.subr.mxu0 0.0
    %2096 = vmatpush1.msra.mxu0 0.0
    %2097 = vmatprep.subr.mxu0 0.0
    %2098 = vmatpush1.msra.mxu0 0.0
    %2099 = vmatprep.subr.mxu0 0.0
    %2100 = vmatpush1.msra.mxu0 0.0
    %2101 = vmatprep.subr.mxu0 0.0
    %2102 = vmatpush1.msra.mxu0 0.0
    %2103 = vmatprep.subr.mxu0 0.0
    %2104 = vmatpush1.msra.mxu0 0.0
    %2105 = vmatprep.mubr.f32.mxu0 0.0
    %2106 = vmatmul.mubr.f32.gmra.mrb[0].mxu0 %v2039
    %v2107 = vpop.f32.mrb[0].mxu0
    %v2108 = vadd.f32 0.0, %v2107
    %v2109 = vpop.f32.mrb[0].mxu0
    %2110 = vdwg.mxu0
    %v2112 = vsel %vm446, %v2037, 0
    %2114 = vmatprep.subr.mxu0 0.0
    %2115 = vmatpush1.msra.mxu0 %v1857
    %2116 = vmatprep.subr.mxu0 0.0
    %2117 = vmatpush1.msra.mxu0 0.0
    %2118 = vmatprep.subr.mxu0 0.0
    %2119 = vmatpush1.msra.mxu0 0.0
    %2120 = vmatprep.subr.mxu0 0.0
    %2121 = vmatpush1.msra.mxu0 0.0
    %2122 = vmatprep.subr.mxu0 0.0
    %2123 = vmatpush1.msra.mxu0 0.0
    %2124 = vmatprep.subr.mxu0 0.0
    %2125 = vmatpush1.msra.mxu0 0.0
    %2126 = vmatprep.subr.mxu0 0.0
    %2127 = vmatpush1.msra.mxu0 0.0
    %2128 = vmatprep.subr.mxu0 0.0
    %2129 = vmatpush1.msra.mxu0 0.0
    %2130 = vmatprep.subr.mxu0 0.0
    %2131 = vmatpush1.msra.mxu0 0.0
    %2132 = vmatprep.subr.mxu0 0.0
    %2133 = vmatpush1.msra.mxu0 0.0
    %2134 = vmatprep.subr.mxu0 0.0
    %2135 = vmatpush1.msra.mxu0 0.0
    %2136 = vmatprep.subr.mxu0 0.0
    %2137 = vmatpush1.msra.mxu0 0.0
    %2138 = vmatprep.subr.mxu0 0.0
    %2139 = vmatpush1.msra.mxu0 0.0
    %2140 = vmatprep.subr.mxu0 0.0
    %2141 = vmatpush1.msra.mxu0 0.0
    %2142 = vmatprep.subr.mxu0 0.0
    %2143 = vmatpush1.msra.mxu0 0.0
    %2144 = vmatprep.subr.mxu0 0.0
    %2145 = vmatpush1.msra.mxu0 0.0
    %2146 = vmatprep.subr.mxu0 0.0
    %2147 = vmatpush1.msra.mxu0 0.0
    %2148 = vmatprep.subr.mxu0 0.0
    %2149 = vmatpush1.msra.mxu0 0.0
    %2150 = vmatprep.subr.mxu0 0.0
    %2151 = vmatpush1.msra.mxu0 0.0
    %2152 = vmatprep.subr.mxu0 0.0
    %2153 = vmatpush1.msra.mxu0 0.0
    %2154 = vmatprep.subr.mxu0 0.0
    %2155 = vmatpush1.msra.mxu0 0.0
    %2156 = vmatprep.subr.mxu0 0.0
    %2157 = vmatpush1.msra.mxu0 0.0
    %2158 = vmatprep.subr.mxu0 0.0
    %2159 = vmatpush1.msra.mxu0 0.0
    %2160 = vmatprep.subr.mxu0 0.0
    %2161 = vmatpush1.msra.mxu0 0.0
    %2162 = vmatprep.subr.mxu0 0.0
    %2163 = vmatpush1.msra.mxu0 0.0
    %2164 = vmatprep.subr.mxu0 0.0
    %2165 = vmatpush1.msra.mxu0 0.0
    %2166 = vmatprep.subr.mxu0 0.0
    %2167 = vmatpush1.msra.mxu0 0.0
    %2168 = vmatprep.subr.mxu0 0.0
    %2169 = vmatpush1.msra.mxu0 0.0
    %2170 = vmatprep.subr.mxu0 0.0
    %2171 = vmatpush1.msra.mxu0 0.0
    %2172 = vmatprep.subr.mxu0 0.0
    %2173 = vmatpush1.msra.mxu0 0.0
    %2174 = vmatprep.subr.mxu0 0.0
    %2175 = vmatpush1.msra.mxu0 0.0
    %2176 = vmatprep.subr.mxu0 0.0
    %2177 = vmatpush1.msra.mxu0 0.0
    %2178 = vmatprep.mubr.f32.mxu0 0.0
    %2179 = vmatmul.mubr.f32.gmra.mrb[0].mxu0 %v2112
    %v2180 = vpop.f32.mrb[0].mxu0
    %v2181 = vadd.f32 0.0, %v2180
    %v2182 = vpop.f32.mrb[0].mxu0
    %2183 = vdwg.mxu0
    %s2184 = scalar_lea.vmem %s3, 32
    %v2185 = vld [vmem:[%s2184] sm:$0xff]
    %v2186 = vld [vmem:[%s2184 + $0x8] sm:$0xff]
    %s2187 = scalar_lea.vmem %s2, 224
    %v2188 = vld [vmem:[%s2187] sm:$0xff]
    %v2189 = vld [vmem:[%s2187 + $0x8] sm:$0xff]
    %v2190 = vld [vmem:[%s2187 + $0x10] sm:$0xff]
    %v2191 = vld [vmem:[%s2187 + $0x18] sm:$0xff]
    %s2192 = scalar_lea.vmem %s2, 288
    %v2193 = vld [vmem:[%s2192] sm:$0xff]
    %v2194 = vld [vmem:[%s2192 + $0x8] sm:$0xff]
    %v2195 = vld [vmem:[%s2192 + $0x10] sm:$0xff]
    %v2196 = vld [vmem:[%s2192 + $0x18] sm:$0xff]
    %s2197 = scalar_lea.vmem %s2, 352
    %v2198 = vld [vmem:[%s2197] sm:$0xff]
    %v2199 = vld [vmem:[%s2197 + $0x8] sm:$0xff]
    %v2200 = vld [vmem:[%s2197 + $0x10] sm:$0xff]
    %v2201 = vld [vmem:[%s2197 + $0x18] sm:$0xff]
    %2202 = vmatprep.subr.mxu0 0.0
    %2203 = vmatpush1.msra.mxu0 %v2188
    %2204 = vmatprep.subr.mxu0 0.0
    %2205 = vmatpush1.msra.mxu0 %v2189
    %2206 = vmatprep.subr.mxu0 0.0
    %2207 = vmatpush1.msra.mxu0 %v2190
    %2208 = vmatprep.subr.mxu0 0.0
    %2209 = vmatpush1.msra.mxu0 %v2191
    %2210 = vmatprep.subr.mxu0 0.0
    %2211 = vmatpush1.msra.mxu0 0.0
    %2212 = vmatprep.subr.mxu0 0.0
    %2213 = vmatpush1.msra.mxu0 0.0
    %2214 = vmatprep.subr.mxu0 0.0
    %2215 = vmatpush1.msra.mxu0 0.0
    %2216 = vmatprep.subr.mxu0 0.0
    %2217 = vmatpush1.msra.mxu0 0.0
    %2218 = vmatprep.subr.mxu0 0.0
    %2219 = vmatpush1.msra.mxu0 0.0
    %2220 = vmatprep.subr.mxu0 0.0
    %2221 = vmatpush1.msra.mxu0 0.0
    %2222 = vmatprep.subr.mxu0 0.0
    %2223 = vmatpush1.msra.mxu0 0.0
    %2224 = vmatprep.subr.mxu0 0.0
    %2225 = vmatpush1.msra.mxu0 0.0
    %2226 = vmatprep.subr.mxu0 0.0
    %2227 = vmatpush1.msra.mxu0 0.0
    %2228 = vmatprep.subr.mxu0 0.0
    %2229 = vmatpush1.msra.mxu0 0.0
    %2230 = vmatprep.subr.mxu0 0.0
    %2231 = vmatpush1.msra.mxu0 0.0
    %2232 = vmatprep.subr.mxu0 0.0
    %2233 = vmatpush1.msra.mxu0 0.0
    %2234 = vmatprep.subr.mxu0 0.0
    %2235 = vmatpush1.msra.mxu0 0.0
    %2236 = vmatprep.subr.mxu0 0.0
    %2237 = vmatpush1.msra.mxu0 0.0
    %2238 = vmatprep.subr.mxu0 0.0
    %2239 = vmatpush1.msra.mxu0 0.0
    %2240 = vmatprep.subr.mxu0 0.0
    %2241 = vmatpush1.msra.mxu0 0.0
    %2242 = vmatprep.subr.mxu0 0.0
    %2243 = vmatpush1.msra.mxu0 0.0
    %2244 = vmatprep.subr.mxu0 0.0
    %2245 = vmatpush1.msra.mxu0 0.0
    %2246 = vmatprep.subr.mxu0 0.0
    %2247 = vmatpush1.msra.mxu0 0.0
    %2248 = vmatprep.subr.mxu0 0.0
    %2249 = vmatpush1.msra.mxu0 0.0
    %2250 = vmatprep.subr.mxu0 0.0
    %2251 = vmatpush1.msra.mxu0 0.0
    %2252 = vmatprep.subr.mxu0 0.0
    %2253 = vmatpush1.msra.mxu0 0.0
    %2254 = vmatprep.subr.mxu0 0.0
    %2255 = vmatpush1.msra.mxu0 0.0
    %2256 = vmatprep.subr.mxu0 0.0
    %2257 = vmatpush1.msra.mxu0 0.0
    %2258 = vmatprep.subr.mxu0 0.0
    %2259 = vmatpush1.msra.mxu0 0.0
    %2260 = vmatprep.subr.mxu0 0.0
    %2261 = vmatpush1.msra.mxu0 0.0
    %2262 = vmatprep.subr.mxu0 0.0
    %2263 = vmatpush1.msra.mxu0 0.0
    %2264 = vmatprep.subr.mxu0 0.0
    %2265 = vmatpush1.msra.mxu0 0.0
    %2266 = vmatprep.mubr.f32.mxu0 0.0
    %2267 = vmatmul.mubr.f32.gmra.mrb[0].mxu0 %v1630
    %v2268 = vpop.f32.mrb[0].mxu0
    %v2269 = vadd.f32 0.0, %v2268
    %v2270 = vpop.f32.mrb[0].mxu0
    %2271 = vmatprep.mubr.f32.mxu0 0.0
    %2272 = vmatmul.mubr.f32.gmra.mrb[0].mxu0 %v1633
    %v2273 = vpop.f32.mrb[0].mxu0
    %v2274 = vadd.f32 0.0, %v2273
    %v2275 = vpop.f32.mrb[0].mxu0
    %2276 = vdwg.mxu0
    %2277 = vmatprep.subr.mxu0 0.0
    %2278 = vmatpush1.msra.mxu0 %v2193
    %2279 = vmatprep.subr.mxu0 0.0
    %2280 = vmatpush1.msra.mxu0 %v2194
    %2281 = vmatprep.subr.mxu0 0.0
    %2282 = vmatpush1.msra.mxu0 %v2195
    %2283 = vmatprep.subr.mxu0 0.0
    %2284 = vmatpush1.msra.mxu0 %v2196
    %2285 = vmatprep.subr.mxu0 0.0
    %2286 = vmatpush1.msra.mxu0 0.0
    %2287 = vmatprep.subr.mxu0 0.0
    %2288 = vmatpush1.msra.mxu0 0.0
    %2289 = vmatprep.subr.mxu0 0.0
    %2290 = vmatpush1.msra.mxu0 0.0
    %2291 = vmatprep.subr.mxu0 0.0
    %2292 = vmatpush1.msra.mxu0 0.0
    %2293 = vmatprep.subr.mxu0 0.0
    %2294 = vmatpush1.msra.mxu0 0.0
    %2295 = vmatprep.subr.mxu0 0.0
    %2296 = vmatpush1.msra.mxu0 0.0
    %2297 = vmatprep.subr.mxu0 0.0
    %2298 = vmatpush1.msra.mxu0 0.0
    %2299 = vmatprep.subr.mxu0 0.0
    %2300 = vmatpush1.msra.mxu0 0.0
    %2301 = vmatprep.subr.mxu0 0.0
    %2302 = vmatpush1.msra.mxu0 0.0
    %2303 = vmatprep.subr.mxu0 0.0
    %2304 = vmatpush1.msra.mxu0 0.0
    %2305 = vmatprep.subr.mxu0 0.0
    %2306 = vmatpush1.msra.mxu0 0.0
    %2307 = vmatprep.subr.mxu0 0.0
    %2308 = vmatpush1.msra.mxu0 0.0
    %2309 = vmatprep.subr.mxu0 0.0
    %2310 = vmatpush1.msra.mxu0 0.0
    %2311 = vmatprep.subr.mxu0 0.0
    %2312 = vmatpush1.msra.mxu0 0.0
    %2313 = vmatprep.subr.mxu0 0.0
    %2314 = vmatpush1.msra.mxu0 0.0
    %2315 = vmatprep.subr.mxu0 0.0
    %2316 = vmatpush1.msra.mxu0 0.0
    %2317 = vmatprep.subr.mxu0 0.0
    %2318 = vmatpush1.msra.mxu0 0.0
    %2319 = vmatprep.subr.mxu0 0.0
    %2320 = vmatpush1.msra.mxu0 0.0
    %2321 = vmatprep.subr.mxu0 0.0
    %2322 = vmatpush1.msra.mxu0 0.0
    %2323 = vmatprep.subr.mxu0 0.0
    %2324 = vmatpush1.msra.mxu0 0.0
    %2325 = vmatprep.subr.mxu0 0.0
    %2326 = vmatpush1.msra.mxu0 0.0
    %2327 = vmatprep.subr.mxu0 0.0
    %2328 = vmatpush1.msra.mxu0 0.0
    %2329 = vmatprep.subr.mxu0 0.0
    %2330 = vmatpush1.msra.mxu0 0.0
    %2331 = vmatprep.subr.mxu0 0.0
    %2332 = vmatpush1.msra.mxu0 0.0
    %2333 = vmatprep.subr.mxu0 0.0
    %2334 = vmatpush1.msra.mxu0 0.0
    %2335 = vmatprep.subr.mxu0 0.0
    %2336 = vmatpush1.msra.mxu0 0.0
    %2337 = vmatprep.subr.mxu0 0.0
    %2338 = vmatpush1.msra.mxu0 0.0
    %2339 = vmatprep.subr.mxu0 0.0
    %2340 = vmatpush1.msra.mxu0 0.0
    %2341 = vmatprep.mubr.f32.mxu0 0.0
    %2342 = vmatmul.mubr.f32.gmra.mrb[0].mxu0 %v1630
    %v2343 = vpop.f32.mrb[0].mxu0
    %v2344 = vadd.f32 0.0, %v2343
    %v2345 = vpop.f32.mrb[0].mxu0
    %2346 = vmatprep.mubr.f32.mxu0 0.0
    %2347 = vmatmul.mubr.f32.gmra.mrb[0].mxu0 %v1633
    %v2348 = vpop.f32.mrb[0].mxu0
    %v2349 = vadd.f32 0.0, %v2348
    %v2350 = vpop.f32.mrb[0].mxu0
    %2351 = vdwg.mxu0
    %2352 = vmatprep.subr.mxu0 0.0
    %2353 = vmatpush1.msra.mxu0 %v2198
    %2354 = vmatprep.subr.mxu0 0.0
    %2355 = vmatpush1.msra.mxu0 %v2199
    %2356 = vmatprep.subr.mxu0 0.0
    %2357 = vmatpush1.msra.mxu0 %v2200
    %2358 = vmatprep.subr.mxu0 0.0
    %2359 = vmatpush1.msra.mxu0 %v2201
    %2360 = vmatprep.subr.mxu0 0.0
    %2361 = vmatpush1.msra.mxu0 0.0
    %2362 = vmatprep.subr.mxu0 0.0
    %2363 = vmatpush1.msra.mxu0 0.0
    %2364 = vmatprep.subr.mxu0 0.0
    %2365 = vmatpush1.msra.mxu0 0.0
    %2366 = vmatprep.subr.mxu0 0.0
    %2367 = vmatpush1.msra.mxu0 0.0
    %2368 = vmatprep.subr.mxu0 0.0
    %2369 = vmatpush1.msra.mxu0 0.0
    %2370 = vmatprep.subr.mxu0 0.0
    %2371 = vmatpush1.msra.mxu0 0.0
    %2372 = vmatprep.subr.mxu0 0.0
    %2373 = vmatpush1.msra.mxu0 0.0
    %2374 = vmatprep.subr.mxu0 0.0
    %2375 = vmatpush1.msra.mxu0 0.0
    %2376 = vmatprep.subr.mxu0 0.0
    %2377 = vmatpush1.msra.mxu0 0.0
    %2378 = vmatprep.subr.mxu0 0.0
    %2379 = vmatpush1.msra.mxu0 0.0
    %2380 = vmatprep.subr.mxu0 0.0
    %2381 = vmatpush1.msra.mxu0 0.0
    %2382 = vmatprep.subr.mxu0 0.0
    %2383 = vmatpush1.msra.mxu0 0.0
    %2384 = vmatprep.subr.mxu0 0.0
    %2385 = vmatpush1.msra.mxu0 0.0
    %2386 = vmatprep.subr.mxu0 0.0
    %2387 = vmatpush1.msra.mxu0 0.0
    %2388 = vmatprep.subr.mxu0 0.0
    %2389 = vmatpush1.msra.mxu0 0.0
    %2390 = vmatprep.subr.mxu0 0.0
    %2391 = vmatpush1.msra.mxu0 0.0
    %2392 = vmatprep.subr.mxu0 0.0
    %2393 = vmatpush1.msra.mxu0 0.0
    %2394 = vmatprep.subr.mxu0 0.0
    %2395 = vmatpush1.msra.mxu0 0.0
    %2396 = vmatprep.subr.mxu0 0.0
    %2397 = vmatpush1.msra.mxu0 0.0
    %2398 = vmatprep.subr.mxu0 0.0
    %2399 = vmatpush1.msra.mxu0 0.0
    %2400 = vmatprep.subr.mxu0 0.0
    %2401 = vmatpush1.msra.mxu0 0.0
    %2402 = vmatprep.subr.mxu0 0.0
    %2403 = vmatpush1.msra.mxu0 0.0
    %2404 = vmatprep.subr.mxu0 0.0
    %2405 = vmatpush1.msra.mxu0 0.0
    %2406 = vmatprep.subr.mxu0 0.0
    %2407 = vmatpush1.msra.mxu0 0.0
    %2408 = vmatprep.subr.mxu0 0.0
    %2409 = vmatpush1.msra.mxu0 0.0
    %2410 = vmatprep.subr.mxu0 0.0
    %2411 = vmatpush1.msra.mxu0 0.0
    %2412 = vmatprep.subr.mxu0 0.0
    %2413 = vmatpush1.msra.mxu0 0.0
    %2414 = vmatprep.subr.mxu0 0.0
    %2415 = vmatpush1.msra.mxu0 0.0
    %2416 = vmatprep.mubr.f32.mxu0 0.0
    %2417 = vmatmul.mubr.f32.gmra.mrb[0].mxu0 %v1630
    %v2418 = vpop.f32.mrb[0].mxu0
    %v2419 = vadd.f32 0.0, %v2418
    %v2420 = vpop.f32.mrb[0].mxu0
    %2421 = vmatprep.mubr.f32.mxu0 0.0
    %2422 = vmatmul.mubr.f32.gmra.mrb[0].mxu0 %v1633
    %v2423 = vpop.f32.mrb[0].mxu0
    %v2424 = vadd.f32 0.0, %v2423
    %v2425 = vpop.f32.mrb[0].mxu0
    %2426 = vdwg.mxu0
    %v2428 = vsel %vm289, %v2269, 0
    %v2431 = vsel %vm289, %v2344, 0
    %2433 = vmatprep.subr.mxu0 0.0
    %2434 = vmatpush1.xpose.msra.mxu0 %v2431
    %2435 = vmatprep.subr.mxu0 0.0
    %2436 = vmatpush1.xpose.msra.mxu0 0.0
    %2437 = vmatprep.subr.mxu0 0.0
    %2438 = vmatpush1.xpose.msra.mxu0 0.0
    %2439 = vmatprep.subr.mxu0 0.0
    %2440 = vmatpush1.xpose.msra.mxu0 0.0
    %2441 = vmatprep.subr.mxu0 0.0
    %2442 = vmatpush1.xpose.msra.mxu0 0.0
    %2443 = vmatprep.subr.mxu0 0.0
    %2444 = vmatpush1.xpose.msra.mxu0 0.0
    %2445 = vmatprep.subr.mxu0 0.0
    %2446 = vmatpush1.xpose.msra.mxu0 0.0
    %2447 = vmatprep.subr.mxu0 0.0
    %2448 = vmatpush1.xpose.msra.mxu0 0.0
    %2449 = vmatprep.subr.mxu0 0.0
    %2450 = vmatpush1.xpose.msra.mxu0 0.0
    %2451 = vmatprep.subr.mxu0 0.0
    %2452 = vmatpush1.xpose.msra.mxu0 0.0
    %2453 = vmatprep.subr.mxu0 0.0
    %2454 = vmatpush1.xpose.msra.mxu0 0.0
    %2455 = vmatprep.subr.mxu0 0.0
    %2456 = vmatpush1.xpose.msra.mxu0 0.0
    %2457 = vmatprep.subr.mxu0 0.0
    %2458 = vmatpush1.xpose.msra.mxu0 0.0
    %2459 = vmatprep.subr.mxu0 0.0
    %2460 = vmatpush1.xpose.msra.mxu0 0.0
    %2461 = vmatprep.subr.mxu0 0.0
    %2462 = vmatpush1.xpose.msra.mxu0 0.0
    %2463 = vmatprep.subr.mxu0 0.0
    %2464 = vmatpush1.xpose.msra.mxu0 0.0
    %2465 = vmatprep.subr.mxu0 0.0
    %2466 = vmatpush1.xpose.msra.mxu0 0.0
    %2467 = vmatprep.subr.mxu0 0.0
    %2468 = vmatpush1.xpose.msra.mxu0 0.0
    %2469 = vmatprep.subr.mxu0 0.0
    %2470 = vmatpush1.xpose.msra.mxu0 0.0
    %2471 = vmatprep.subr.mxu0 0.0
    %2472 = vmatpush1.xpose.msra.mxu0 0.0
    %2473 = vmatprep.subr.mxu0 0.0
    %2474 = vmatpush1.xpose.msra.mxu0 0.0
    %2475 = vmatprep.subr.mxu0 0.0
    %2476 = vmatpush1.xpose.msra.mxu0 0.0
    %2477 = vmatprep.subr.mxu0 0.0
    %2478 = vmatpush1.xpose.msra.mxu0 0.0
    %2479 = vmatprep.subr.mxu0 0.0
    %2480 = vmatpush1.xpose.msra.mxu0 0.0
    %2481 = vmatprep.subr.mxu0 0.0
    %2482 = vmatpush1.xpose.msra.mxu0 0.0
    %2483 = vmatprep.subr.mxu0 0.0
    %2484 = vmatpush1.xpose.msra.mxu0 0.0
    %2485 = vmatprep.subr.mxu0 0.0
    %2486 = vmatpush1.xpose.msra.mxu0 0.0
    %2487 = vmatprep.subr.mxu0 0.0
    %2488 = vmatpush1.xpose.msra.mxu0 0.0
    %2489 = vmatprep.subr.mxu0 0.0
    %2490 = vmatpush1.xpose.msra.mxu0 0.0
    %2491 = vmatprep.subr.mxu0 0.0
    %2492 = vmatpush1.xpose.msra.mxu0 0.0
    %2493 = vmatprep.subr.mxu0 0.0
    %2494 = vmatpush1.xpose.msra.mxu0 0.0
    %2495 = vmatprep.subr.mxu0 0.0
    %2496 = vmatpush1.xpose.msra.mxu0 0.0
    %2497 = vmatprep.mubr.f32.mxu0 0.0
    %2498 = vmatmul.mubr.f32.gmra.mrb[0].mxu0 %v2428
    %v2499 = vpop.f32.mrb[0].mxu0
    %v2500 = vadd.f32 0.0, %v2499
    %v2501 = vpop.f32.mrb[0].mxu0
    %2502 = vdwg.mxu0
    %v2504 = vsel %vm289, %v2274, 0
    %v2507 = vsel %vm289, %v2349, 0
    %2509 = vmatprep.subr.mxu0 0.0
    %2510 = vmatpush1.xpose.msra.mxu0 %v2507
    %2511 = vmatprep.subr.mxu0 0.0
    %2512 = vmatpush1.xpose.msra.mxu0 0.0
    %2513 = vmatprep.subr.mxu0 0.0
    %2514 = vmatpush1.xpose.msra.mxu0 0.0
    %2515 = vmatprep.subr.mxu0 0.0
    %2516 = vmatpush1.xpose.msra.mxu0 0.0
    %2517 = vmatprep.subr.mxu0 0.0
    %2518 = vmatpush1.xpose.msra.mxu0 0.0
    %2519 = vmatprep.subr.mxu0 0.0
    %2520 = vmatpush1.xpose.msra.mxu0 0.0
    %2521 = vmatprep.subr.mxu0 0.0
    %2522 = vmatpush1.xpose.msra.mxu0 0.0
    %2523 = vmatprep.subr.mxu0 0.0
    %2524 = vmatpush1.xpose.msra.mxu0 0.0
    %2525 = vmatprep.subr.mxu0 0.0
    %2526 = vmatpush1.xpose.msra.mxu0 0.0
    %2527 = vmatprep.subr.mxu0 0.0
    %2528 = vmatpush1.xpose.msra.mxu0 0.0
    %2529 = vmatprep.subr.mxu0 0.0
    %2530 = vmatpush1.xpose.msra.mxu0 0.0
    %2531 = vmatprep.subr.mxu0 0.0
    %2532 = vmatpush1.xpose.msra.mxu0 0.0
    %2533 = vmatprep.subr.mxu0 0.0
    %2534 = vmatpush1.xpose.msra.mxu0 0.0
    %2535 = vmatprep.subr.mxu0 0.0
    %2536 = vmatpush1.xpose.msra.mxu0 0.0
    %2537 = vmatprep.subr.mxu0 0.0
    %2538 = vmatpush1.xpose.msra.mxu0 0.0
    %2539 = vmatprep.subr.mxu0 0.0
    %2540 = vmatpush1.xpose.msra.mxu0 0.0
    %2541 = vmatprep.subr.mxu0 0.0
    %2542 = vmatpush1.xpose.msra.mxu0 0.0
    %2543 = vmatprep.subr.mxu0 0.0
    %2544 = vmatpush1.xpose.msra.mxu0 0.0
    %2545 = vmatprep.subr.mxu0 0.0
    %2546 = vmatpush1.xpose.msra.mxu0 0.0
    %2547 = vmatprep.subr.mxu0 0.0
    %2548 = vmatpush1.xpose.msra.mxu0 0.0
    %2549 = vmatprep.subr.mxu0 0.0
    %2550 = vmatpush1.xpose.msra.mxu0 0.0
    %2551 = vmatprep.subr.mxu0 0.0
    %2552 = vmatpush1.xpose.msra.mxu0 0.0
    %2553 = vmatprep.subr.mxu0 0.0
    %2554 = vmatpush1.xpose.msra.mxu0 0.0
    %2555 = vmatprep.subr.mxu0 0.0
    %2556 = vmatpush1.xpose.msra.mxu0 0.0
    %2557 = vmatprep.subr.mxu0 0.0
    %2558 = vmatpush1.xpose.msra.mxu0 0.0
    %2559 = vmatprep.subr.mxu0 0.0
    %2560 = vmatpush1.xpose.msra.mxu0 0.0
    %2561 = vmatprep.subr.mxu0 0.0
    %2562 = vmatpush1.xpose.msra.mxu0 0.0
    %2563 = vmatprep.subr.mxu0 0.0
    %2564 = vmatpush1.xpose.msra.mxu0 0.0
    %2565 = vmatprep.subr.mxu0 0.0
    %2566 = vmatpush1.xpose.msra.mxu0 0.0
    %2567 = vmatprep.subr.mxu0 0.0
    %2568 = vmatpush1.xpose.msra.mxu0 0.0
    %2569 = vmatprep.subr.mxu0 0.0
    %2570 = vmatpush1.xpose.msra.mxu0 0.0
    %2571 = vmatprep.subr.mxu0 0.0
    %2572 = vmatpush1.xpose.msra.mxu0 0.0
    %2573 = vmatprep.mubr.f32.mxu0 0.0
    %2574 = vmatmul.mubr.f32.gmra.mrb[0].mxu0 %v2504
    %v2575 = vpop.f32.mrb[0].mxu0
    %v2576 = vadd.f32 0.0, %v2575
    %v2577 = vpop.f32.mrb[0].mxu0
    %2578 = vdwg.mxu0
    %v2579 = vmul.f32 %v2500, 0.25
    %v2580 = vmul.f32 %v2576, 0.25
    %v2581 = vadd.f32 %v2579, %v41
    %v2582 = vadd.f32 %v2580, %v42
    %v2583 = vsel %vm446, %v2581, -inf
    %2584 = vmax.xlane.f32.xlu0 %v2583
    %v2585 = vpop.xlane.xlu0 %2584
    %v2586 = vsel %vm446, %v2582, -inf
    %2587 = vmax.xlane.f32.xlu0 %v2586
    %v2588 = vpop.xlane.xlu0 %2587
    %v2589 = vsub.f32 %v2581, %v2585
    %v2590 = vsub.f32 %v2582, %v2588
    %v2591 = vmul.f32 %v2589, 1.442695
    %v2592 = vpow.pop %v2591
    %v2593 = vmul.f32 %v2590, 1.442695
    %v2594 = vpow.pop %v2593
    %v2595 = vsel %vm446, %v2592, 0.0
    %2596 = vadd.xlane.f32.xlu0 %v2595
    %v2597 = vpop.xlane.xlu0 %2596
    %v2598 = vsel %vm446, %v2594, 0.0
    %2599 = vadd.xlane.f32.xlu0 %v2598
    %v2600 = vpop.xlane.xlu0 %2599
    %v2601 = vrcp.pop %v2597
    %v2602 = vrcp.pop %v2600
    %v2603 = vmul.f32 %v2592, %v2601
    %v2604 = vmul.f32 %v2594, %v2602
    %v2606 = vsel %vm446, %v2603, 0
    %2608 = vmatprep.subr.mxu0 0.0
    %2609 = vmatpush1.msra.mxu0 %v2419
    %2610 = vmatprep.subr.mxu0 0.0
    %2611 = vmatpush1.msra.mxu0 0.0
    %2612 = vmatprep.subr.mxu0 0.0
    %2613 = vmatpush1.msra.mxu0 0.0
    %2614 = vmatprep.subr.mxu0 0.0
    %2615 = vmatpush1.msra.mxu0 0.0
    %2616 = vmatprep.subr.mxu0 0.0
    %2617 = vmatpush1.msra.mxu0 0.0
    %2618 = vmatprep.subr.mxu0 0.0
    %2619 = vmatpush1.msra.mxu0 0.0
    %2620 = vmatprep.subr.mxu0 0.0
    %2621 = vmatpush1.msra.mxu0 0.0
    %2622 = vmatprep.subr.mxu0 0.0
    %2623 = vmatpush1.msra.mxu0 0.0
    %2624 = vmatprep.subr.mxu0 0.0
    %2625 = vmatpush1.msra.mxu0 0.0
    %2626 = vmatprep.subr.mxu0 0.0
    %2627 = vmatpush1.msra.mxu0 0.0
    %2628 = vmatprep.subr.mxu0 0.0
    %2629 = vmatpush1.msra.mxu0 0.0
    %2630 = vmatprep.subr.mxu0 0.0
    %2631 = vmatpush1.msra.mxu0 0.0
    %2632 = vmatprep.subr.mxu0 0.0
    %2633 = vmatpush1.msra.mxu0 0.0
    %2634 = vmatprep.subr.mxu0 0.0
    %2635 = vmatpush1.msra.mxu0 0.0
    %2636 = vmatprep.subr.mxu0 0.0
    %2637 = vmatpush1.msra.mxu0 0.0
    %2638 = vmatprep.subr.mxu0 0.0
    %2639 = vmatpush1.msra.mxu0 0.0
    %2640 = vmatprep.subr.mxu0 0.0
    %2641 = vmatpush1.msra.mxu0 0.0
    %2642 = vmatprep.subr.mxu0 0.0
    %2643 = vmatpush1.msra.mxu0 0.0
    %2644 = vmatprep.subr.mxu0 0.0
    %2645 = vmatpush1.msra.mxu0 0.0
    %2646 = vmatprep.subr.mxu0 0.0
    %2647 = vmatpush1.msra.mxu0 0.0
    %2648 = vmatprep.subr.mxu0 0.0
    %2649 = vmatpush1.msra.mxu0 0.0
    %2650 = vmatprep.subr.mxu0 0.0
    %2651 = vmatpush1.msra.mxu0 0.0
    %2652 = vmatprep.subr.mxu0 0.0
    %2653 = vmatpush1.msra.mxu0 0.0
    %2654 = vmatprep.subr.mxu0 0.0
    %2655 = vmatpush1.msra.mxu0 0.0
    %2656 = vmatprep.subr.mxu0 0.0
    %2657 = vmatpush1.msra.mxu0 0.0
    %2658 = vmatprep.subr.mxu0 0.0
    %2659 = vmatpush1.msra.mxu0 0.0
    %2660 = vmatprep.subr.mxu0 0.0
    %2661 = vmatpush1.msra.mxu0 0.0
    %2662 = vmatprep.subr.mxu0 0.0
    %2663 = vmatpush1.msra.mxu0 0.0
    %2664 = vmatprep.subr.mxu0 0.0
    %2665 = vmatpush1.msra.mxu0 0.0
    %2666 = vmatprep.subr.mxu0 0.0
    %2667 = vmatpush1.msra.mxu0 0.0
    %2668 = vmatprep.subr.mxu0 0.0
    %2669 = vmatpush1.msra.mxu0 0.0
    %2670 = vmatprep.subr.mxu0 0.0
    %2671 = vmatpush1.msra.mxu0 0.0
    %2672 = vmatprep.mubr.f32.mxu0 0.0
    %2673 = vmatmul.mubr.f32.gmra.mrb[0].mxu0 %v2606
    %v2674 = vpop.f32.mrb[0].mxu0
    %v2675 = vadd.f32 0.0, %v2674
    %v2676 = vpop.f32.mrb[0].mxu0
    %2677 = vdwg.mxu0
    %v2679 = vsel %vm446, %v2604, 0
    %2681 = vmatprep.subr.mxu0 0.0
    %2682 = vmatpush1.msra.mxu0 %v2424
    %2683 = vmatprep.subr.mxu0 0.0
    %2684 = vmatpush1.msra.mxu0 0.0
    %2685 = vmatprep.subr.mxu0 0.0
    %2686 = vmatpush1.msra.mxu0 0.0
    %2687 = vmatprep.subr.mxu0 0.0
    %2688 = vmatpush1.msra.mxu0 0.0
    %2689 = vmatprep.subr.mxu0 0.0
    %2690 = vmatpush1.msra.mxu0 0.0
    %2691 = vmatprep.subr.mxu0 0.0
    %2692 = vmatpush1.msra.mxu0 0.0
    %2693 = vmatprep.subr.mxu0 0.0
    %2694 = vmatpush1.msra.mxu0 0.0
    %2695 = vmatprep.subr.mxu0 0.0
    %2696 = vmatpush1.msra.mxu0 0.0
    %2697 = vmatprep.subr.mxu0 0.0
    %2698 = vmatpush1.msra.mxu0 0.0
    %2699 = vmatprep.subr.mxu0 0.0
    %2700 = vmatpush1.msra.mxu0 0.0
    %2701 = vmatprep.subr.mxu0 0.0
    %2702 = vmatpush1.msra.mxu0 0.0
    %2703 = vmatprep.subr.mxu0 0.0
    %2704 = vmatpush1.msra.mxu0 0.0
    %2705 = vmatprep.subr.mxu0 0.0
    %2706 = vmatpush1.msra.mxu0 0.0
    %2707 = vmatprep.subr.mxu0 0.0
    %2708 = vmatpush1.msra.mxu0 0.0
    %2709 = vmatprep.subr.mxu0 0.0
    %2710 = vmatpush1.msra.mxu0 0.0
    %2711 = vmatprep.subr.mxu0 0.0
    %2712 = vmatpush1.msra.mxu0 0.0
    %2713 = vmatprep.subr.mxu0 0.0
    %2714 = vmatpush1.msra.mxu0 0.0
    %2715 = vmatprep.subr.mxu0 0.0
    %2716 = vmatpush1.msra.mxu0 0.0
    %2717 = vmatprep.subr.mxu0 0.0
    %2718 = vmatpush1.msra.mxu0 0.0
    %2719 = vmatprep.subr.mxu0 0.0
    %2720 = vmatpush1.msra.mxu0 0.0
    %2721 = vmatprep.subr.mxu0 0.0
    %2722 = vmatpush1.msra.mxu0 0.0
    %2723 = vmatprep.subr.mxu0 0.0
    %2724 = vmatpush1.msra.mxu0 0.0
    %2725 = vmatprep.subr.mxu0 0.0
    %2726 = vmatpush1.msra.mxu0 0.0
    %2727 = vmatprep.subr.mxu0 0.0
    %2728 = vmatpush1.msra.mxu0 0.0
    %2729 = vmatprep.subr.mxu0 0.0
    %2730 = vmatpush1.msra.mxu0 0.0
    %2731 = vmatprep.subr.mxu0 0.0
    %2732 = vmatpush1.msra.mxu0 0.0
    %2733 = vmatprep.subr.mxu0 0.0
    %2734 = vmatpush1.msra.mxu0 0.0
    %2735 = vmatprep.subr.mxu0 0.0
    %2736 = vmatpush1.msra.mxu0 0.0
    %2737 = vmatprep.subr.mxu0 0.0
    %2738 = vmatpush1.msra.mxu0 0.0
    %2739 = vmatprep.subr.mxu0 0.0
    %2740 = vmatpush1.msra.mxu0 0.0
    %2741 = vmatprep.subr.mxu0 0.0
    %2742 = vmatpush1.msra.mxu0 0.0
    %2743 = vmatprep.subr.mxu0 0.0
    %2744 = vmatpush1.msra.mxu0 0.0
    %2745 = vmatprep.mubr.f32.mxu0 0.0
    %2746 = vmatmul.mubr.f32.gmra.mrb[0].mxu0 %v2679
    %v2747 = vpop.f32.mrb[0].mxu0
    %v2748 = vadd.f32 0.0, %v2747
    %v2749 = vpop.f32.mrb[0].mxu0
    %2750 = vdwg.mxu0
    %s2751 = scalar_lea.vmem %s3, 48
    %v2752 = vld [vmem:[%s2751] sm:$0xff]
    %v2753 = vld [vmem:[%s2751 + $0x8] sm:$0xff]
    %v2755 = vsel %vm289, %v2675, 0
    %v2758 = vsel %vm289, %v2748, 0
    %2760 = vmatprep.subr.mxu0 0.0
    %2761 = vmatpush1.msra.mxu0 %v2752
    %2762 = vmatprep.subr.mxu0 0.0
    %2763 = vmatpush1.msra.mxu0 %v2753
    %2764 = vmatprep.subr.mxu0 0.0
    %2765 = vmatpush1.msra.mxu0 0.0
    %2766 = vmatprep.subr.mxu0 0.0
    %2767 = vmatpush1.msra.mxu0 0.0
    %2768 = vmatprep.subr.mxu0 0.0
    %2769 = vmatpush1.msra.mxu0 0.0
    %2770 = vmatprep.subr.mxu0 0.0
    %2771 = vmatpush1.msra.mxu0 0.0
    %2772 = vmatprep.subr.mxu0 0.0
    %2773 = vmatpush1.msra.mxu0 0.0
    %2774 = vmatprep.subr.mxu0 0.0
    %2775 = vmatpush1.msra.mxu0 0.0
    %2776 = vmatprep.subr.mxu0 0.0
    %2777 = vmatpush1.msra.mxu0 0.0
    %2778 = vmatprep.subr.mxu0 0.0
    %2779 = vmatpush1.msra.mxu0 0.0
    %2780 = vmatprep.subr.mxu0 0.0
    %2781 = vmatpush1.msra.mxu0 0.0
    %2782 = vmatprep.subr.mxu0 0.0
    %2783 = vmatpush1.msra.mxu0 0.0
    %2784 = vmatprep.subr.mxu0 0.0
    %2785 = vmatpush1.msra.mxu0 0.0
    %2786 = vmatprep.subr.mxu0 0.0
    %2787 = vmatpush1.msra.mxu0 0.0
    %2788 = vmatprep.subr.mxu0 0.0
    %2789 = vmatpush1.msra.mxu0 0.0
    %2790 = vmatprep.subr.mxu0 0.0
    %2791 = vmatpush1.msra.mxu0 0.0
    %2792 = vmatprep.subr.mxu0 0.0
    %2793 = vmatpush1.msra.mxu0 0.0
    %2794 = vmatprep.subr.mxu0 0.0
    %2795 = vmatpush1.msra.mxu0 0.0
    %2796 = vmatprep.subr.mxu0 0.0
    %2797 = vmatpush1.msra.mxu0 0.0
    %2798 = vmatprep.subr.mxu0 0.0
    %2799 = vmatpush1.msra.mxu0 0.0
    %2800 = vmatprep.subr.mxu0 0.0
    %2801 = vmatpush1.msra.mxu0 0.0
    %2802 = vmatprep.subr.mxu0 0.0
    %2803 = vmatpush1.msra.mxu0 0.0
    %2804 = vmatprep.subr.mxu0 0.0
    %2805 = vmatpush1.msra.mxu0 0.0
    %2806 = vmatprep.subr.mxu0 0.0
    %2807 = vmatpush1.msra.mxu0 0.0
    %2808 = vmatprep.subr.mxu0 0.0
    %2809 = vmatpush1.msra.mxu0 0.0
    %2810 = vmatprep.subr.mxu0 0.0
    %2811 = vmatpush1.msra.mxu0 0.0
    %2812 = vmatprep.subr.mxu0 0.0
    %2813 = vmatpush1.msra.mxu0 0.0
    %2814 = vmatprep.subr.mxu0 0.0
    %2815 = vmatpush1.msra.mxu0 0.0
    %2816 = vmatprep.subr.mxu0 0.0
    %2817 = vmatpush1.msra.mxu0 0.0
    %2818 = vmatprep.subr.mxu0 0.0
    %2819 = vmatpush1.msra.mxu0 0.0
    %2820 = vmatprep.subr.mxu0 0.0
    %2821 = vmatpush1.msra.mxu0 0.0
    %2822 = vmatprep.subr.mxu0 0.0
    %2823 = vmatpush1.msra.mxu0 0.0
    %2824 = vmatprep.mubr.f32.mxu0 0.0
    %2825 = vmatmul.mubr.f32.gmra.mrb[0].mxu0 %v2755
    %v2826 = vpop.f32.mrb[0].mxu0
    %v2827 = vadd.f32 0.0, %v2826
    %v2828 = vpop.f32.mrb[0].mxu0
    %2829 = vmatprep.mubr.f32.mxu0 0.0
    %2830 = vmatmul.mubr.f32.gmra.mrb[0].mxu0 %v2758
    %v2831 = vpop.f32.mrb[0].mxu0
    %v2832 = vadd.f32 0.0, %v2831
    %v2833 = vpop.f32.mrb[0].mxu0
    %2834 = vdwg.mxu0
    %v2836 = vsel %vm289, %v2108, 0
    %v2839 = vsel %vm289, %v2181, 0
    %2841 = vmatprep.subr.mxu0 0.0
    %2842 = vmatpush1.msra.mxu0 %v2185
    %2843 = vmatprep.subr.mxu0 0.0
    %2844 = vmatpush1.msra.mxu0 %v2186
    %2845 = vmatprep.subr.mxu0 0.0
    %2846 = vmatpush1.msra.mxu0 0.0
    %2847 = vmatprep.subr.mxu0 0.0
    %2848 = vmatpush1.msra.mxu0 0.0
    %2849 = vmatprep.subr.mxu0 0.0
    %2850 = vmatpush1.msra.mxu0 0.0
    %2851 = vmatprep.subr.mxu0 0.0
    %2852 = vmatpush1.msra.mxu0 0.0
    %2853 = vmatprep.subr.mxu0 0.0
    %2854 = vmatpush1.msra.mxu0 0.0
    %2855 = vmatprep.subr.mxu0 0.0
    %2856 = vmatpush1.msra.mxu0 0.0
    %2857 = vmatprep.subr.mxu0 0.0
    %2858 = vmatpush1.msra.mxu0 0.0
    %2859 = vmatprep.subr.mxu0 0.0
    %2860 = vmatpush1.msra.mxu0 0.0
    %2861 = vmatprep.subr.mxu0 0.0
    %2862 = vmatpush1.msra.mxu0 0.0
    %2863 = vmatprep.subr.mxu0 0.0
    %2864 = vmatpush1.msra.mxu0 0.0
    %2865 = vmatprep.subr.mxu0 0.0
    %2866 = vmatpush1.msra.mxu0 0.0
    %2867 = vmatprep.subr.mxu0 0.0
    %2868 = vmatpush1.msra.mxu0 0.0
    %2869 = vmatprep.subr.mxu0 0.0
    %2870 = vmatpush1.msra.mxu0 0.0
    %2871 = vmatprep.subr.mxu0 0.0
    %2872 = vmatpush1.msra.mxu0 0.0
    %2873 = vmatprep.subr.mxu0 0.0
    %2874 = vmatpush1.msra.mxu0 0.0
    %2875 = vmatprep.subr.mxu0 0.0
    %2876 = vmatpush1.msra.mxu0 0.0
    %2877 = vmatprep.subr.mxu0 0.0
    %2878 = vmatpush1.msra.mxu0 0.0
    %2879 = vmatprep.subr.mxu0 0.0
    %2880 = vmatpush1.msra.mxu0 0.0
    %2881 = vmatprep.subr.mxu0 0.0
    %2882 = vmatpush1.msra.mxu0 0.0
    %2883 = vmatprep.subr.mxu0 0.0
    %2884 = vmatpush1.msra.mxu0 0.0
    %2885 = vmatprep.subr.mxu0 0.0
    %2886 = vmatpush1.msra.mxu0 0.0
    %2887 = vmatprep.subr.mxu0 0.0
    %2888 = vmatpush1.msra.mxu0 0.0
    %2889 = vmatprep.subr.mxu0 0.0
    %2890 = vmatpush1.msra.mxu0 0.0
    %2891 = vmatprep.subr.mxu0 0.0
    %2892 = vmatpush1.msra.mxu0 0.0
    %2893 = vmatprep.subr.mxu0 0.0
    %2894 = vmatpush1.msra.mxu0 0.0
    %2895 = vmatprep.subr.mxu0 0.0
    %2896 = vmatpush1.msra.mxu0 0.0
    %2897 = vmatprep.subr.mxu0 0.0
    %2898 = vmatpush1.msra.mxu0 0.0
    %2899 = vmatprep.subr.mxu0 0.0
    %2900 = vmatpush1.msra.mxu0 0.0
    %2901 = vmatprep.subr.mxu0 0.0
    %2902 = vmatpush1.msra.mxu0 0.0
    %2903 = vmatprep.subr.mxu0 0.0
    %2904 = vmatpush1.msra.mxu0 0.0
    %2905 = vmatprep.mubr.f32.mxu0 0.0
    %2906 = vmatmul.mubr.f32.gmra.mrb[0].mxu0 %v2836
    %v2907 = vpop.f32.mrb[0].mxu0
    %v2908 = vadd.f32 %v2827, %v2907
    %v2909 = vpop.f32.mrb[0].mxu0
    %2910 = vmatprep.mubr.f32.mxu0 0.0
    %2911 = vmatmul.mubr.f32.gmra.mrb[0].mxu0 %v2839
    %v2912 = vpop.f32.mrb[0].mxu0
    %v2913 = vadd.f32 %v2832, %v2912
    %v2914 = vpop.f32.mrb[0].mxu0
    %2915 = vdwg.mxu0
    %v2916 = vadd.f32 %v2908, %v1612
    %v2917 = vadd.f32 %v2913, %v1613
    %s2918 = scalar_lea.vmem %s4, 1
    %v2919 = vld [vmem:[%s2918] sm:$0x1]
    %s2920 = scalar_lea.vmem %s5, 1
    %v2921 = vld [vmem:[%s2920] sm:$0x1]
    %v2922 = vsel %vm57, %v2916, 0.0
    %2923 = vadd.xlane.f32.xlu0 %v2922
    %v2924 = vpop.xlane.xlu0 %2923
    %v2925 = vsel %vm57, %v2917, 0.0
    %2926 = vadd.xlane.f32.xlu0 %v2925
    %v2927 = vpop.xlane.xlu0 %2926
    %v2928 = vmul.f32 %v2924, %v1356
    %v2929 = vmul.f32 %v2927, %v1356
    %v2930 = vsub.f32 %v2916, %v2928
    %v2931 = vsub.f32 %v2917, %v2929
    %v2932 = vmul.f32 %v2930, %v2930
    %v2933 = vmul.f32 %v2931, %v2931
    %v2934 = vsel %vm57, %v2932, 0.0
    %2935 = vadd.xlane.f32.xlu0 %v2934
    %v2936 = vpop.xlane.xlu0 %2935
    %v2937 = vsel %vm57, %v2933, 0.0
    %2938 = vadd.xlane.f32.xlu0 %v2937
    %v2939 = vpop.xlane.xlu0 %2938
    %v2940 = vmul.f32 %v2936, %v1356
    %v2941 = vmul.f32 %v2939, %v1356
    %v2942 = vadd.f32 %v2940, 1e-05
    %v2943 = vadd.f32 %v2941, 1e-05
    %v2944 = vrsqrt.pop %v2942
    %v2945 = vrsqrt.pop %v2943
    %v2946 = vmul.f32 %v2930, %v2944
    %v2947 = vmul.f32 %v2931, %v2945
    %v2949 = vlaneseq
    %v2950 = vshrl.u32 %v2949, 7
    %v2951 = vsub.s32 0, %v2950
    %v2952 = vrot.slane %v2919, %v2951
    %v2954 = vmul.f32 %v2946, %v2952
    %v2955 = vmul.f32 %v2947, %v2952
    %v2957 = vlaneseq
    %v2958 = vshrl.u32 %v2957, 7
    %v2959 = vsub.s32 0, %v2958
    %v2960 = vrot.slane %v2921, %v2959
    %v2962 = vadd.f32 %v2954, %v2960
    %v2963 = vadd.f32 %v2955, %v2960
    %s2964 = scalar_lea.vmem %s6, 32
    %v2965 = vld [vmem:[%s2964] sm:$0xff]
    %v2966 = vld [vmem:[%s2964 + $0x8] sm:$0xff]
    %v2967 = vld [vmem:[%s2964 + $0x10] sm:$0xff]
    %v2968 = vld [vmem:[%s2964 + $0x18] sm:$0xff]
    %v2970 = vsel %vm57, %v2962, 0
    %v2973 = vsel %vm57, %v2963, 0
    %2975 = vmatprep.subr.mxu0 0.0
    %2976 = vmatpush1.msra.mxu0 %v2965
    %2977 = vmatprep.subr.mxu0 0.0
    %2978 = vmatpush1.msra.mxu0 %v2966
    %2979 = vmatprep.subr.mxu0 0.0
    %2980 = vmatpush1.msra.mxu0 %v2967
    %2981 = vmatprep.subr.mxu0 0.0
    %2982 = vmatpush1.msra.mxu0 %v2968
    %2983 = vmatprep.subr.mxu0 0.0
    %2984 = vmatpush1.msra.mxu0 0.0
    %2985 = vmatprep.subr.mxu0 0.0
    %2986 = vmatpush1.msra.mxu0 0.0
    %2987 = vmatprep.subr.mxu0 0.0
    %2988 = vmatpush1.msra.mxu0 0.0
    %2989 = vmatprep.subr.mxu0 0.0
    %2990 = vmatpush1.msra.mxu0 0.0
    %2991 = vmatprep.subr.mxu0 0.0
    %2992 = vmatpush1.msra.mxu0 0.0
    %2993 = vmatprep.subr.mxu0 0.0
    %2994 = vmatpush1.msra.mxu0 0.0
    %2995 = vmatprep.subr.mxu0 0.0
    %2996 = vmatpush1.msra.mxu0 0.0
    %2997 = vmatprep.subr.mxu0 0.0
    %2998 = vmatpush1.msra.mxu0 0.0
    %2999 = vmatprep.subr.mxu0 0.0
    %3000 = vmatpush1.msra.mxu0 0.0
    %3001 = vmatprep.subr.mxu0 0.0
    %3002 = vmatpush1.msra.mxu0 0.0
    %3003 = vmatprep.subr.mxu0 0.0
    %3004 = vmatpush1.msra.mxu0 0.0
    %3005 = vmatprep.subr.mxu0 0.0
    %3006 = vmatpush1.msra.mxu0 0.0
    %3007 = vmatprep.subr.mxu0 0.0
    %3008 = vmatpush1.msra.mxu0 0.0
    %3009 = vmatprep.subr.mxu0 0.0
    %3010 = vmatpush1.msra.mxu0 0.0
    %3011 = vmatprep.subr.mxu0 0.0
    %3012 = vmatpush1.msra.mxu0 0.0
    %3013 = vmatprep.subr.mxu0 0.0
    %3014 = vmatpush1.msra.mxu0 0.0
    %3015 = vmatprep.subr.mxu0 0.0
    %3016 = vmatpush1.msra.mxu0 0.0
    %3017 = vmatprep.subr.mxu0 0.0
    %3018 = vmatpush1.msra.mxu0 0.0
    %3019 = vmatprep.subr.mxu0 0.0
    %3020 = vmatpush1.msra.mxu0 0.0
    %3021 = vmatprep.subr.mxu0 0.0
    %3022 = vmatpush1.msra.mxu0 0.0
    %3023 = vmatprep.subr.mxu0 0.0
    %3024 = vmatpush1.msra.mxu0 0.0
    %3025 = vmatprep.subr.mxu0 0.0
    %3026 = vmatpush1.msra.mxu0 0.0
    %3027 = vmatprep.subr.mxu0 0.0
    %3028 = vmatpush1.msra.mxu0 0.0
    %3029 = vmatprep.subr.mxu0 0.0
    %3030 = vmatpush1.msra.mxu0 0.0
    %3031 = vmatprep.subr.mxu0 0.0
    %3032 = vmatpush1.msra.mxu0 0.0
    %3033 = vmatprep.subr.mxu0 0.0
    %3034 = vmatpush1.msra.mxu0 0.0
    %3035 = vmatprep.subr.mxu0 0.0
    %3036 = vmatpush1.msra.mxu0 0.0
    %3037 = vmatprep.subr.mxu0 0.0
    %3038 = vmatpush1.msra.mxu0 0.0
    %3039 = vmatprep.mubr.f32.mxu0 0.0
    %3040 = vmatmul.mubr.f32.gmra.mrb[0].mxu0 %v2970
    %v3041 = vpop.f32.mrb[0].mxu0
    %v3042 = vadd.f32 0.0, %v3041
    %v3043 = vpop.f32.mrb[0].mxu0
    %3044 = vmatprep.mubr.f32.mxu0 0.0
    %3045 = vmatmul.mubr.f32.gmra.mrb[0].mxu0 %v2973
    %v3046 = vpop.f32.mrb[0].mxu0
    %v3047 = vadd.f32 0.0, %v3046
    %v3048 = vpop.f32.mrb[0].mxu0
    %3049 = vdwg.mxu0
    %v3050 = vmax.f32 %v3042, 0.0
    %v3051 = vmax.f32 %v3047, 0.0
    %s3052 = scalar_lea.vmem %s7, 64
    %v3053 = vld [vmem:[%s3052] sm:$0xff]
    %v3054 = vld [vmem:[%s3052 + $0x8] sm:$0xff]
    %v3055 = vld [vmem:[%s3052 + $0x10] sm:$0xff]
    %v3056 = vld [vmem:[%s3052 + $0x18] sm:$0xff]
    %v3057 = vld [vmem:[%s3052 + $0x20] sm:$0xff]
    %v3058 = vld [vmem:[%s3052 + $0x28] sm:$0xff]
    %v3059 = vld [vmem:[%s3052 + $0x30] sm:$0xff]
    %v3060 = vld [vmem:[%s3052 + $0x38] sm:$0xff]
    %v3062 = vsel %vm1488, %v3050, 0
    %v3065 = vsel %vm1488, %v3051, 0
    %3067 = vmatprep.subr.mxu0 0.0
    %3068 = vmatpush1.msra.mxu0 %v3053
    %3069 = vmatprep.subr.mxu0 0.0
    %3070 = vmatpush1.msra.mxu0 %v3054
    %3071 = vmatprep.subr.mxu0 0.0
    %3072 = vmatpush1.msra.mxu0 %v3055
    %3073 = vmatprep.subr.mxu0 0.0
    %3074 = vmatpush1.msra.mxu0 %v3056
    %3075 = vmatprep.subr.mxu0 0.0
    %3076 = vmatpush1.msra.mxu0 %v3057
    %3077 = vmatprep.subr.mxu0 0.0
    %3078 = vmatpush1.msra.mxu0 %v3058
    %3079 = vmatprep.subr.mxu0 0.0
    %3080 = vmatpush1.msra.mxu0 %v3059
    %3081 = vmatprep.subr.mxu0 0.0
    %3082 = vmatpush1.msra.mxu0 %v3060
    %3083 = vmatprep.subr.mxu0 0.0
    %3084 = vmatpush1.msra.mxu0 0.0
    %3085 = vmatprep.subr.mxu0 0.0
    %3086 = vmatpush1.msra.mxu0 0.0
    %3087 = vmatprep.subr.mxu0 0.0
    %3088 = vmatpush1.msra.mxu0 0.0
    %3089 = vmatprep.subr.mxu0 0.0
    %3090 = vmatpush1.msra.mxu0 0.0
    %3091 = vmatprep.subr.mxu0 0.0
    %3092 = vmatpush1.msra.mxu0 0.0
    %3093 = vmatprep.subr.mxu0 0.0
    %3094 = vmatpush1.msra.mxu0 0.0
    %3095 = vmatprep.subr.mxu0 0.0
    %3096 = vmatpush1.msra.mxu0 0.0
    %3097 = vmatprep.subr.mxu0 0.0
    %3098 = vmatpush1.msra.mxu0 0.0
    %3099 = vmatprep.subr.mxu0 0.0
    %3100 = vmatpush1.msra.mxu0 0.0
    %3101 = vmatprep.subr.mxu0 0.0
    %3102 = vmatpush1.msra.mxu0 0.0
    %3103 = vmatprep.subr.mxu0 0.0
    %3104 = vmatpush1.msra.mxu0 0.0
    %3105 = vmatprep.subr.mxu0 0.0
    %3106 = vmatpush1.msra.mxu0 0.0
    %3107 = vmatprep.subr.mxu0 0.0
    %3108 = vmatpush1.msra.mxu0 0.0
    %3109 = vmatprep.subr.mxu0 0.0
    %3110 = vmatpush1.msra.mxu0 0.0
    %3111 = vmatprep.subr.mxu0 0.0
    %3112 = vmatpush1.msra.mxu0 0.0
    %3113 = vmatprep.subr.mxu0 0.0
    %3114 = vmatpush1.msra.mxu0 0.0
    %3115 = vmatprep.subr.mxu0 0.0
    %3116 = vmatpush1.msra.mxu0 0.0
    %3117 = vmatprep.subr.mxu0 0.0
    %3118 = vmatpush1.msra.mxu0 0.0
    %3119 = vmatprep.subr.mxu0 0.0
    %3120 = vmatpush1.msra.mxu0 0.0
    %3121 = vmatprep.subr.mxu0 0.0
    %3122 = vmatpush1.msra.mxu0 0.0
    %3123 = vmatprep.subr.mxu0 0.0
    %3124 = vmatpush1.msra.mxu0 0.0
    %3125 = vmatprep.subr.mxu0 0.0
    %3126 = vmatpush1.msra.mxu0 0.0
    %3127 = vmatprep.subr.mxu0 0.0
    %3128 = vmatpush1.msra.mxu0 0.0
    %3129 = vmatprep.subr.mxu0 0.0
    %3130 = vmatpush1.msra.mxu0 0.0
    %3131 = vmatprep.mubr.f32.mxu0 0.0
    %3132 = vmatmul.mubr.f32.gmra.mrb[0].mxu0 %v3062
    %v3133 = vpop.f32.mrb[0].mxu0
    %v3134 = vadd.f32 %v2962, %v3133
    %v3135 = vpop.f32.mrb[0].mxu0
    %3136 = vmatprep.mubr.f32.mxu0 0.0
    %3137 = vmatmul.mubr.f32.gmra.mrb[0].mxu0 %v3065
    %v3138 = vpop.f32.mrb[0].mxu0
    %v3139 = vadd.f32 %v2963, %v3138
    %v3140 = vpop.f32.mrb[0].mxu0
    %3141 = vdwg.mxu0
    %s3142 = scalar_lea.vmem %s8, 1
    %v3143 = vld [vmem:[%s3142] sm:$0x1]
    %s3144 = scalar_lea.vmem %s9, 1
    %v3145 = vld [vmem:[%s3144] sm:$0x1]
    %v3146 = vsel %vm57, %v3134, 0.0
    %3147 = vadd.xlane.f32.xlu0 %v3146
    %v3148 = vpop.xlane.xlu0 %3147
    %v3149 = vsel %vm57, %v3139, 0.0
    %3150 = vadd.xlane.f32.xlu0 %v3149
    %v3151 = vpop.xlane.xlu0 %3150
    %v3152 = vmul.f32 %v3148, %v1356
    %v3153 = vmul.f32 %v3151, %v1356
    %v3154 = vsub.f32 %v3134, %v3152
    %v3155 = vsub.f32 %v3139, %v3153
    %v3156 = vmul.f32 %v3154, %v3154
    %v3157 = vmul.f32 %v3155, %v3155
    %v3158 = vsel %vm57, %v3156, 0.0
    %3159 = vadd.xlane.f32.xlu0 %v3158
    %v3160 = vpop.xlane.xlu0 %3159
    %v3161 = vsel %vm57, %v3157, 0.0
    %3162 = vadd.xlane.f32.xlu0 %v3161
    %v3163 = vpop.xlane.xlu0 %3162
    %v3164 = vmul.f32 %v3160, %v1356
    %v3165 = vmul.f32 %v3163, %v1356
    %v3166 = vadd.f32 %v3164, 1e-05
    %v3167 = vadd.f32 %v3165, 1e-05
    %v3168 = vrsqrt.pop %v3166
    %v3169 = vrsqrt.pop %v3167
    %v3170 = vmul.f32 %v3154, %v3168
    %v3171 = vmul.f32 %v3155, %v3169
    %v3173 = vlaneseq
    %v3174 = vshrl.u32 %v3173, 7
    %v3175 = vsub.s32 0, %v3174
    %v3176 = vrot.slane %v3143, %v3175
    %v3178 = vmul.f32 %v3170, %v3176
    %v3179 = vmul.f32 %v3171, %v3176
    %v3181 = vlaneseq
    %v3182 = vshrl.u32 %v3181, 7
    %v3183 = vsub.s32 0, %v3182
    %v3184 = vrot.slane %v3145, %v3183
    %v3186 = vadd.f32 %v3178, %v3184
    %v3187 = vadd.f32 %v3179, %v3184
    %v3188 = vld [vmem:[%s10] sm:$0xff]
    %v3189 = vld [vmem:[%s10 + $0x8] sm:$0xff]
    %v3190 = vld [vmem:[%s10 + $0x10] sm:$0xff]
    %v3191 = vld [vmem:[%s10 + $0x18] sm:$0xff]
    %v3194 = vrot.slane %v3186, 7
    %v3195 = vrot.slane %v3187, 6
    %vm3196 = vcmask 1041409
    %v3197 = vsel %vm3196, %v3195, %v3194
    %v3198 = vsel %vm57, %v3197, 0
    %3200 = vmatprep.subr.mxu0 0.0
    %3201 = vmatpush1.msra.mxu0 %v3188
    %3202 = vmatprep.subr.mxu0 0.0
    %3203 = vmatpush1.msra.mxu0 %v3189
    %3204 = vmatprep.subr.mxu0 0.0
    %3205 = vmatpush1.msra.mxu0 %v3190
    %3206 = vmatprep.subr.mxu0 0.0
    %3207 = vmatpush1.msra.mxu0 %v3191
    %3208 = vmatprep.subr.mxu0 0.0
    %3209 = vmatpush1.msra.mxu0 0.0
    %3210 = vmatprep.subr.mxu0 0.0
    %3211 = vmatpush1.msra.mxu0 0.0
    %3212 = vmatprep.subr.mxu0 0.0
    %3213 = vmatpush1.msra.mxu0 0.0
    %3214 = vmatprep.subr.mxu0 0.0
    %3215 = vmatpush1.msra.mxu0 0.0
    %3216 = vmatprep.subr.mxu0 0.0
    %3217 = vmatpush1.msra.mxu0 0.0
    %3218 = vmatprep.subr.mxu0 0.0
    %3219 = vmatpush1.msra.mxu0 0.0
    %3220 = vmatprep.subr.mxu0 0.0
    %3221 = vmatpush1.msra.mxu0 0.0
    %3222 = vmatprep.subr.mxu0 0.0
    %3223 = vmatpush1.msra.mxu0 0.0
    %3224 = vmatprep.subr.mxu0 0.0
    %3225 = vmatpush1.msra.mxu0 0.0
    %3226 = vmatprep.subr.mxu0 0.0
    %3227 = vmatpush1.msra.mxu0 0.0
    %3228 = vmatprep.subr.mxu0 0.0
    %3229 = vmatpush1.msra.mxu0 0.0
    %3230 = vmatprep.subr.mxu0 0.0
    %3231 = vmatpush1.msra.mxu0 0.0
    %3232 = vmatprep.subr.mxu0 0.0
    %3233 = vmatpush1.msra.mxu0 0.0
    %3234 = vmatprep.subr.mxu0 0.0
    %3235 = vmatpush1.msra.mxu0 0.0
    %3236 = vmatprep.subr.mxu0 0.0
    %3237 = vmatpush1.msra.mxu0 0.0
    %3238 = vmatprep.subr.mxu0 0.0
    %3239 = vmatpush1.msra.mxu0 0.0
    %3240 = vmatprep.subr.mxu0 0.0
    %3241 = vmatpush1.msra.mxu0 0.0
    %3242 = vmatprep.subr.mxu0 0.0
    %3243 = vmatpush1.msra.mxu0 0.0
    %3244 = vmatprep.subr.mxu0 0.0
    %3245 = vmatpush1.msra.mxu0 0.0
    %3246 = vmatprep.subr.mxu0 0.0
    %3247 = vmatpush1.msra.mxu0 0.0
    %3248 = vmatprep.subr.mxu0 0.0
    %3249 = vmatpush1.msra.mxu0 0.0
    %3250 = vmatprep.subr.mxu0 0.0
    %3251 = vmatpush1.msra.mxu0 0.0
    %3252 = vmatprep.subr.mxu0 0.0
    %3253 = vmatpush1.msra.mxu0 0.0
    %3254 = vmatprep.subr.mxu0 0.0
    %3255 = vmatpush1.msra.mxu0 0.0
    %3256 = vmatprep.subr.mxu0 0.0
    %3257 = vmatpush1.msra.mxu0 0.0
    %3258 = vmatprep.subr.mxu0 0.0
    %3259 = vmatpush1.msra.mxu0 0.0
    %3260 = vmatprep.subr.mxu0 0.0
    %3261 = vmatpush1.msra.mxu0 0.0
    %3262 = vmatprep.subr.mxu0 0.0
    %3263 = vmatpush1.msra.mxu0 0.0
    %3264 = vmatprep.mubr.f32.mxu0 0.0
    %3265 = vmatmul.mubr.f32.gmra.mrb[0].mxu0 %v3198
    %v3266 = vpop.f32.mrb[0].mxu0
    %v3267 = vadd.f32 0.0, %v3266
    %v3268 = vpop.f32.mrb[0].mxu0
    %3269 = vdwg.mxu0
    %vm3270 = vcmask 123904
    %3271 = vst.msk [vmem:[#allocation2] sm:$0x3] %vm3270, %v3267
    // Predicated region
    $region46: #{duo4srec_forward.1} parent=1 // pred_check
      _
    $region47: #{duo4srec_forward.1} parent=1 // pred_check_branch
      %3273 = sbr.rel (0) target = $region49
    $region48: #{duo4srec_forward.1} parent=1 // pred_region
      %s3275 = ssub.s32 32, 32
      %3276 = vsyncadd [#allocation3], %s3275
      %s3278 = sshll.u32 [#allocation2], 4
      %s3279 = int_to_ptr.vmem [resolvable:$true] %s3278
      %3281 = dma.vmem_to_hbm [thread:$0]  %s3279, 32, %s11, [#allocation3]
    $region49: #{duo4srec_forward.1} parent=1 // pred_fallthru
      _
    // Predicated region
    $region50: #{duo4srec_forward.1} parent=1 // pred_check
      _
    $region51: #{duo4srec_forward.1} parent=1 // pred_check_branch
      %3283 = sbr.rel (0) target = $region53
    $region52: #{duo4srec_forward.1} parent=1 // pred_region
      %3284 = dma.done [#allocation3], 32
    $region53: #{duo4srec_forward.1} parent=1 // pred_fallthru
      _
    %3285 = vsyncpa [#allocation3], 1

</llo_original>
